<compile_context>
chip_gen: v6e
topology: v6e:2x2x1
jax: 0.10.0
libtpu: 0.0.40
codegen_flags: <defaults>
</compile_context>

<pallas_src>
import functools

import jax
import jax.numpy as jnp
from jax import lax
from jax.experimental import pallas as pl
from jax.experimental.pallas import tpu as pltpu

EPS = 1e-5  # PyTorch nn.LayerNorm default eps


# ----------------------------------------------------------------------------
# Fused decoder-layer kernel
# ----------------------------------------------------------------------------
def _decoder_layer_kernel(B, N, M, num_heads, head_dim,
                          x_ref, enc_ref,
                          wq1_ref, bq1_ref, wk1_ref, bk1_ref,
                          wv1_ref, bv1_ref, wo1_ref, bo1_ref,
                          g1_ref, e1_ref,
                          wq2_ref, bq2_ref, wk2_ref, bk2_ref,
                          wv2_ref, bv2_ref, wo2_ref, bo2_ref,
                          g2_ref, e2_ref,
                          w1_ref, b1_ref, w2_ref, b2_ref,
                          g3_ref, e3_ref,
                          out_ref, self_ref):
    f32 = jnp.float32
    bf16 = jnp.bfloat16
    C = num_heads * head_dim
    hd = head_dim

    def matmul(x_bf, w_ref, b_ref):
        # bf16 MXU operands (weights are persistently bf16), f32 accumulate + bias.
        return jnp.dot(x_bf, w_ref[...], preferred_element_type=f32) + b_ref[...]

    def layernorm(y, g_ref, b_ref):
        mean = jnp.mean(y, axis=-1, keepdims=True)
        var = jnp.mean((y - mean) ** 2, axis=-1, keepdims=True)
        return (y - mean) * lax.rsqrt(var + EPS) * g_ref[...] + b_ref[...]

    def attention(xq, xkv, n_q, n_kv, wq, bq, wk, bk, wv, bv, wo, bo):
        # xq: (B*n_q, C) f32, xkv: (B*n_kv, C) f32.
        # Cast each activation tensor to bf16 exactly once per stage.
        xq_bf = xq.astype(bf16)
        xkv_bf = xq_bf if xkv is xq else xkv.astype(bf16)
        # 1/sqrt(head_dim) is pre-folded into wq/bq (prepare_params).
        q = matmul(xq_bf, wq, bq).astype(bf16).reshape(B, n_q, C)
        k = matmul(xkv_bf, wk, bk).astype(bf16).reshape(B, n_kv, C)
        v = matmul(xkv_bf, wv, bv).astype(bf16).reshape(B, n_kv, C)

        # Per-head scores (small MXU matmuls) stacked on a LEADING axis so the
        # whole softmax epilogue (max/exp/sum/reciprocal) runs once for all heads.
        s = jnp.stack(
            [jnp.einsum('bqd,bkd->bqk',
                        q[:, :, h * hd:(h + 1) * hd],
                        k[:, :, h * hd:(h + 1) * hd],
                        preferred_element_type=f32)
             for h in range(num_heads)], axis=0)              # (H, B, n_q, n_kv)
        s = s - jnp.max(s, axis=-1, keepdims=True)
        p = jnp.exp(s)
        p = (p * pl.reciprocal(jnp.sum(p, axis=-1, keepdims=True),
                               approx=True)).astype(bf16)

        # Per-head context accumulated straight into the output projection
        # (no lane-stitching concatenate of head slices).
        out = jnp.zeros((B * n_q, C), f32)
        for h in range(num_heads):                            # static unroll
            o_h = jnp.einsum('bqk,bkd->bqd', p[h],
                             v[:, :, h * hd:(h + 1) * hd],
                             preferred_element_type=f32)      # (B, n_q, hd) f32
            out = out + jnp.dot(o_h.reshape(B * n_q, hd).astype(bf16),
                                wo[h * hd:(h + 1) * hd, :],
                                preferred_element_type=f32)
        return out + bo[...]

    x = x_ref[...]       # (T, C)   T = B*N
    enc = enc_ref[...]   # (S, C)   S = B*M

    # --- word (self) attention + residual + LN1 ---
    attn1 = attention(x, x, N, N,
                      wq1_ref, bq1_ref, wk1_ref, bk1_ref,
                      wv1_ref, bv1_ref, wo1_ref, bo1_ref)
    self_ref[...] = attn1.astype(self_ref.dtype)   # x_self (pre-dropout/residual)
    h1 = layernorm(attn1 + x, g1_ref, e1_ref)

    # --- cross attention + residual + LN2 ---
    attn2 = attention(h1, enc, N, M,
                      wq2_ref, bq2_ref, wk2_ref, bk2_ref,
                      wv2_ref, bv2_ref, wo2_ref, bo2_ref)
    h2 = layernorm(attn2 + h1, g2_ref, e2_ref)

    # --- feed forward + residual + LN3 ---
    f = jnp.maximum(matmul(h2.astype(bf16), w1_ref, b1_ref), 0.0)   # (T, 4C) f32
    f = matmul(f.astype(bf16), w2_ref, b2_ref)   # bf16 intermediate into fc2
    out_ref[...] = layernorm(f + h2, g3_ref, e3_ref).astype(out_ref.dtype)


# ----------------------------------------------------------------------------
# One-time parameter preparation (runs OUTSIDE the jit / once per model load)
# ----------------------------------------------------------------------------
def prepare_params(params, num_heads):
    """Persistent bf16 matmul weights, attention scale folded into Wq/bq (f32,
    exact), biases + LayerNorm params kept f32. Returns kernel-ordered tuple."""
    bf16 = jnp.bfloat16

    def attn(p):
        wq, bq, wk, bk, wv, bv, wo, bo = p
        scale = (wq.shape[0] // num_heads) ** (-0.5)
        return ((wq * scale).astype(bf16), bq * scale,
                wk.astype(bf16), bk,
                wv.astype(bf16), bv,
                wo.astype(bf16), bo)

    w1, b1, w2, b2 = params["ff"]
    return (*attn(params["word_attn"]), *params["ln1"],
            *attn(params["cross_att"]), *params["ln2"],
            w1.astype(bf16), b1, w2.astype(bf16), b2, *params["ln3"])


# ----------------------------------------------------------------------------
# Wrapper
# ----------------------------------------------------------------------------
def decoder_layer(x, encoder_out, kparams, num_heads):
    B, N, C = x.shape
    M = encoder_out.shape[1]
    head_dim = C // num_heads
    T, S, F = B * N, B * M, 4 * C

    args = (x.reshape(T, C), encoder_out.reshape(S, C), *kparams)

    def full_spec(shape):   # gridless: each ref is the whole array in VMEM
        return pl.BlockSpec(shape, lambda: (0, 0))

    flops = 2 * (4 * T * C * C                     # self-attn q/k/v/o projections
                 + 2 * T * N * C                   # self-attn scores + ctx
                 + 2 * T * C * C + 2 * S * C * C   # cross-attn q/o (T rows), k/v (S rows)
                 + 2 * T * M * C                   # cross-attn scores + ctx
                 + 2 * T * C * F)                  # FFN fc1 + fc2
    transcendentals = num_heads * B * N * (N + M)  # softmax exps
    bytes_accessed = int(sum(a.size * a.dtype.itemsize for a in args)
                         + 2 * T * C * 4)          # + both f32 outputs

    kernel = functools.partial(_decoder_layer_kernel, B, N, M, num_heads, head_dim)
    out, x_self = pl.pallas_call(
        kernel,
        out_shape=(jax.ShapeDtypeStruct((T, C), x.dtype),
                   jax.ShapeDtypeStruct((T, C), x.dtype)),
        in_specs=[full_spec(a.shape) for a in args],
        out_specs=(full_spec((T, C)), full_spec((T, C))),
        cost_estimate=pl.CostEstimate(flops=int(flops),
                                      transcendentals=int(transcendentals),
                                      bytes_accessed=bytes_accessed),
        compiler_params=pltpu.CompilerParams(vmem_limit_bytes=32 * 1024 * 1024),
    )(*args)
    return out.reshape(B, N, C), x_self.reshape(B, N, C)


# ----------------------------------------------------------------------------
# Pure-JAX reference (mirrors the bf16-operand / f32-accumulate matmuls)
# ----------------------------------------------------------------------------
def _ref_linear(x, w, b):
    return jnp.dot(x.astype(jnp.bfloat16), w.astype(jnp.bfloat16),
                   preferred_element_type=jnp.float32) + b


def _ref_mha(q_in, kv_in, params, num_heads):
    wq, bq, wk, bk, wv, bv, wo, bo = params
    B, N, C = q_in.shape
    M = kv_in.shape[1]
    hd = C // num_heads
    bf = jnp.bfloat16
    q = _ref_linear(q_in, wq, bq).reshape(B, N, num_heads, hd).transpose(0, 2, 1, 3)
    k = _ref_linear(kv_in, wk, bk).reshape(B, M, num_heads, hd).transpose(0, 2, 1, 3)
    v = _ref_linear(kv_in, wv, bv).reshape(B, M, num_heads, hd).transpose(0, 2, 1, 3)
    s = jnp.einsum('bhnd,bhmd->bhnm', q.astype(bf), k.astype(bf),
                   preferred_element_type=jnp.float32) * hd ** (-0.5)
    p = jax.nn.softmax(s, axis=-1)
    o = jnp.einsum('bhnm,bhmd->bhnd', p.astype(bf), v.astype(bf),
                   preferred_element_type=jnp.float32)
    o = o.transpose(0, 2, 1, 3).reshape(B, N, C)
    return _ref_linear(o, wo, bo)


def _ref_ln(x, params):
    g, b = params
    mean = jnp.mean(x, axis=-1, keepdims=True)
    var = jnp.mean((x - mean) ** 2, axis=-1, keepdims=True)
    return (x - mean) * lax.rsqrt(var + EPS) * g + b


def _ref_decoder_layer(x, encoder_out, params, num_heads):
    sc = x
    x_attn = _ref_mha(x, x, params["word_attn"], num_heads)
    x = _ref_ln(x_attn + sc, params["ln1"])
    sc = x
    x = _ref_mha(x, encoder_out, params["cross_att"], num_heads)
    x = _ref_ln(x + sc, params["ln2"])
    sc = x
    w1, b1, w2, b2 = params["ff"]
    h = jnp.maximum(_ref_linear(x, w1, b1), 0.0)
    x = _ref_linear(h, w2, b2)
    x = _ref_ln(x + sc, params["ln3"])
    return x, x_attn


# ----------------------------------------------------------------------------
# Deterministic parameter init + driver
# ----------------------------------------------------------------------------
def init_params(key, embed_dim):
    C = embed_dim
    F = 4 * C

    def linear(k, fan_in, fan_out):
        k1, k2 = jax.random.split(k)
        bound = 1.0 / (fan_in ** 0.5)
        w = jax.random.uniform(k1, (fan_in, fan_out), jnp.float32, -bound, bound)
        b = jax.random.uniform(k2, (1, fan_out), jnp.float32, -bound, bound)
        return w, b

    keys = jax.random.split(key, 10)

    def mha_params(ks):
        wq, bq = linear(ks[0], C, C)
        wk, bk = linear(ks[1], C, C)
        wv, bv = linear(ks[2], C, C)
        wo, bo = linear(ks[3], C, C)
        return (wq, bq, wk, bk, wv, bv, wo, bo)

    ln = (jnp.ones((1, C), jnp.float32), jnp.zeros((1, C), jnp.float32))
    w1, b1 = linear(keys[8], C, F)
    w2, b2 = linear(keys[9], F, C)
    return {
        "word_attn": mha_params(keys[0:4]),
        "cross_att": mha_params(keys[4:8]),
        "ln1": ln, "ln2": ln, "ln3": ln,
        "ff": (w1, b1, w2, b2),
    }


if __name__ == "__main__":
    # batch, dec seq, enc seq, embed (lane-dense: C = 128), heads
    B, N, M, C, H = 2, 8, 16, 128, 4

    key = jax.random.PRNGKey(0)
    kx, ke, kp = jax.random.split(key, 3)
    x = jax.random.normal(kx, (B, N, C), jnp.float32)
    encoder_out = jax.random.normal(ke, (B, M, C), jnp.float32)
    params = init_params(kp, C)

    # one-time, outside the jit: persistent bf16 weights + scale fold
    kparams = jax.block_until_ready(prepare_params(params, H))

    fwd = jax.jit(functools.partial(decoder_layer, num_heads=H))
    out, x_self = fwd(x, encoder_out, kparams)
    jax.block_until_ready((out, x_self))

    ref_out, ref_self = _ref_decoder_layer(x, encoder_out, params, H)
    assert out.shape == (B, N, C) and x_self.shape == (B, N, C)
    # tolerances cover bf16 MXU operands + approx-reciprocal softmax (intentional)
    assert jnp.allclose(out, ref_out, atol=3e-2, rtol=3e-2), \
        float(jnp.max(jnp.abs(out - ref_out)))
    assert jnp.allclose(x_self, ref_self, atol=3e-2, rtol=3e-2), \
        float(jnp.max(jnp.abs(x_self - ref_self)))

    print("KERNEL_OK")
</pallas_src>

<mosaic_0001>
module attributes {stable_mosaic.version = 11 : i64} {
  func.func @_decoder_layer_kernel(%arg0: memref<16x128xf32, #tpu.memory_space<vmem>>, %arg1: memref<32x128xf32, #tpu.memory_space<vmem>>, %arg2: memref<128x128xbf16, #tpu.memory_space<vmem>>, %arg3: memref<1x128xf32, #tpu.memory_space<vmem>>, %arg4: memref<128x128xbf16, #tpu.memory_space<vmem>>, %arg5: memref<1x128xf32, #tpu.memory_space<vmem>>, %arg6: memref<128x128xbf16, #tpu.memory_space<vmem>>, %arg7: memref<1x128xf32, #tpu.memory_space<vmem>>, %arg8: memref<128x128xbf16, #tpu.memory_space<vmem>>, %arg9: memref<1x128xf32, #tpu.memory_space<vmem>>, %arg10: memref<1x128xf32, #tpu.memory_space<vmem>>, %arg11: memref<1x128xf32, #tpu.memory_space<vmem>>, %arg12: memref<128x128xbf16, #tpu.memory_space<vmem>>, %arg13: memref<1x128xf32, #tpu.memory_space<vmem>>, %arg14: memref<128x128xbf16, #tpu.memory_space<vmem>>, %arg15: memref<1x128xf32, #tpu.memory_space<vmem>>, %arg16: memref<128x128xbf16, #tpu.memory_space<vmem>>, %arg17: memref<1x128xf32, #tpu.memory_space<vmem>>, %arg18: memref<128x128xbf16, #tpu.memory_space<vmem>>, %arg19: memref<1x128xf32, #tpu.memory_space<vmem>>, %arg20: memref<1x128xf32, #tpu.memory_space<vmem>>, %arg21: memref<1x128xf32, #tpu.memory_space<vmem>>, %arg22: memref<128x512xbf16, #tpu.memory_space<vmem>>, %arg23: memref<1x512xf32, #tpu.memory_space<vmem>>, %arg24: memref<512x128xbf16, #tpu.memory_space<vmem>>, %arg25: memref<1x128xf32, #tpu.memory_space<vmem>>, %arg26: memref<1x128xf32, #tpu.memory_space<vmem>>, %arg27: memref<1x128xf32, #tpu.memory_space<vmem>>, %arg28: memref<16x128xf32, #tpu.memory_space<vmem>>, %arg29: memref<16x128xf32, #tpu.memory_space<vmem>>) attributes {dimension_semantics = [], scalar_prefetch = 0 : i64, scratch_operands = 0 : i64, tpu.core_type = #tpu.core_type<tc>} {
    %c0 = arith.constant 0 : index
    %c0_0 = arith.constant 0 : index
    %0 = vector.load %arg0[%c0, %c0_0] : memref<16x128xf32, #tpu.memory_space<vmem>>, vector<16x128xf32>
    %c0_1 = arith.constant 0 : index
    %c0_2 = arith.constant 0 : index
    %1 = vector.load %arg1[%c0_1, %c0_2] : memref<32x128xf32, #tpu.memory_space<vmem>>, vector<32x128xf32>
    %2 = arith.truncf %0 : vector<16x128xf32> to vector<16x128xbf16>
    %c0_3 = arith.constant 0 : index
    %c0_4 = arith.constant 0 : index
    %3 = vector.load %arg2[%c0_3, %c0_4] : memref<128x128xbf16, #tpu.memory_space<vmem>>, vector<128x128xbf16>
    %cst = arith.constant dense<0.000000e+00> : vector<16x128xf32>
    %4 = tpu.matmul %2, %3, %cst {dimension_numbers = #tpu.dot_dimension_numbers<[1], [0], [0], [1], [0, 0, 1, 1], [], []>} : vector<16x128xbf16>, vector<128x128xbf16>, vector<16x128xf32> -> vector<16x128xf32>
    %c0_5 = arith.constant 0 : index
    %c0_6 = arith.constant 0 : index
    %5 = vector.load %arg3[%c0_5, %c0_6] : memref<1x128xf32, #tpu.memory_space<vmem>>, vector<1x128xf32>
    %6 = vector.broadcast %5 : vector<1x128xf32> to vector<16x128xf32>
    %7 = arith.addf %4, %6 : vector<16x128xf32>
    %8 = arith.truncf %7 : vector<16x128xf32> to vector<16x128xbf16>
    %9 = vector.shape_cast %8 : vector<16x128xbf16> to vector<2x8x128xbf16>
    %c0_7 = arith.constant 0 : index
    %c0_8 = arith.constant 0 : index
    %10 = vector.load %arg4[%c0_7, %c0_8] : memref<128x128xbf16, #tpu.memory_space<vmem>>, vector<128x128xbf16>
    %cst_9 = arith.constant dense<0.000000e+00> : vector<16x128xf32>
    %11 = tpu.matmul %2, %10, %cst_9 {dimension_numbers = #tpu.dot_dimension_numbers<[1], [0], [0], [1], [0, 0, 1, 1], [], []>} : vector<16x128xbf16>, vector<128x128xbf16>, vector<16x128xf32> -> vector<16x128xf32>
    %c0_10 = arith.constant 0 : index
    %c0_11 = arith.constant 0 : index
    %12 = vector.load %arg5[%c0_10, %c0_11] : memref<1x128xf32, #tpu.memory_space<vmem>>, vector<1x128xf32>
    %13 = vector.broadcast %12 : vector<1x128xf32> to vector<16x128xf32>
    %14 = arith.addf %11, %13 : vector<16x128xf32>
    %15 = arith.truncf %14 : vector<16x128xf32> to vector<16x128xbf16>
    %16 = vector.shape_cast %15 : vector<16x128xbf16> to vector<2x8x128xbf16>
    %c0_12 = arith.constant 0 : index
    %c0_13 = arith.constant 0 : index
    %17 = vector.load %arg6[%c0_12, %c0_13] : memref<128x128xbf16, #tpu.memory_space<vmem>>, vector<128x128xbf16>
    %cst_14 = arith.constant dense<0.000000e+00> : vector<16x128xf32>
    %18 = tpu.matmul %2, %17, %cst_14 {dimension_numbers = #tpu.dot_dimension_numbers<[1], [0], [0], [1], [0, 0, 1, 1], [], []>} : vector<16x128xbf16>, vector<128x128xbf16>, vector<16x128xf32> -> vector<16x128xf32>
    %c0_15 = arith.constant 0 : index
    %c0_16 = arith.constant 0 : index
    %19 = vector.load %arg7[%c0_15, %c0_16] : memref<1x128xf32, #tpu.memory_space<vmem>>, vector<1x128xf32>
    %20 = vector.broadcast %19 : vector<1x128xf32> to vector<16x128xf32>
    %21 = arith.addf %18, %20 : vector<16x128xf32>
    %22 = arith.truncf %21 : vector<16x128xf32> to vector<16x128xbf16>
    %23 = vector.shape_cast %22 : vector<16x128xbf16> to vector<2x8x128xbf16>
    %24 = vector.extract_strided_slice %9 {offsets = [0, 0, 0], sizes = [2, 8, 32], strides = [1, 1, 1]} : vector<2x8x128xbf16> to vector<2x8x32xbf16>
    %25 = vector.extract_strided_slice %16 {offsets = [0, 0, 0], sizes = [2, 8, 32], strides = [1, 1, 1]} : vector<2x8x128xbf16> to vector<2x8x32xbf16>
    "tpu.trace_start"() <{level = 10 : i32, message = "bqd,bkd->bqk"}> : () -> ()
    %cst_17 = arith.constant dense<0.000000e+00> : vector<2x8x8xf32>
    %26 = tpu.matmul %24, %25, %cst_17 {dimension_numbers = #tpu.dot_dimension_numbers<[2], [2], [1], [1], [0, 0, 0, 1, 1, 1], [0], [0]>} : vector<2x8x32xbf16>, vector<2x8x32xbf16>, vector<2x8x8xf32> -> vector<2x8x8xf32>
    "tpu.trace_stop"() : () -> ()
    %27 = vector.extract_strided_slice %9 {offsets = [0, 0, 32], sizes = [2, 8, 32], strides = [1, 1, 1]} : vector<2x8x128xbf16> to vector<2x8x32xbf16>
    %28 = vector.extract_strided_slice %16 {offsets = [0, 0, 32], sizes = [2, 8, 32], strides = [1, 1, 1]} : vector<2x8x128xbf16> to vector<2x8x32xbf16>
    "tpu.trace_start"() <{level = 10 : i32, message = "bqd,bkd->bqk"}> : () -> ()
    %cst_18 = arith.constant dense<0.000000e+00> : vector<2x8x8xf32>
    %29 = tpu.matmul %27, %28, %cst_18 {dimension_numbers = #tpu.dot_dimension_numbers<[2], [2], [1], [1], [0, 0, 0, 1, 1, 1], [0], [0]>} : vector<2x8x32xbf16>, vector<2x8x32xbf16>, vector<2x8x8xf32> -> vector<2x8x8xf32>
    "tpu.trace_stop"() : () -> ()
    %30 = vector.extract_strided_slice %9 {offsets = [0, 0, 64], sizes = [2, 8, 32], strides = [1, 1, 1]} : vector<2x8x128xbf16> to vector<2x8x32xbf16>
    %31 = vector.extract_strided_slice %16 {offsets = [0, 0, 64], sizes = [2, 8, 32], strides = [1, 1, 1]} : vector<2x8x128xbf16> to vector<2x8x32xbf16>
    "tpu.trace_start"() <{level = 10 : i32, message = "bqd,bkd->bqk"}> : () -> ()
    %cst_19 = arith.constant dense<0.000000e+00> : vector<2x8x8xf32>
    %32 = tpu.matmul %30, %31, %cst_19 {dimension_numbers = #tpu.dot_dimension_numbers<[2], [2], [1], [1], [0, 0, 0, 1, 1, 1], [0], [0]>} : vector<2x8x32xbf16>, vector<2x8x32xbf16>, vector<2x8x8xf32> -> vector<2x8x8xf32>
    "tpu.trace_stop"() : () -> ()
    %33 = vector.extract_strided_slice %9 {offsets = [0, 0, 96], sizes = [2, 8, 32], strides = [1, 1, 1]} : vector<2x8x128xbf16> to vector<2x8x32xbf16>
    %34 = vector.extract_strided_slice %16 {offsets = [0, 0, 96], sizes = [2, 8, 32], strides = [1, 1, 1]} : vector<2x8x128xbf16> to vector<2x8x32xbf16>
    "tpu.trace_start"() <{level = 10 : i32, message = "bqd,bkd->bqk"}> : () -> ()
    %cst_20 = arith.constant dense<0.000000e+00> : vector<2x8x8xf32>
    %35 = tpu.matmul %33, %34, %cst_20 {dimension_numbers = #tpu.dot_dimension_numbers<[2], [2], [1], [1], [0, 0, 0, 1, 1, 1], [0], [0]>} : vector<2x8x32xbf16>, vector<2x8x32xbf16>, vector<2x8x8xf32> -> vector<2x8x8xf32>
    "tpu.trace_stop"() : () -> ()
    %36 = vector.shape_cast %26 : vector<2x8x8xf32> to vector<1x2x8x8xf32>
    %37 = vector.shape_cast %29 : vector<2x8x8xf32> to vector<1x2x8x8xf32>
    %38 = vector.shape_cast %32 : vector<2x8x8xf32> to vector<1x2x8x8xf32>
    %39 = vector.shape_cast %35 : vector<2x8x8xf32> to vector<1x2x8x8xf32>
    %40 = tpu.concatenate %36, %37, %38, %39 in 0 : vector<1x2x8x8xf32>, vector<1x2x8x8xf32>, vector<1x2x8x8xf32>, vector<1x2x8x8xf32> -> vector<4x2x8x8xf32>
    %cst_21 = arith.constant dense<0xFF800000> : vector<4x2x8xf32>
    %41 = vector.multi_reduction <maximumf>, %40, %cst_21 [3] : vector<4x2x8x8xf32> to vector<4x2x8xf32>
    %42 = vector.shape_cast %41 : vector<4x2x8xf32> to vector<4x2x8x1xf32>
    %43 = vector.broadcast %42 : vector<4x2x8x1xf32> to vector<4x2x8x8xf32>
    %44 = arith.subf %40, %43 : vector<4x2x8x8xf32>
    %45 = math.exp %44 : vector<4x2x8x8xf32>
    %cst_22 = arith.constant dense<0.000000e+00> : vector<4x2x8xf32>
    %46 = vector.multi_reduction <add>, %45, %cst_22 [3] : vector<4x2x8x8xf32> to vector<4x2x8xf32>
    %47 = vector.shape_cast %46 : vector<4x2x8xf32> to vector<4x2x8x1xf32>
    %48 = tpu.reciprocal %47 {approx = true} : vector<4x2x8x1xf32> -> vector<4x2x8x1xf32>
    %49 = vector.broadcast %48 : vector<4x2x8x1xf32> to vector<4x2x8x8xf32>
    %50 = arith.mulf %45, %49 : vector<4x2x8x8xf32>
    %51 = arith.truncf %50 : vector<4x2x8x8xf32> to vector<4x2x8x8xbf16>
    %cst_23 = arith.constant 0.000000e+00 : f32
    %52 = vector.broadcast %cst_23 : f32 to vector<16x128xf32>
    %53 = vector.extract_strided_slice %51 {offsets = [0, 0, 0, 0], sizes = [1, 2, 8, 8], strides = [1, 1, 1, 1]} : vector<4x2x8x8xbf16> to vector<1x2x8x8xbf16>
    %54 = vector.shape_cast %53 : vector<1x2x8x8xbf16> to vector<2x8x8xbf16>
    %55 = vector.extract_strided_slice %23 {offsets = [0, 0, 0], sizes = [2, 8, 32], strides = [1, 1, 1]} : vector<2x8x128xbf16> to vector<2x8x32xbf16>
    "tpu.trace_start"() <{level = 10 : i32, message = "bqk,bkd->bqd"}> : () -> ()
    %cst_24 = arith.constant dense<0.000000e+00> : vector<2x8x32xf32>
    %56 = tpu.matmul %54, %55, %cst_24 {dimension_numbers = #tpu.dot_dimension_numbers<[2], [1], [1], [2], [0, 0, 0, 1, 1, 2], [0], [0]>} : vector<2x8x8xbf16>, vector<2x8x32xbf16>, vector<2x8x32xf32> -> vector<2x8x32xf32>
    "tpu.trace_stop"() : () -> ()
    %57 = vector.shape_cast %56 : vector<2x8x32xf32> to vector<16x32xf32>
    %58 = arith.truncf %57 : vector<16x32xf32> to vector<16x32xbf16>
    %c0_25 = arith.constant 0 : index
    %c0_26 = arith.constant 0 : index
    %59 = vector.load %arg8[%c0_25, %c0_26] : memref<128x128xbf16, #tpu.memory_space<vmem>>, vector<32x128xbf16>
    %cst_27 = arith.constant dense<0.000000e+00> : vector<16x128xf32>
    %60 = tpu.matmul %58, %59, %cst_27 {dimension_numbers = #tpu.dot_dimension_numbers<[1], [0], [0], [1], [0, 0, 1, 1], [], []>} : vector<16x32xbf16>, vector<32x128xbf16>, vector<16x128xf32> -> vector<16x128xf32>
    %61 = arith.addf %52, %60 : vector<16x128xf32>
    %62 = vector.extract_strided_slice %51 {offsets = [1, 0, 0, 0], sizes = [1, 2, 8, 8], strides = [1, 1, 1, 1]} : vector<4x2x8x8xbf16> to vector<1x2x8x8xbf16>
    %63 = vector.shape_cast %62 : vector<1x2x8x8xbf16> to vector<2x8x8xbf16>
    %64 = vector.extract_strided_slice %23 {offsets = [0, 0, 32], sizes = [2, 8, 32], strides = [1, 1, 1]} : vector<2x8x128xbf16> to vector<2x8x32xbf16>
    "tpu.trace_start"() <{level = 10 : i32, message = "bqk,bkd->bqd"}> : () -> ()
    %cst_28 = arith.constant dense<0.000000e+00> : vector<2x8x32xf32>
    %65 = tpu.matmul %63, %64, %cst_28 {dimension_numbers = #tpu.dot_dimension_numbers<[2], [1], [1], [2], [0, 0, 0, 1, 1, 2], [0], [0]>} : vector<2x8x8xbf16>, vector<2x8x32xbf16>, vector<2x8x32xf32> -> vector<2x8x32xf32>
    "tpu.trace_stop"() : () -> ()
    %66 = vector.shape_cast %65 : vector<2x8x32xf32> to vector<16x32xf32>
    %67 = arith.truncf %66 : vector<16x32xf32> to vector<16x32xbf16>
    %c32 = arith.constant 32 : index
    %c0_29 = arith.constant 0 : index
    %68 = vector.load %arg8[%c32, %c0_29] : memref<128x128xbf16, #tpu.memory_space<vmem>>, vector<32x128xbf16>
    %cst_30 = arith.constant dense<0.000000e+00> : vector<16x128xf32>
    %69 = tpu.matmul %67, %68, %cst_30 {dimension_numbers = #tpu.dot_dimension_numbers<[1], [0], [0], [1], [0, 0, 1, 1], [], []>} : vector<16x32xbf16>, vector<32x128xbf16>, vector<16x128xf32> -> vector<16x128xf32>
    %70 = arith.addf %61, %69 : vector<16x128xf32>
    %71 = vector.extract_strided_slice %51 {offsets = [2, 0, 0, 0], sizes = [1, 2, 8, 8], strides = [1, 1, 1, 1]} : vector<4x2x8x8xbf16> to vector<1x2x8x8xbf16>
    %72 = vector.shape_cast %71 : vector<1x2x8x8xbf16> to vector<2x8x8xbf16>
    %73 = vector.extract_strided_slice %23 {offsets = [0, 0, 64], sizes = [2, 8, 32], strides = [1, 1, 1]} : vector<2x8x128xbf16> to vector<2x8x32xbf16>
    "tpu.trace_start"() <{level = 10 : i32, message = "bqk,bkd->bqd"}> : () -> ()
    %cst_31 = arith.constant dense<0.000000e+00> : vector<2x8x32xf32>
    %74 = tpu.matmul %72, %73, %cst_31 {dimension_numbers = #tpu.dot_dimension_numbers<[2], [1], [1], [2], [0, 0, 0, 1, 1, 2], [0], [0]>} : vector<2x8x8xbf16>, vector<2x8x32xbf16>, vector<2x8x32xf32> -> vector<2x8x32xf32>
    "tpu.trace_stop"() : () -> ()
    %75 = vector.shape_cast %74 : vector<2x8x32xf32> to vector<16x32xf32>
    %76 = arith.truncf %75 : vector<16x32xf32> to vector<16x32xbf16>
    %c64 = arith.constant 64 : index
    %c0_32 = arith.constant 0 : index
    %77 = vector.load %arg8[%c64, %c0_32] : memref<128x128xbf16, #tpu.memory_space<vmem>>, vector<32x128xbf16>
    %cst_33 = arith.constant dense<0.000000e+00> : vector<16x128xf32>
    %78 = tpu.matmul %76, %77, %cst_33 {dimension_numbers = #tpu.dot_dimension_numbers<[1], [0], [0], [1], [0, 0, 1, 1], [], []>} : vector<16x32xbf16>, vector<32x128xbf16>, vector<16x128xf32> -> vector<16x128xf32>
    %79 = arith.addf %70, %78 : vector<16x128xf32>
    %80 = vector.extract_strided_slice %51 {offsets = [3, 0, 0, 0], sizes = [1, 2, 8, 8], strides = [1, 1, 1, 1]} : vector<4x2x8x8xbf16> to vector<1x2x8x8xbf16>
    %81 = vector.shape_cast %80 : vector<1x2x8x8xbf16> to vector<2x8x8xbf16>
    %82 = vector.extract_strided_slice %23 {offsets = [0, 0, 96], sizes = [2, 8, 32], strides = [1, 1, 1]} : vector<2x8x128xbf16> to vector<2x8x32xbf16>
    "tpu.trace_start"() <{level = 10 : i32, message = "bqk,bkd->bqd"}> : () -> ()
    %cst_34 = arith.constant dense<0.000000e+00> : vector<2x8x32xf32>
    %83 = tpu.matmul %81, %82, %cst_34 {dimension_numbers = #tpu.dot_dimension_numbers<[2], [1], [1], [2], [0, 0, 0, 1, 1, 2], [0], [0]>} : vector<2x8x8xbf16>, vector<2x8x32xbf16>, vector<2x8x32xf32> -> vector<2x8x32xf32>
    "tpu.trace_stop"() : () -> ()
    %84 = vector.shape_cast %83 : vector<2x8x32xf32> to vector<16x32xf32>
    %85 = arith.truncf %84 : vector<16x32xf32> to vector<16x32xbf16>
    %c96 = arith.constant 96 : index
    %c0_35 = arith.constant 0 : index
    %86 = vector.load %arg8[%c96, %c0_35] : memref<128x128xbf16, #tpu.memory_space<vmem>>, vector<32x128xbf16>
    %cst_36 = arith.constant dense<0.000000e+00> : vector<16x128xf32>
    %87 = tpu.matmul %85, %86, %cst_36 {dimension_numbers = #tpu.dot_dimension_numbers<[1], [0], [0], [1], [0, 0, 1, 1], [], []>} : vector<16x32xbf16>, vector<32x128xbf16>, vector<16x128xf32> -> vector<16x128xf32>
    %88 = arith.addf %79, %87 : vector<16x128xf32>
    %c0_37 = arith.constant 0 : index
    %c0_38 = arith.constant 0 : index
    %89 = vector.load %arg9[%c0_37, %c0_38] : memref<1x128xf32, #tpu.memory_space<vmem>>, vector<1x128xf32>
    %90 = vector.broadcast %89 : vector<1x128xf32> to vector<16x128xf32>
    %91 = arith.addf %88, %90 : vector<16x128xf32>
    %c0_39 = arith.constant 0 : index
    %c0_40 = arith.constant 0 : index
    %92 = vector.load %arg29[%c0_39, %c0_40] : memref<16x128xf32, #tpu.memory_space<vmem>>, vector<16x128xf32>
    tpu.vector_store %arg29[%c0_39, %c0_40], %91 {strides = array<i32>} : memref<16x128xf32, #tpu.memory_space<vmem>>, vector<16x128xf32>,
    %93 = arith.addf %91, %0 : vector<16x128xf32>
    %cst_41 = arith.constant dense<0.000000e+00> : vector<16xf32>
    %94 = vector.multi_reduction <add>, %93, %cst_41 [1] : vector<16x128xf32> to vector<16xf32>
    %95 = vector.shape_cast %94 : vector<16xf32> to vector<16x1xf32>
    %cst_42 = arith.constant 1.280000e+02 : f32
    %96 = vector.broadcast %cst_42 : f32 to vector<16x1xf32>
    %97 = arith.divf %95, %96 : vector<16x1xf32>
    %98 = vector.broadcast %97 : vector<16x1xf32> to vector<16x128xf32>
    %99 = arith.subf %93, %98 : vector<16x128xf32>
    %100 = arith.mulf %99, %99 : vector<16x128xf32>
    %cst_43 = arith.constant dense<0.000000e+00> : vector<16xf32>
    %101 = vector.multi_reduction <add>, %100, %cst_43 [1] : vector<16x128xf32> to vector<16xf32>
    %102 = vector.shape_cast %101 : vector<16xf32> to vector<16x1xf32>
    %cst_44 = arith.constant 1.280000e+02 : f32
    %103 = vector.broadcast %cst_44 : f32 to vector<16x1xf32>
    %104 = arith.divf %102, %103 : vector<16x1xf32>
    %105 = vector.broadcast %97 : vector<16x1xf32> to vector<16x128xf32>
    %106 = arith.subf %93, %105 : vector<16x128xf32>
    %cst_45 = arith.constant 9.99999974E-6 : f32
    %107 = vector.broadcast %cst_45 : f32 to vector<16x1xf32>
    %108 = arith.addf %104, %107 : vector<16x1xf32>
    %109 = math.rsqrt %108 : vector<16x1xf32>
    %110 = vector.broadcast %109 : vector<16x1xf32> to vector<16x128xf32>
    %111 = arith.mulf %106, %110 : vector<16x128xf32>
    %c0_46 = arith.constant 0 : index
    %c0_47 = arith.constant 0 : index
    %112 = vector.load %arg10[%c0_46, %c0_47] : memref<1x128xf32, #tpu.memory_space<vmem>>, vector<1x128xf32>
    %113 = vector.broadcast %112 : vector<1x128xf32> to vector<16x128xf32>
    %114 = arith.mulf %111, %113 : vector<16x128xf32>
    %c0_48 = arith.constant 0 : index
    %c0_49 = arith.constant 0 : index
    %115 = vector.load %arg11[%c0_48, %c0_49] : memref<1x128xf32, #tpu.memory_space<vmem>>, vector<1x128xf32>
    %116 = vector.broadcast %115 : vector<1x128xf32> to vector<16x128xf32>
    %117 = arith.addf %114, %116 : vector<16x128xf32>
    %118 = arith.truncf %117 : vector<16x128xf32> to vector<16x128xbf16>
    %119 = arith.truncf %1 : vector<32x128xf32> to vector<32x128xbf16>
    %c0_50 = arith.constant 0 : index
    %c0_51 = arith.constant 0 : index
    %120 = vector.load %arg12[%c0_50, %c0_51] : memref<128x128xbf16, #tpu.memory_space<vmem>>, vector<128x128xbf16>
    %cst_52 = arith.constant dense<0.000000e+00> : vector<16x128xf32>
    %121 = tpu.matmul %118, %120, %cst_52 {dimension_numbers = #tpu.dot_dimension_numbers<[1], [0], [0], [1], [0, 0, 1, 1], [], []>} : vector<16x128xbf16>, vector<128x128xbf16>, vector<16x128xf32> -> vector<16x128xf32>
    %c0_53 = arith.constant 0 : index
    %c0_54 = arith.constant 0 : index
    %122 = vector.load %arg13[%c0_53, %c0_54] : memref<1x128xf32, #tpu.memory_space<vmem>>, vector<1x128xf32>
    %123 = vector.broadcast %122 : vector<1x128xf32> to vector<16x128xf32>
    %124 = arith.addf %121, %123 : vector<16x128xf32>
    %125 = arith.truncf %124 : vector<16x128xf32> to vector<16x128xbf16>
    %126 = vector.shape_cast %125 : vector<16x128xbf16> to vector<2x8x128xbf16>
    %c0_55 = arith.constant 0 : index
    %c0_56 = arith.constant 0 : index
    %127 = vector.load %arg14[%c0_55, %c0_56] : memref<128x128xbf16, #tpu.memory_space<vmem>>, vector<128x128xbf16>
    %cst_57 = arith.constant dense<0.000000e+00> : vector<32x128xf32>
    %128 = tpu.matmul %119, %127, %cst_57 {dimension_numbers = #tpu.dot_dimension_numbers<[1], [0], [0], [1], [0, 0, 1, 1], [], []>} : vector<32x128xbf16>, vector<128x128xbf16>, vector<32x128xf32> -> vector<32x128xf32>
    %c0_58 = arith.constant 0 : index
    %c0_59 = arith.constant 0 : index
    %129 = vector.load %arg15[%c0_58, %c0_59] : memref<1x128xf32, #tpu.memory_space<vmem>>, vector<1x128xf32>
    %130 = vector.broadcast %129 : vector<1x128xf32> to vector<32x128xf32>
    %131 = arith.addf %128, %130 : vector<32x128xf32>
    %132 = arith.truncf %131 : vector<32x128xf32> to vector<32x128xbf16>
    %133 = vector.shape_cast %132 : vector<32x128xbf16> to vector<2x16x128xbf16>
    %c0_60 = arith.constant 0 : index
    %c0_61 = arith.constant 0 : index
    %134 = vector.load %arg16[%c0_60, %c0_61] : memref<128x128xbf16, #tpu.memory_space<vmem>>, vector<128x128xbf16>
    %cst_62 = arith.constant dense<0.000000e+00> : vector<32x128xf32>
    %135 = tpu.matmul %119, %134, %cst_62 {dimension_numbers = #tpu.dot_dimension_numbers<[1], [0], [0], [1], [0, 0, 1, 1], [], []>} : vector<32x128xbf16>, vector<128x128xbf16>, vector<32x128xf32> -> vector<32x128xf32>
    %c0_63 = arith.constant 0 : index
    %c0_64 = arith.constant 0 : index
    %136 = vector.load %arg17[%c0_63, %c0_64] : memref<1x128xf32, #tpu.memory_space<vmem>>, vector<1x128xf32>
    %137 = vector.broadcast %136 : vector<1x128xf32> to vector<32x128xf32>
    %138 = arith.addf %135, %137 : vector<32x128xf32>
    %139 = arith.truncf %138 : vector<32x128xf32> to vector<32x128xbf16>
    %140 = vector.shape_cast %139 : vector<32x128xbf16> to vector<2x16x128xbf16>
    %141 = vector.extract_strided_slice %126 {offsets = [0, 0, 0], sizes = [2, 8, 32], strides = [1, 1, 1]} : vector<2x8x128xbf16> to vector<2x8x32xbf16>
    %142 = vector.extract_strided_slice %133 {offsets = [0, 0, 0], sizes = [2, 16, 32], strides = [1, 1, 1]} : vector<2x16x128xbf16> to vector<2x16x32xbf16>
    "tpu.trace_start"() <{level = 10 : i32, message = "bqd,bkd->bqk"}> : () -> ()
    %cst_65 = arith.constant dense<0.000000e+00> : vector<2x8x16xf32>
    %143 = tpu.matmul %141, %142, %cst_65 {dimension_numbers = #tpu.dot_dimension_numbers<[2], [2], [1], [1], [0, 0, 0, 1, 1, 1], [0], [0]>} : vector<2x8x32xbf16>, vector<2x16x32xbf16>, vector<2x8x16xf32> -> vector<2x8x16xf32>
    "tpu.trace_stop"() : () -> ()
    %144 = vector.extract_strided_slice %126 {offsets = [0, 0, 32], sizes = [2, 8, 32], strides = [1, 1, 1]} : vector<2x8x128xbf16> to vector<2x8x32xbf16>
    %145 = vector.extract_strided_slice %133 {offsets = [0, 0, 32], sizes = [2, 16, 32], strides = [1, 1, 1]} : vector<2x16x128xbf16> to vector<2x16x32xbf16>
    "tpu.trace_start"() <{level = 10 : i32, message = "bqd,bkd->bqk"}> : () -> ()
    %cst_66 = arith.constant dense<0.000000e+00> : vector<2x8x16xf32>
    %146 = tpu.matmul %144, %145, %cst_66 {dimension_numbers = #tpu.dot_dimension_numbers<[2], [2], [1], [1], [0, 0, 0, 1, 1, 1], [0], [0]>} : vector<2x8x32xbf16>, vector<2x16x32xbf16>, vector<2x8x16xf32> -> vector<2x8x16xf32>
    "tpu.trace_stop"() : () -> ()
    %147 = vector.extract_strided_slice %126 {offsets = [0, 0, 64], sizes = [2, 8, 32], strides = [1, 1, 1]} : vector<2x8x128xbf16> to vector<2x8x32xbf16>
    %148 = vector.extract_strided_slice %133 {offsets = [0, 0, 64], sizes = [2, 16, 32], strides = [1, 1, 1]} : vector<2x16x128xbf16> to vector<2x16x32xbf16>
    "tpu.trace_start"() <{level = 10 : i32, message = "bqd,bkd->bqk"}> : () -> ()
    %cst_67 = arith.constant dense<0.000000e+00> : vector<2x8x16xf32>
    %149 = tpu.matmul %147, %148, %cst_67 {dimension_numbers = #tpu.dot_dimension_numbers<[2], [2], [1], [1], [0, 0, 0, 1, 1, 1], [0], [0]>} : vector<2x8x32xbf16>, vector<2x16x32xbf16>, vector<2x8x16xf32> -> vector<2x8x16xf32>
    "tpu.trace_stop"() : () -> ()
    %150 = vector.extract_strided_slice %126 {offsets = [0, 0, 96], sizes = [2, 8, 32], strides = [1, 1, 1]} : vector<2x8x128xbf16> to vector<2x8x32xbf16>
    %151 = vector.extract_strided_slice %133 {offsets = [0, 0, 96], sizes = [2, 16, 32], strides = [1, 1, 1]} : vector<2x16x128xbf16> to vector<2x16x32xbf16>
    "tpu.trace_start"() <{level = 10 : i32, message = "bqd,bkd->bqk"}> : () -> ()
    %cst_68 = arith.constant dense<0.000000e+00> : vector<2x8x16xf32>
    %152 = tpu.matmul %150, %151, %cst_68 {dimension_numbers = #tpu.dot_dimension_numbers<[2], [2], [1], [1], [0, 0, 0, 1, 1, 1], [0], [0]>} : vector<2x8x32xbf16>, vector<2x16x32xbf16>, vector<2x8x16xf32> -> vector<2x8x16xf32>
    "tpu.trace_stop"() : () -> ()
    %153 = vector.shape_cast %143 : vector<2x8x16xf32> to vector<1x2x8x16xf32>
    %154 = vector.shape_cast %146 : vector<2x8x16xf32> to vector<1x2x8x16xf32>
    %155 = vector.shape_cast %149 : vector<2x8x16xf32> to vector<1x2x8x16xf32>
    %156 = vector.shape_cast %152 : vector<2x8x16xf32> to vector<1x2x8x16xf32>
    %157 = tpu.concatenate %153, %154, %155, %156 in 0 : vector<1x2x8x16xf32>, vector<1x2x8x16xf32>, vector<1x2x8x16xf32>, vector<1x2x8x16xf32> -> vector<4x2x8x16xf32>
    %cst_69 = arith.constant dense<0xFF800000> : vector<4x2x8xf32>
    %158 = vector.multi_reduction <maximumf>, %157, %cst_69 [3] : vector<4x2x8x16xf32> to vector<4x2x8xf32>
    %159 = vector.shape_cast %158 : vector<4x2x8xf32> to vector<4x2x8x1xf32>
    %160 = vector.broadcast %159 : vector<4x2x8x1xf32> to vector<4x2x8x16xf32>
    %161 = arith.subf %157, %160 : vector<4x2x8x16xf32>
    %162 = math.exp %161 : vector<4x2x8x16xf32>
    %cst_70 = arith.constant dense<0.000000e+00> : vector<4x2x8xf32>
    %163 = vector.multi_reduction <add>, %162, %cst_70 [3] : vector<4x2x8x16xf32> to vector<4x2x8xf32>
    %164 = vector.shape_cast %163 : vector<4x2x8xf32> to vector<4x2x8x1xf32>
    %165 = tpu.reciprocal %164 {approx = true} : vector<4x2x8x1xf32> -> vector<4x2x8x1xf32>
    %166 = vector.broadcast %165 : vector<4x2x8x1xf32> to vector<4x2x8x16xf32>
    %167 = arith.mulf %162, %166 : vector<4x2x8x16xf32>
    %168 = arith.truncf %167 : vector<4x2x8x16xf32> to vector<4x2x8x16xbf16>
    %cst_71 = arith.constant 0.000000e+00 : f32
    %169 = vector.broadcast %cst_71 : f32 to vector<16x128xf32>
    %170 = vector.extract_strided_slice %168 {offsets = [0, 0, 0, 0], sizes = [1, 2, 8, 16], strides = [1, 1, 1, 1]} : vector<4x2x8x16xbf16> to vector<1x2x8x16xbf16>
    %171 = vector.shape_cast %170 : vector<1x2x8x16xbf16> to vector<2x8x16xbf16>
    %172 = vector.extract_strided_slice %140 {offsets = [0, 0, 0], sizes = [2, 16, 32], strides = [1, 1, 1]} : vector<2x16x128xbf16> to vector<2x16x32xbf16>
    "tpu.trace_start"() <{level = 10 : i32, message = "bqk,bkd->bqd"}> : () -> ()
    %cst_72 = arith.constant dense<0.000000e+00> : vector<2x8x32xf32>
    %173 = tpu.matmul %171, %172, %cst_72 {dimension_numbers = #tpu.dot_dimension_numbers<[2], [1], [1], [2], [0, 0, 0, 1, 1, 2], [0], [0]>} : vector<2x8x16xbf16>, vector<2x16x32xbf16>, vector<2x8x32xf32> -> vector<2x8x32xf32>
    "tpu.trace_stop"() : () -> ()
    %174 = vector.shape_cast %173 : vector<2x8x32xf32> to vector<16x32xf32>
    %175 = arith.truncf %174 : vector<16x32xf32> to vector<16x32xbf16>
    %c0_73 = arith.constant 0 : index
    %c0_74 = arith.constant 0 : index
    %176 = vector.load %arg18[%c0_73, %c0_74] : memref<128x128xbf16, #tpu.memory_space<vmem>>, vector<32x128xbf16>
    %cst_75 = arith.constant dense<0.000000e+00> : vector<16x128xf32>
    %177 = tpu.matmul %175, %176, %cst_75 {dimension_numbers = #tpu.dot_dimension_numbers<[1], [0], [0], [1], [0, 0, 1, 1], [], []>} : vector<16x32xbf16>, vector<32x128xbf16>, vector<16x128xf32> -> vector<16x128xf32>
    %178 = arith.addf %169, %177 : vector<16x128xf32>
    %179 = vector.extract_strided_slice %168 {offsets = [1, 0, 0, 0], sizes = [1, 2, 8, 16], strides = [1, 1, 1, 1]} : vector<4x2x8x16xbf16> to vector<1x2x8x16xbf16>
    %180 = vector.shape_cast %179 : vector<1x2x8x16xbf16> to vector<2x8x16xbf16>
    %181 = vector.extract_strided_slice %140 {offsets = [0, 0, 32], sizes = [2, 16, 32], strides = [1, 1, 1]} : vector<2x16x128xbf16> to vector<2x16x32xbf16>
    "tpu.trace_start"() <{level = 10 : i32, message = "bqk,bkd->bqd"}> : () -> ()
    %cst_76 = arith.constant dense<0.000000e+00> : vector<2x8x32xf32>
    %182 = tpu.matmul %180, %181, %cst_76 {dimension_numbers = #tpu.dot_dimension_numbers<[2], [1], [1], [2], [0, 0, 0, 1, 1, 2], [0], [0]>} : vector<2x8x16xbf16>, vector<2x16x32xbf16>, vector<2x8x32xf32> -> vector<2x8x32xf32>
    "tpu.trace_stop"() : () -> ()
    %183 = vector.shape_cast %182 : vector<2x8x32xf32> to vector<16x32xf32>
    %184 = arith.truncf %183 : vector<16x32xf32> to vector<16x32xbf16>
    %c32_77 = arith.constant 32 : index
    %c0_78 = arith.constant 0 : index
    %185 = vector.load %arg18[%c32_77, %c0_78] : memref<128x128xbf16, #tpu.memory_space<vmem>>, vector<32x128xbf16>
    %cst_79 = arith.constant dense<0.000000e+00> : vector<16x128xf32>
    %186 = tpu.matmul %184, %185, %cst_79 {dimension_numbers = #tpu.dot_dimension_numbers<[1], [0], [0], [1], [0, 0, 1, 1], [], []>} : vector<16x32xbf16>, vector<32x128xbf16>, vector<16x128xf32> -> vector<16x128xf32>
    %187 = arith.addf %178, %186 : vector<16x128xf32>
    %188 = vector.extract_strided_slice %168 {offsets = [2, 0, 0, 0], sizes = [1, 2, 8, 16], strides = [1, 1, 1, 1]} : vector<4x2x8x16xbf16> to vector<1x2x8x16xbf16>
    %189 = vector.shape_cast %188 : vector<1x2x8x16xbf16> to vector<2x8x16xbf16>
    %190 = vector.extract_strided_slice %140 {offsets = [0, 0, 64], sizes = [2, 16, 32], strides = [1, 1, 1]} : vector<2x16x128xbf16> to vector<2x16x32xbf16>
    "tpu.trace_start"() <{level = 10 : i32, message = "bqk,bkd->bqd"}> : () -> ()
    %cst_80 = arith.constant dense<0.000000e+00> : vector<2x8x32xf32>
    %191 = tpu.matmul %189, %190, %cst_80 {dimension_numbers = #tpu.dot_dimension_numbers<[2], [1], [1], [2], [0, 0, 0, 1, 1, 2], [0], [0]>} : vector<2x8x16xbf16>, vector<2x16x32xbf16>, vector<2x8x32xf32> -> vector<2x8x32xf32>
    "tpu.trace_stop"() : () -> ()
    %192 = vector.shape_cast %191 : vector<2x8x32xf32> to vector<16x32xf32>
    %193 = arith.truncf %192 : vector<16x32xf32> to vector<16x32xbf16>
    %c64_81 = arith.constant 64 : index
    %c0_82 = arith.constant 0 : index
    %194 = vector.load %arg18[%c64_81, %c0_82] : memref<128x128xbf16, #tpu.memory_space<vmem>>, vector<32x128xbf16>
    %cst_83 = arith.constant dense<0.000000e+00> : vector<16x128xf32>
    %195 = tpu.matmul %193, %194, %cst_83 {dimension_numbers = #tpu.dot_dimension_numbers<[1], [0], [0], [1], [0, 0, 1, 1], [], []>} : vector<16x32xbf16>, vector<32x128xbf16>, vector<16x128xf32> -> vector<16x128xf32>
    %196 = arith.addf %187, %195 : vector<16x128xf32>
    %197 = vector.extract_strided_slice %168 {offsets = [3, 0, 0, 0], sizes = [1, 2, 8, 16], strides = [1, 1, 1, 1]} : vector<4x2x8x16xbf16> to vector<1x2x8x16xbf16>
    %198 = vector.shape_cast %197 : vector<1x2x8x16xbf16> to vector<2x8x16xbf16>
    %199 = vector.extract_strided_slice %140 {offsets = [0, 0, 96], sizes = [2, 16, 32], strides = [1, 1, 1]} : vector<2x16x128xbf16> to vector<2x16x32xbf16>
    "tpu.trace_start"() <{level = 10 : i32, message = "bqk,bkd->bqd"}> : () -> ()
    %cst_84 = arith.constant dense<0.000000e+00> : vector<2x8x32xf32>
    %200 = tpu.matmul %198, %199, %cst_84 {dimension_numbers = #tpu.dot_dimension_numbers<[2], [1], [1], [2], [0, 0, 0, 1, 1, 2], [0], [0]>} : vector<2x8x16xbf16>, vector<2x16x32xbf16>, vector<2x8x32xf32> -> vector<2x8x32xf32>
    "tpu.trace_stop"() : () -> ()
    %201 = vector.shape_cast %200 : vector<2x8x32xf32> to vector<16x32xf32>
    %202 = arith.truncf %201 : vector<16x32xf32> to vector<16x32xbf16>
    %c96_85 = arith.constant 96 : index
    %c0_86 = arith.constant 0 : index
    %203 = vector.load %arg18[%c96_85, %c0_86] : memref<128x128xbf16, #tpu.memory_space<vmem>>, vector<32x128xbf16>
    %cst_87 = arith.constant dense<0.000000e+00> : vector<16x128xf32>
    %204 = tpu.matmul %202, %203, %cst_87 {dimension_numbers = #tpu.dot_dimension_numbers<[1], [0], [0], [1], [0, 0, 1, 1], [], []>} : vector<16x32xbf16>, vector<32x128xbf16>, vector<16x128xf32> -> vector<16x128xf32>
    %205 = arith.addf %196, %204 : vector<16x128xf32>
    %c0_88 = arith.constant 0 : index
    %c0_89 = arith.constant 0 : index
    %206 = vector.load %arg19[%c0_88, %c0_89] : memref<1x128xf32, #tpu.memory_space<vmem>>, vector<1x128xf32>
    %207 = vector.broadcast %206 : vector<1x128xf32> to vector<16x128xf32>
    %208 = arith.addf %205, %207 : vector<16x128xf32>
    %209 = arith.addf %208, %117 : vector<16x128xf32>
    %cst_90 = arith.constant dense<0.000000e+00> : vector<16xf32>
    %210 = vector.multi_reduction <add>, %209, %cst_90 [1] : vector<16x128xf32> to vector<16xf32>
    %211 = vector.shape_cast %210 : vector<16xf32> to vector<16x1xf32>
    %cst_91 = arith.constant 1.280000e+02 : f32
    %212 = vector.broadcast %cst_91 : f32 to vector<16x1xf32>
    %213 = arith.divf %211, %212 : vector<16x1xf32>
    %214 = vector.broadcast %213 : vector<16x1xf32> to vector<16x128xf32>
    %215 = arith.subf %209, %214 : vector<16x128xf32>
    %216 = arith.mulf %215, %215 : vector<16x128xf32>
    %cst_92 = arith.constant dense<0.000000e+00> : vector<16xf32>
    %217 = vector.multi_reduction <add>, %216, %cst_92 [1] : vector<16x128xf32> to vector<16xf32>
    %218 = vector.shape_cast %217 : vector<16xf32> to vector<16x1xf32>
    %cst_93 = arith.constant 1.280000e+02 : f32
    %219 = vector.broadcast %cst_93 : f32 to vector<16x1xf32>
    %220 = arith.divf %218, %219 : vector<16x1xf32>
    %221 = vector.broadcast %213 : vector<16x1xf32> to vector<16x128xf32>
    %222 = arith.subf %209, %221 : vector<16x128xf32>
    %cst_94 = arith.constant 9.99999974E-6 : f32
    %223 = vector.broadcast %cst_94 : f32 to vector<16x1xf32>
    %224 = arith.addf %220, %223 : vector<16x1xf32>
    %225 = math.rsqrt %224 : vector<16x1xf32>
    %226 = vector.broadcast %225 : vector<16x1xf32> to vector<16x128xf32>
    %227 = arith.mulf %222, %226 : vector<16x128xf32>
    %c0_95 = arith.constant 0 : index
    %c0_96 = arith.constant 0 : index
    %228 = vector.load %arg20[%c0_95, %c0_96] : memref<1x128xf32, #tpu.memory_space<vmem>>, vector<1x128xf32>
    %229 = vector.broadcast %228 : vector<1x128xf32> to vector<16x128xf32>
    %230 = arith.mulf %227, %229 : vector<16x128xf32>
    %c0_97 = arith.constant 0 : index
    %c0_98 = arith.constant 0 : index
    %231 = vector.load %arg21[%c0_97, %c0_98] : memref<1x128xf32, #tpu.memory_space<vmem>>, vector<1x128xf32>
    %232 = vector.broadcast %231 : vector<1x128xf32> to vector<16x128xf32>
    %233 = arith.addf %230, %232 : vector<16x128xf32>
    %234 = arith.truncf %233 : vector<16x128xf32> to vector<16x128xbf16>
    %c0_99 = arith.constant 0 : index
    %c0_100 = arith.constant 0 : index
    %235 = vector.load %arg22[%c0_99, %c0_100] : memref<128x512xbf16, #tpu.memory_space<vmem>>, vector<128x512xbf16>
    %cst_101 = arith.constant dense<0.000000e+00> : vector<16x512xf32>
    %236 = tpu.matmul %234, %235, %cst_101 {dimension_numbers = #tpu.dot_dimension_numbers<[1], [0], [0], [1], [0, 0, 1, 1], [], []>} : vector<16x128xbf16>, vector<128x512xbf16>, vector<16x512xf32> -> vector<16x512xf32>
    %c0_102 = arith.constant 0 : index
    %c0_103 = arith.constant 0 : index
    %237 = vector.load %arg23[%c0_102, %c0_103] : memref<1x512xf32, #tpu.memory_space<vmem>>, vector<1x512xf32>
    %238 = vector.broadcast %237 : vector<1x512xf32> to vector<16x512xf32>
    %239 = arith.addf %236, %238 : vector<16x512xf32>
    %cst_104 = arith.constant 0.000000e+00 : f32
    %240 = vector.broadcast %cst_104 : f32 to vector<16x512xf32>
    %241 = arith.maximumf %239, %240 : vector<16x512xf32>
    %242 = arith.truncf %241 : vector<16x512xf32> to vector<16x512xbf16>
    %c0_105 = arith.constant 0 : index
    %c0_106 = arith.constant 0 : index
    %243 = vector.load %arg24[%c0_105, %c0_106] : memref<512x128xbf16, #tpu.memory_space<vmem>>, vector<512x128xbf16>
    %cst_107 = arith.constant dense<0.000000e+00> : vector<16x128xf32>
    %244 = tpu.matmul %242, %243, %cst_107 {dimension_numbers = #tpu.dot_dimension_numbers<[1], [0], [0], [1], [0, 0, 1, 1], [], []>} : vector<16x512xbf16>, vector<512x128xbf16>, vector<16x128xf32> -> vector<16x128xf32>
    %c0_108 = arith.constant 0 : index
    %c0_109 = arith.constant 0 : index
    %245 = vector.load %arg25[%c0_108, %c0_109] : memref<1x128xf32, #tpu.memory_space<vmem>>, vector<1x128xf32>
    %246 = vector.broadcast %245 : vector<1x128xf32> to vector<16x128xf32>
    %247 = arith.addf %244, %246 : vector<16x128xf32>
    %248 = arith.addf %247, %233 : vector<16x128xf32>
    %cst_110 = arith.constant dense<0.000000e+00> : vector<16xf32>
    %249 = vector.multi_reduction <add>, %248, %cst_110 [1] : vector<16x128xf32> to vector<16xf32>
    %250 = vector.shape_cast %249 : vector<16xf32> to vector<16x1xf32>
    %cst_111 = arith.constant 1.280000e+02 : f32
    %251 = vector.broadcast %cst_111 : f32 to vector<16x1xf32>
    %252 = arith.divf %250, %251 : vector<16x1xf32>
    %253 = vector.broadcast %252 : vector<16x1xf32> to vector<16x128xf32>
    %254 = arith.subf %248, %253 : vector<16x128xf32>
    %255 = arith.mulf %254, %254 : vector<16x128xf32>
    %cst_112 = arith.constant dense<0.000000e+00> : vector<16xf32>
    %256 = vector.multi_reduction <add>, %255, %cst_112 [1] : vector<16x128xf32> to vector<16xf32>
    %257 = vector.shape_cast %256 : vector<16xf32> to vector<16x1xf32>
    %cst_113 = arith.constant 1.280000e+02 : f32
    %258 = vector.broadcast %cst_113 : f32 to vector<16x1xf32>
    %259 = arith.divf %257, %258 : vector<16x1xf32>
    %260 = vector.broadcast %252 : vector<16x1xf32> to vector<16x128xf32>
    %261 = arith.subf %248, %260 : vector<16x128xf32>
    %cst_114 = arith.constant 9.99999974E-6 : f32
    %262 = vector.broadcast %cst_114 : f32 to vector<16x1xf32>
    %263 = arith.addf %259, %262 : vector<16x1xf32>
    %264 = math.rsqrt %263 : vector<16x1xf32>
    %265 = vector.broadcast %264 : vector<16x1xf32> to vector<16x128xf32>
    %266 = arith.mulf %261, %265 : vector<16x128xf32>
    %c0_115 = arith.constant 0 : index
    %c0_116 = arith.constant 0 : index
    %267 = vector.load %arg26[%c0_115, %c0_116] : memref<1x128xf32, #tpu.memory_space<vmem>>, vector<1x128xf32>
    %268 = vector.broadcast %267 : vector<1x128xf32> to vector<16x128xf32>
    %269 = arith.mulf %266, %268 : vector<16x128xf32>
    %c0_117 = arith.constant 0 : index
    %c0_118 = arith.constant 0 : index
    %270 = vector.load %arg27[%c0_117, %c0_118] : memref<1x128xf32, #tpu.memory_space<vmem>>, vector<1x128xf32>
    %271 = vector.broadcast %270 : vector<1x128xf32> to vector<16x128xf32>
    %272 = arith.addf %269, %271 : vector<16x128xf32>
    %c0_119 = arith.constant 0 : index
    %c0_120 = arith.constant 0 : index
    %273 = vector.load %arg28[%c0_119, %c0_120] : memref<16x128xf32, #tpu.memory_space<vmem>>, vector<16x128xf32>
    tpu.vector_store %arg28[%c0_119, %c0_120], %272 {strides = array<i32>} : memref<16x128xf32, #tpu.memory_space<vmem>>, vector<16x128xf32>,
    return
  }
}

</mosaic_0001>

<llo_original>
// kernel: decoder_layer.1
$region0: #{decoder_layer.1}
  #allocation0 [shape = 'u32[]', space=smem, size = 0x4, offset = 0x4, fixed_abs, tag = 'smem constant byte address 0x4 - core index']
  #allocation1 [shape = 'u32[144,128]{1,0:T(1,128)}', space=vmem, size = 0x12000, scoped, tag = 'internal scratch']
  %s0 = inlined_call_operand.smem [shape: u32[30], index: -1, kind: input, shape index: {}]
  %s1 = sld [smem:[%s0]]
  %s2 = scalar_lea.smem %s0, 1
  %s3 = sld [smem:[%s2]]
  %s4 = scalar_lea.smem %s0, 2
  %s5 = sld [smem:[%s4]]
  %s6 = scalar_lea.smem %s0, 3
  %s7 = sld [smem:[%s6]]
  %s8 = scalar_lea.smem %s0, 4
  %s9 = sld [smem:[%s8]]
  %s10 = scalar_lea.smem %s0, 5
  %s11 = sld [smem:[%s10]]
  %s12 = scalar_lea.smem %s0, 6
  %s13 = sld [smem:[%s12]]
  %s14 = scalar_lea.smem %s0, 7
  %s15 = sld [smem:[%s14]]
  %s16 = scalar_lea.smem %s0, 8
  %s17 = sld [smem:[%s16]]
  %s18 = scalar_lea.smem %s0, 9
  %s19 = sld [smem:[%s18]]
  %s20 = scalar_lea.smem %s0, 10
  %s21 = sld [smem:[%s20]]
  %s22 = scalar_lea.smem %s0, 11
  %s23 = sld [smem:[%s22]]
  %s24 = scalar_lea.smem %s0, 12
  %s25 = sld [smem:[%s24]]
  %s26 = scalar_lea.smem %s0, 13
  %s27 = sld [smem:[%s26]]
  %s28 = scalar_lea.smem %s0, 14
  %s29 = sld [smem:[%s28]]
  %s30 = scalar_lea.smem %s0, 15
  %s31 = sld [smem:[%s30]]
  %s32 = scalar_lea.smem %s0, 16
  %s33 = sld [smem:[%s32]]
  %s34 = scalar_lea.smem %s0, 17
  %s35 = sld [smem:[%s34]]
  %s36 = scalar_lea.smem %s0, 18
  %s37 = sld [smem:[%s36]]
  %s38 = scalar_lea.smem %s0, 19
  %s39 = sld [smem:[%s38]]
  %s40 = scalar_lea.smem %s0, 20
  %s41 = sld [smem:[%s40]]
  %s42 = scalar_lea.smem %s0, 21
  %s43 = sld [smem:[%s42]]
  %s44 = scalar_lea.smem %s0, 22
  %s45 = sld [smem:[%s44]]
  %s46 = scalar_lea.smem %s0, 23
  %s47 = sld [smem:[%s46]]
  %s48 = scalar_lea.smem %s0, 24
  %s49 = sld [smem:[%s48]]
  %s50 = scalar_lea.smem %s0, 25
  %s51 = sld [smem:[%s50]]
  %s52 = scalar_lea.smem %s0, 26
  %s53 = sld [smem:[%s52]]
  %s54 = scalar_lea.smem %s0, 27
  %s55 = sld [smem:[%s54]]
  %s56 = scalar_lea.smem %s0, 28
  %s57 = sld [smem:[%s56]]
  %s58 = scalar_lea.smem %s0, 29
  %s59 = sld [smem:[%s58]]
  %60 = xla_tuple %s57, %s59
  %s61 = sld [smem:[#allocation0]]
  $region178: #{decoder_layer.1} parent=0
    _
  %s63 = ssub.s32 1, %s61
  %s64 = scalar_select 0, %s63, %s61
  $region1: #{decoder_layer.1} parent=0
    #allocation2 [shape = 'u8[8192]{0}', space=vmem, size = 0x2000, scoped, tag = 'input window, operand 0, single buffered']
    #allocation3 [shape = 's32[1]{0}', space=sflag, size = 0x4, scoped, tag = 'scoped memory for decoder_layer.1']
    #allocation4 [shape = 's32[1]{0}', space=sflag, size = 0x4, scoped, tag = 'scoped memory for decoder_layer.1']
    #allocation5 [shape = 'u8[16384]{0}', space=vmem, size = 0x4000, scoped, tag = 'input window, operand 1, single buffered']
    #allocation6 [shape = 's32[1]{0}', space=sflag, size = 0x4, scoped, tag = 'scoped memory for decoder_layer.1']
    #allocation7 [shape = 'u8[32768]{0}', space=vmem, size = 0x8000, scoped, tag = 'input window, operand 2, single buffered']
    #allocation8 [shape = 'u8[32768]{0}', space=vmem, size = 0x8000, scoped, tag = 'input window, operand 4, single buffered']
    #allocation9 [shape = 's32[1]{0}', space=sflag, size = 0x4, scoped, tag = 'scoped memory for decoder_layer.1']
    #allocation10 [shape = 'u8[32768]{0}', space=vmem, size = 0x8000, scoped, tag = 'input window, operand 6, single buffered']
    #allocation11 [shape = 'u8[32768]{0}', space=vmem, size = 0x8000, scoped, tag = 'input window, operand 8, single buffered']
    #allocation12 [shape = 's32[1]{0}', space=sflag, size = 0x4, scoped, tag = 'scoped memory for decoder_layer.1']
    #allocation13 [shape = 'u8[32768]{0}', space=vmem, size = 0x8000, scoped, tag = 'input window, operand 12, single buffered']
    #allocation14 [shape = 'u8[32768]{0}', space=vmem, size = 0x8000, scoped, tag = 'input window, operand 14, single buffered']
    #allocation15 [shape = 's32[1]{0}', space=sflag, size = 0x4, scoped, tag = 'scoped memory for decoder_layer.1']
    #allocation16 [shape = 'u8[32768]{0}', space=vmem, size = 0x8000, scoped, tag = 'input window, operand 16, single buffered']
    #allocation17 [shape = 'u8[32768]{0}', space=vmem, size = 0x8000, scoped, tag = 'input window, operand 18, single buffered']
    #allocation18 [shape = 's32[1]{0}', space=sflag, size = 0x4, scoped, tag = 'scoped memory for decoder_layer.1']
    #allocation19 [shape = 'u8[131072]{0}', space=vmem, size = 0x20000, scoped, tag = 'input window, operand 22, single buffered']
    #allocation20 [shape = 'u8[131072]{0}', space=vmem, size = 0x20000, scoped, tag = 'input window, operand 24, single buffered']
    #allocation21 [shape = 's32[1]{0}', space=sflag, size = 0x4, scoped, tag = 'scoped memory for decoder_layer.1']
    #allocation22 [shape = 'u8[8192]{0}', space=vmem, size = 0x2000, scoped, tag = 'output window, operand 0, single buffered']
    #allocation23 [shape = 'u8[8192]{0}', space=vmem, size = 0x2000, scoped, tag = 'output window, operand 1, single buffered']
    #allocation24 [shape = 's32[1]{0}', space=sflag, size = 0x4, scoped, tag = 'scoped memory for decoder_layer.1']
    %65 = vsyncpa [#allocation3], 0
    %66 = vsyncpa [#allocation6], 0
    %67 = vsyncpa [#allocation9], 0
    %68 = vsyncpa [#allocation12], 0
    %69 = vsyncpa [#allocation15], 0
    %70 = vsyncpa [#allocation18], 0
    %71 = vsyncpa [#allocation21], 0
    %72 = vsyncpa [#allocation4], 0
    %73 = vsyncpa [#allocation24], 0
    // Predicated region
    $region2: #{decoder_layer.1} parent=1 // pred_check
      _
    $region3: #{decoder_layer.1} parent=1 // pred_check_branch
      %75 = sbr.rel (0) target = $region5
    $region4: #{decoder_layer.1} parent=1 // pred_region
      %s77 = ssub.s32 256, 256
      %78 = vsyncadd [#allocation3], %s77
      %s79 = sshll.u32 [#allocation2], 4
      %s80 = int_to_ptr.vmem [resolvable:$true] %s79
      %85 = dma.hbm_to_vmem [thread:$0]  %s1, 256, %s80, [#allocation3], 128, 128, 8
    $region5: #{decoder_layer.1} parent=1 // pred_fallthru
      _
    // Predicated region
    $region6: #{decoder_layer.1} parent=1 // pred_check
      _
    $region7: #{decoder_layer.1} parent=1 // pred_check_branch
      %87 = sbr.rel (0) target = $region9
    $region8: #{decoder_layer.1} parent=1 // pred_region
      %s89 = ssub.s32 512, 512
      %90 = vsyncadd [#allocation6], %s89
      %s91 = sshll.u32 [#allocation5], 4
      %s92 = int_to_ptr.vmem [resolvable:$true] %s91
      %97 = dma.hbm_to_vmem [thread:$0]  %s3, 512, %s92, [#allocation6], 128, 128, 8
    $region9: #{decoder_layer.1} parent=1 // pred_fallthru
      _
    // Predicated region
    $region10: #{decoder_layer.1} parent=1 // pred_check
      _
    $region11: #{decoder_layer.1} parent=1 // pred_check_branch
      %99 = sbr.rel (0) target = $region13
    $region12: #{decoder_layer.1} parent=1 // pred_region
      %s101 = ssub.s32 1024, 1024
      %102 = vsyncadd [#allocation6], %s101
      %s103 = sshll.u32 [#allocation7], 4
      %s104 = int_to_ptr.vmem [resolvable:$true] %s103
      %109 = dma.hbm_to_vmem [thread:$0]  %s5, 1024, %s104, [#allocation6], 64, 64, 4
    $region13: #{decoder_layer.1} parent=1 // pred_fallthru
      _
    // Predicated region
    $region14: #{decoder_layer.1} parent=1 // pred_check
      _
    $region15: #{decoder_layer.1} parent=1 // pred_check_branch
      %111 = sbr.rel (0) target = $region17
    $region16: #{decoder_layer.1} parent=1 // pred_region
      _
    $region17: #{decoder_layer.1} parent=1 // pred_fallthru
      _
    // Predicated region
    $region18: #{decoder_layer.1} parent=1 // pred_check
      _
    $region19: #{decoder_layer.1} parent=1 // pred_check_branch
      %113 = sbr.rel (0) target = $region21
    $region20: #{decoder_layer.1} parent=1 // pred_region
      %s115 = ssub.s32 1024, 1024
      %116 = vsyncadd [#allocation9], %s115
      %s117 = sshll.u32 [#allocation8], 4
      %s118 = int_to_ptr.vmem [resolvable:$true] %s117
      %123 = dma.hbm_to_vmem [thread:$0]  %s9, 1024, %s118, [#allocation9], 64, 64, 4
    $region21: #{decoder_layer.1} parent=1 // pred_fallthru
      _
    // Predicated region
    $region22: #{decoder_layer.1} parent=1 // pred_check
      _
    $region23: #{decoder_layer.1} parent=1 // pred_check_branch
      %125 = sbr.rel (0) target = $region25
    $region24: #{decoder_layer.1} parent=1 // pred_region
      _
    $region25: #{decoder_layer.1} parent=1 // pred_fallthru
      _
    // Predicated region
    $region26: #{decoder_layer.1} parent=1 // pred_check
      _
    $region27: #{decoder_layer.1} parent=1 // pred_check_branch
      %127 = sbr.rel (0) target = $region29
    $region28: #{decoder_layer.1} parent=1 // pred_region
      %s129 = ssub.s32 1024, 1024
      %130 = vsyncadd [#allocation9], %s129
      %s131 = sshll.u32 [#allocation10], 4
      %s132 = int_to_ptr.vmem [resolvable:$true] %s131
      %137 = dma.hbm_to_vmem [thread:$0]  %s13, 1024, %s132, [#allocation9], 64, 64, 4
    $region29: #{decoder_layer.1} parent=1 // pred_fallthru
      _
    // Predicated region
    $region30: #{decoder_layer.1} parent=1 // pred_check
      _
    $region31: #{decoder_layer.1} parent=1 // pred_check_branch
      %139 = sbr.rel (0) target = $region33
    $region32: #{decoder_layer.1} parent=1 // pred_region
      _
    $region33: #{decoder_layer.1} parent=1 // pred_fallthru
      _
    // Predicated region
    $region34: #{decoder_layer.1} parent=1 // pred_check
      _
    $region35: #{decoder_layer.1} parent=1 // pred_check_branch
      %141 = sbr.rel (0) target = $region37
    $region36: #{decoder_layer.1} parent=1 // pred_region
      %s143 = ssub.s32 1024, 1024
      %144 = vsyncadd [#allocation12], %s143
      %s145 = sshll.u32 [#allocation11], 4
      %s146 = int_to_ptr.vmem [resolvable:$true] %s145
      %151 = dma.hbm_to_vmem [thread:$0]  %s17, 1024, %s146, [#allocation12], 64, 64, 4
    $region37: #{decoder_layer.1} parent=1 // pred_fallthru
      _
    // Predicated region
    $region38: #{decoder_layer.1} parent=1 // pred_check
      _
    $region39: #{decoder_layer.1} parent=1 // pred_check_branch
      %153 = sbr.rel (0) target = $region41
    $region40: #{decoder_layer.1} parent=1 // pred_region
      _
    $region41: #{decoder_layer.1} parent=1 // pred_fallthru
      _
    // Predicated region
    $region42: #{decoder_layer.1} parent=1 // pred_check
      _
    $region43: #{decoder_layer.1} parent=1 // pred_check_branch
      %155 = sbr.rel (0) target = $region45
    $region44: #{decoder_layer.1} parent=1 // pred_region
      _
    $region45: #{decoder_layer.1} parent=1 // pred_fallthru
      _
    // Predicated region
    $region46: #{decoder_layer.1} parent=1 // pred_check
      _
    $region47: #{decoder_layer.1} parent=1 // pred_check_branch
      %157 = sbr.rel (0) target = $region49
    $region48: #{decoder_layer.1} parent=1 // pred_region
      _
    $region49: #{decoder_layer.1} parent=1 // pred_fallthru
      _
    // Predicated region
    $region50: #{decoder_layer.1} parent=1 // pred_check
      _
    $region51: #{decoder_layer.1} parent=1 // pred_check_branch
      %159 = sbr.rel (0) target = $region53
    $region52: #{decoder_layer.1} parent=1 // pred_region
      %s161 = ssub.s32 1024, 1024
      %162 = vsyncadd [#allocation12], %s161
      %s163 = sshll.u32 [#allocation13], 4
      %s164 = int_to_ptr.vmem [resolvable:$true] %s163
      %169 = dma.hbm_to_vmem [thread:$0]  %s25, 1024, %s164, [#allocation12], 64, 64, 4
    $region53: #{decoder_layer.1} parent=1 // pred_fallthru
      _
    // Predicated region
    $region54: #{decoder_layer.1} parent=1 // pred_check
      _
    $region55: #{decoder_layer.1} parent=1 // pred_check_branch
      %171 = sbr.rel (0) target = $region57
    $region56: #{decoder_layer.1} parent=1 // pred_region
      _
    $region57: #{decoder_layer.1} parent=1 // pred_fallthru
      _
    // Predicated region
    $region58: #{decoder_layer.1} parent=1 // pred_check
      _
    $region59: #{decoder_layer.1} parent=1 // pred_check_branch
      %173 = sbr.rel (0) target = $region61
    $region60: #{decoder_layer.1} parent=1 // pred_region
      %s175 = ssub.s32 1024, 1024
      %176 = vsyncadd [#allocation15], %s175
      %s177 = sshll.u32 [#allocation14], 4
      %s178 = int_to_ptr.vmem [resolvable:$true] %s177
      %183 = dma.hbm_to_vmem [thread:$0]  %s29, 1024, %s178, [#allocation15], 64, 64, 4
    $region61: #{decoder_layer.1} parent=1 // pred_fallthru
      _
    // Predicated region
    $region62: #{decoder_layer.1} parent=1 // pred_check
      _
    $region63: #{decoder_layer.1} parent=1 // pred_check_branch
      %185 = sbr.rel (0) target = $region65
    $region64: #{decoder_layer.1} parent=1 // pred_region
      _
    $region65: #{decoder_layer.1} parent=1 // pred_fallthru
      _
    // Predicated region
    $region66: #{decoder_layer.1} parent=1 // pred_check
      _
    $region67: #{decoder_layer.1} parent=1 // pred_check_branch
      %187 = sbr.rel (0) target = $region69
    $region68: #{decoder_layer.1} parent=1 // pred_region
      %s189 = ssub.s32 1024, 1024
      %190 = vsyncadd [#allocation15], %s189
      %s191 = sshll.u32 [#allocation16], 4
      %s192 = int_to_ptr.vmem [resolvable:$true] %s191
      %197 = dma.hbm_to_vmem [thread:$0]  %s33, 1024, %s192, [#allocation15], 64, 64, 4
    $region69: #{decoder_layer.1} parent=1 // pred_fallthru
      _
    // Predicated region
    $region70: #{decoder_layer.1} parent=1 // pred_check
      _
    $region71: #{decoder_layer.1} parent=1 // pred_check_branch
      %199 = sbr.rel (0) target = $region73
    $region72: #{decoder_layer.1} parent=1 // pred_region
      _
    $region73: #{decoder_layer.1} parent=1 // pred_fallthru
      _
    // Predicated region
    $region74: #{decoder_layer.1} parent=1 // pred_check
      _
    $region75: #{decoder_layer.1} parent=1 // pred_check_branch
      %201 = sbr.rel (0) target = $region77
    $region76: #{decoder_layer.1} parent=1 // pred_region
      %s203 = ssub.s32 1024, 1024
      %204 = vsyncadd [#allocation18], %s203
      %s205 = sshll.u32 [#allocation17], 4
      %s206 = int_to_ptr.vmem [resolvable:$true] %s205
      %211 = dma.hbm_to_vmem [thread:$0]  %s37, 1024, %s206, [#allocation18], 64, 64, 4
    $region77: #{decoder_layer.1} parent=1 // pred_fallthru
      _
    // Predicated region
    $region78: #{decoder_layer.1} parent=1 // pred_check
      _
    $region79: #{decoder_layer.1} parent=1 // pred_check_branch
      %213 = sbr.rel (0) target = $region81
    $region80: #{decoder_layer.1} parent=1 // pred_region
      _
    $region81: #{decoder_layer.1} parent=1 // pred_fallthru
      _
    // Predicated region
    $region82: #{decoder_layer.1} parent=1 // pred_check
      _
    $region83: #{decoder_layer.1} parent=1 // pred_check_branch
      %215 = sbr.rel (0) target = $region85
    $region84: #{decoder_layer.1} parent=1 // pred_region
      _
    $region85: #{decoder_layer.1} parent=1 // pred_fallthru
      _
    // Predicated region
    $region86: #{decoder_layer.1} parent=1 // pred_check
      _
    $region87: #{decoder_layer.1} parent=1 // pred_check_branch
      %217 = sbr.rel (0) target = $region89
    $region88: #{decoder_layer.1} parent=1 // pred_region
      _
    $region89: #{decoder_layer.1} parent=1 // pred_fallthru
      _
    // Predicated region
    $region90: #{decoder_layer.1} parent=1 // pred_check
      _
    $region91: #{decoder_layer.1} parent=1 // pred_check_branch
      %219 = sbr.rel (0) target = $region93
    $region92: #{decoder_layer.1} parent=1 // pred_region
      %s221 = ssub.s32 4096, 4096
      %222 = vsyncadd [#allocation18], %s221
      %s223 = sshll.u32 [#allocation19], 4
      %s224 = int_to_ptr.vmem [resolvable:$true] %s223
      %229 = dma.hbm_to_vmem [thread:$0]  %s45, 4096, %s224, [#allocation18], 256, 256, 16
    $region93: #{decoder_layer.1} parent=1 // pred_fallthru
      _
    // Predicated region
    $region94: #{decoder_layer.1} parent=1 // pred_check
      _
    $region95: #{decoder_layer.1} parent=1 // pred_check_branch
      %231 = sbr.rel (0) target = $region97
    $region96: #{decoder_layer.1} parent=1 // pred_region
      _
    $region97: #{decoder_layer.1} parent=1 // pred_fallthru
      _
    // Predicated region
    $region98: #{decoder_layer.1} parent=1 // pred_check
      _
    $region99: #{decoder_layer.1} parent=1 // pred_check_branch
      %233 = sbr.rel (0) target = $region101
    $region100: #{decoder_layer.1} parent=1 // pred_region
      %s235 = ssub.s32 4096, 4096
      %236 = vsyncadd [#allocation21], %s235
      %s237 = sshll.u32 [#allocation20], 4
      %s238 = int_to_ptr.vmem [resolvable:$true] %s237
      %243 = dma.hbm_to_vmem [thread:$0]  %s49, 4096, %s238, [#allocation21], 64, 64, 4
    $region101: #{decoder_layer.1} parent=1 // pred_fallthru
      _
    // Predicated region
    $region102: #{decoder_layer.1} parent=1 // pred_check
      _
    $region103: #{decoder_layer.1} parent=1 // pred_check_branch
      %245 = sbr.rel (0) target = $region105
    $region104: #{decoder_layer.1} parent=1 // pred_region
      _
    $region105: #{decoder_layer.1} parent=1 // pred_fallthru
      _
    // Predicated region
    $region106: #{decoder_layer.1} parent=1 // pred_check
      _
    $region107: #{decoder_layer.1} parent=1 // pred_check_branch
      %247 = sbr.rel (0) target = $region109
    $region108: #{decoder_layer.1} parent=1 // pred_region
      _
    $region109: #{decoder_layer.1} parent=1 // pred_fallthru
      _
    // Predicated region
    $region110: #{decoder_layer.1} parent=1 // pred_check
      _
    $region111: #{decoder_layer.1} parent=1 // pred_check_branch
      %249 = sbr.rel (0) target = $region113
    $region112: #{decoder_layer.1} parent=1 // pred_region
      _
    $region113: #{decoder_layer.1} parent=1 // pred_fallthru
      _
    // Predicated region
    $region114: #{decoder_layer.1} parent=1 // pred_check
      _
    $region115: #{decoder_layer.1} parent=1 // pred_check_branch
      %251 = sbr.rel (0) target = $region117
    $region116: #{decoder_layer.1} parent=1 // pred_region
      %252 = dma.done [#allocation3], 256
    $region117: #{decoder_layer.1} parent=1 // pred_fallthru
      _
    // Predicated region
    $region118: #{decoder_layer.1} parent=1 // pred_check
      _
    $region119: #{decoder_layer.1} parent=1 // pred_check_branch
      %254 = sbr.rel (0) target = $region121
    $region120: #{decoder_layer.1} parent=1 // pred_region
      %255 = dma.done [#allocation6], 512
    $region121: #{decoder_layer.1} parent=1 // pred_fallthru
      _
    // Predicated region
    $region122: #{decoder_layer.1} parent=1 // pred_check
      _
    $region123: #{decoder_layer.1} parent=1 // pred_check_branch
      %257 = sbr.rel (0) target = $region125
    $region124: #{decoder_layer.1} parent=1 // pred_region
      %258 = dma.done [#allocation6], 1024
    $region125: #{decoder_layer.1} parent=1 // pred_fallthru
      _
    // Predicated region
    $region126: #{decoder_layer.1} parent=1 // pred_check
      _
    $region127: #{decoder_layer.1} parent=1 // pred_check_branch
      %260 = sbr.rel (0) target = $region129
    $region128: #{decoder_layer.1} parent=1 // pred_region
      %261 = dma.done [#allocation9], 1024
    $region129: #{decoder_layer.1} parent=1 // pred_fallthru
      _
    // Predicated region
    $region130: #{decoder_layer.1} parent=1 // pred_check
      _
    $region131: #{decoder_layer.1} parent=1 // pred_check_branch
      %263 = sbr.rel (0) target = $region133
    $region132: #{decoder_layer.1} parent=1 // pred_region
      %264 = dma.done [#allocation9], 1024
    $region133: #{decoder_layer.1} parent=1 // pred_fallthru
      _
    // Predicated region
    $region134: #{decoder_layer.1} parent=1 // pred_check
      _
    $region135: #{decoder_layer.1} parent=1 // pred_check_branch
      %266 = sbr.rel (0) target = $region137
    $region136: #{decoder_layer.1} parent=1 // pred_region
      %267 = dma.done [#allocation12], 1024
    $region137: #{decoder_layer.1} parent=1 // pred_fallthru
      _
    // Predicated region
    $region138: #{decoder_layer.1} parent=1 // pred_check
      _
    $region139: #{decoder_layer.1} parent=1 // pred_check_branch
      %269 = sbr.rel (0) target = $region141
    $region140: #{decoder_layer.1} parent=1 // pred_region
      %270 = dma.done [#allocation12], 1024
    $region141: #{decoder_layer.1} parent=1 // pred_fallthru
      _
    // Predicated region
    $region142: #{decoder_layer.1} parent=1 // pred_check
      _
    $region143: #{decoder_layer.1} parent=1 // pred_check_branch
      %272 = sbr.rel (0) target = $region145
    $region144: #{decoder_layer.1} parent=1 // pred_region
      %273 = dma.done [#allocation15], 1024
    $region145: #{decoder_layer.1} parent=1 // pred_fallthru
      _
    // Predicated region
    $region146: #{decoder_layer.1} parent=1 // pred_check
      _
    $region147: #{decoder_layer.1} parent=1 // pred_check_branch
      %275 = sbr.rel (0) target = $region149
    $region148: #{decoder_layer.1} parent=1 // pred_region
      %276 = dma.done [#allocation15], 1024
    $region149: #{decoder_layer.1} parent=1 // pred_fallthru
      _
    // Predicated region
    $region150: #{decoder_layer.1} parent=1 // pred_check
      _
    $region151: #{decoder_layer.1} parent=1 // pred_check_branch
      %278 = sbr.rel (0) target = $region153
    $region152: #{decoder_layer.1} parent=1 // pred_region
      %279 = dma.done [#allocation18], 1024
    $region153: #{decoder_layer.1} parent=1 // pred_fallthru
      _
    // Predicated region
    $region154: #{decoder_layer.1} parent=1 // pred_check
      _
    $region155: #{decoder_layer.1} parent=1 // pred_check_branch
      %281 = sbr.rel (0) target = $region157
    $region156: #{decoder_layer.1} parent=1 // pred_region
      %282 = dma.done [#allocation18], 4096
    $region157: #{decoder_layer.1} parent=1 // pred_fallthru
      _
    // Predicated region
    $region158: #{decoder_layer.1} parent=1 // pred_check
      _
    $region159: #{decoder_layer.1} parent=1 // pred_check_branch
      %284 = sbr.rel (0) target = $region161
    $region160: #{decoder_layer.1} parent=1 // pred_region
      %285 = dma.done [#allocation21], 4096
    $region161: #{decoder_layer.1} parent=1 // pred_fallthru
      _
    %v287 = vld [vmem:[#allocation2] sm:$0xff]
    %v288 = vld [vmem:[#allocation2 + $0x8] sm:$0xff]
    %v289 = vld [vmem:[#allocation5] sm:$0xff]
    %v290 = vld [vmem:[#allocation5 + $0x8] sm:$0xff]
    %v291 = vld [vmem:[#allocation5 + $0x10] sm:$0xff]
    %v292 = vld [vmem:[#allocation5 + $0x18] sm:$0xff]
    %v293 = vpack.c.bf16 %v288, %v287
    %v294 = vld [vmem:[#allocation7] sm:$0xf]
    %v295 = vld [vmem:[#allocation7 + $0x4] sm:$0xf]
    %v296 = vld [vmem:[#allocation7 + $0x8] sm:$0xf]
    %v297 = vld [vmem:[#allocation7 + $0xc] sm:$0xf]
    %v298 = vld [vmem:[#allocation7 + $0x10] sm:$0xf]
    %v299 = vld [vmem:[#allocation7 + $0x14] sm:$0xf]
    %v300 = vld [vmem:[#allocation7 + $0x18] sm:$0xf]
    %v301 = vld [vmem:[#allocation7 + $0x1c] sm:$0xf]
    %v302 = vld [vmem:[#allocation7 + $0x20] sm:$0xf]
    %v303 = vld [vmem:[#allocation7 + $0x24] sm:$0xf]
    %v304 = vld [vmem:[#allocation7 + $0x28] sm:$0xf]
    %v305 = vld [vmem:[#allocation7 + $0x2c] sm:$0xf]
    %v306 = vld [vmem:[#allocation7 + $0x30] sm:$0xf]
    %v307 = vld [vmem:[#allocation7 + $0x34] sm:$0xf]
    %v308 = vld [vmem:[#allocation7 + $0x38] sm:$0xf]
    %v309 = vld [vmem:[#allocation7 + $0x3c] sm:$0xf]
    %v310 = vld [vmem:[%s7] sm:$0x1]
    %v312 = vlaneseq
    %v313 = vshrl.u32 %v312, 7
    %v314 = vsub.s32 0, %v313
    %v315 = vrot.slane %v310, %v314
    %v333 = vunpack.c.l.b16 %v294
    %v334 = vunpack.c.l.b16 %v295
    %v335 = vunpack.c.l.b16 %v296
    %v336 = vunpack.c.l.b16 %v297
    %v337 = vunpack.c.l.b16 %v298
    %v338 = vunpack.c.l.b16 %v299
    %v339 = vunpack.c.l.b16 %v300
    %v340 = vunpack.c.l.b16 %v301
    %v341 = vunpack.c.l.b16 %v302
    %v342 = vunpack.c.l.b16 %v303
    %v343 = vunpack.c.l.b16 %v304
    %v344 = vunpack.c.l.b16 %v305
    %v345 = vunpack.c.l.b16 %v306
    %v346 = vunpack.c.l.b16 %v307
    %v347 = vunpack.c.l.b16 %v308
    %v348 = vunpack.c.l.b16 %v309
    %v349 = vpack.c.b16 %v334, %v333
    %v350 = vpack.c.b16 %v336, %v335
    %v351 = vpack.c.b16 %v338, %v337
    %v352 = vpack.c.b16 %v340, %v339
    %v353 = vpack.c.b16 %v342, %v341
    %v354 = vpack.c.b16 %v344, %v343
    %v355 = vpack.c.b16 %v346, %v345
    %v356 = vpack.c.b16 %v348, %v347
    %365 = vmatprep.subr.bf16.mxu0 0
    %366 = vmatpush1.bf16.msra.mxu0 %v356
    %367 = vmatprep.subr.bf16.mxu0 0
    %368 = vmatpush1.bf16.msra.mxu0 %v355
    %369 = vmatprep.subr.bf16.mxu0 0
    %370 = vmatpush1.bf16.msra.mxu0 %v354
    %371 = vmatprep.subr.bf16.mxu0 0
    %372 = vmatpush1.bf16.msra.mxu0 %v353
    %373 = vmatprep.subr.bf16.mxu0 0
    %374 = vmatpush1.bf16.msra.mxu0 %v352
    %375 = vmatprep.subr.bf16.mxu0 0
    %376 = vmatpush1.bf16.msra.mxu0 %v351
    %377 = vmatprep.subr.bf16.mxu0 0
    %378 = vmatpush1.bf16.msra.mxu0 %v350
    %379 = vmatprep.subr.bf16.mxu0 0
    %380 = vmatpush1.bf16.msra.mxu0 %v349
    %381 = vmatprep.subr.bf16.mxu0 0
    %382 = vmatpush2.bf16.msra.mxu0 0
    %383 = vmatprep.subr.bf16.mxu0 0
    %384 = vmatpush2.bf16.msra.mxu0 0
    %385 = vmatprep.subr.bf16.mxu0 0
    %386 = vmatpush2.bf16.msra.mxu0 0
    %387 = vmatprep.subr.bf16.mxu0 0
    %388 = vmatpush2.bf16.msra.mxu0 0
    %389 = vmatprep.subr.bf16.mxu0 0
    %390 = vmatpush2.bf16.msra.mxu0 0
    %391 = vmatprep.subr.bf16.mxu0 0
    %392 = vmatpush2.bf16.msra.mxu0 0
    %393 = vmatprep.subr.bf16.mxu0 0
    %394 = vmatpush2.bf16.msra.mxu0 0
    %395 = vmatprep.subr.bf16.mxu0 0
    %396 = vmatpush2.bf16.msra.mxu0 0
    %397 = vmatprep.mubr.bf16.mxu0 0
    %398 = vmatmul.mubr.bf16.gmra.mxu0 %v293
    %v399 = vpop.f32.mrf.mxu0
    %v400 = vadd.f32 %v315, %v399
    %v401 = vpop.f32.mrf.mxu0
    %v402 = vpop.f32.mrf.mxu0
    %v403 = vadd.f32 %v315, %v402
    %v404 = vpop.f32.mrf.mxu0
    %405 = vdwg.mxu0
    %v406 = vpack.c.bf16 %v403, %v400
    %v408 = vunpack.c.l.b16 %v406
    %v409 = vunpack.c.h.b16 %v406
    %v410 = vpack.c.b16 %v408, %v408
    %v411 = vpack.c.b16 %v409, %v409
    %v412 = vld [vmem:[#allocation8] sm:$0xf]
    %v413 = vld [vmem:[#allocation8 + $0x4] sm:$0xf]
    %v414 = vld [vmem:[#allocation8 + $0x8] sm:$0xf]
    %v415 = vld [vmem:[#allocation8 + $0xc] sm:$0xf]
    %v416 = vld [vmem:[#allocation8 + $0x10] sm:$0xf]
    %v417 = vld [vmem:[#allocation8 + $0x14] sm:$0xf]
    %v418 = vld [vmem:[#allocation8 + $0x18] sm:$0xf]
    %v419 = vld [vmem:[#allocation8 + $0x1c] sm:$0xf]
    %v420 = vld [vmem:[#allocation8 + $0x20] sm:$0xf]
    %v421 = vld [vmem:[#allocation8 + $0x24] sm:$0xf]
    %v422 = vld [vmem:[#allocation8 + $0x28] sm:$0xf]
    %v423 = vld [vmem:[#allocation8 + $0x2c] sm:$0xf]
    %v424 = vld [vmem:[#allocation8 + $0x30] sm:$0xf]
    %v425 = vld [vmem:[#allocation8 + $0x34] sm:$0xf]
    %v426 = vld [vmem:[#allocation8 + $0x38] sm:$0xf]
    %v427 = vld [vmem:[#allocation8 + $0x3c] sm:$0xf]
    %v428 = vld [vmem:[%s11] sm:$0x1]
    %v430 = vlaneseq
    %v431 = vshrl.u32 %v430, 7
    %v432 = vsub.s32 0, %v431
    %v433 = vrot.slane %v428, %v432
    %v451 = vunpack.c.l.b16 %v412
    %v452 = vunpack.c.l.b16 %v413
    %v453 = vunpack.c.l.b16 %v414
    %v454 = vunpack.c.l.b16 %v415
    %v455 = vunpack.c.l.b16 %v416
    %v456 = vunpack.c.l.b16 %v417
    %v457 = vunpack.c.l.b16 %v418
    %v458 = vunpack.c.l.b16 %v419
    %v459 = vunpack.c.l.b16 %v420
    %v460 = vunpack.c.l.b16 %v421
    %v461 = vunpack.c.l.b16 %v422
    %v462 = vunpack.c.l.b16 %v423
    %v463 = vunpack.c.l.b16 %v424
    %v464 = vunpack.c.l.b16 %v425
    %v465 = vunpack.c.l.b16 %v426
    %v466 = vunpack.c.l.b16 %v427
    %v467 = vpack.c.b16 %v452, %v451
    %v468 = vpack.c.b16 %v454, %v453
    %v469 = vpack.c.b16 %v456, %v455
    %v470 = vpack.c.b16 %v458, %v457
    %v471 = vpack.c.b16 %v460, %v459
    %v472 = vpack.c.b16 %v462, %v461
    %v473 = vpack.c.b16 %v464, %v463
    %v474 = vpack.c.b16 %v466, %v465
    %483 = vmatprep.subr.bf16.mxu0 0
    %484 = vmatpush1.bf16.msra.mxu0 %v474
    %485 = vmatprep.subr.bf16.mxu0 0
    %486 = vmatpush1.bf16.msra.mxu0 %v473
    %487 = vmatprep.subr.bf16.mxu0 0
    %488 = vmatpush1.bf16.msra.mxu0 %v472
    %489 = vmatprep.subr.bf16.mxu0 0
    %490 = vmatpush1.bf16.msra.mxu0 %v471
    %491 = vmatprep.subr.bf16.mxu0 0
    %492 = vmatpush1.bf16.msra.mxu0 %v470
    %493 = vmatprep.subr.bf16.mxu0 0
    %494 = vmatpush1.bf16.msra.mxu0 %v469
    %495 = vmatprep.subr.bf16.mxu0 0
    %496 = vmatpush1.bf16.msra.mxu0 %v468
    %497 = vmatprep.subr.bf16.mxu0 0
    %498 = vmatpush1.bf16.msra.mxu0 %v467
    %499 = vmatprep.subr.bf16.mxu0 0
    %500 = vmatpush2.bf16.msra.mxu0 0
    %501 = vmatprep.subr.bf16.mxu0 0
    %502 = vmatpush2.bf16.msra.mxu0 0
    %503 = vmatprep.subr.bf16.mxu0 0
    %504 = vmatpush2.bf16.msra.mxu0 0
    %505 = vmatprep.subr.bf16.mxu0 0
    %506 = vmatpush2.bf16.msra.mxu0 0
    %507 = vmatprep.subr.bf16.mxu0 0
    %508 = vmatpush2.bf16.msra.mxu0 0
    %509 = vmatprep.subr.bf16.mxu0 0
    %510 = vmatpush2.bf16.msra.mxu0 0
    %511 = vmatprep.subr.bf16.mxu0 0
    %512 = vmatpush2.bf16.msra.mxu0 0
    %513 = vmatprep.subr.bf16.mxu0 0
    %514 = vmatpush2.bf16.msra.mxu0 0
    %515 = vmatprep.mubr.bf16.mxu0 0
    %516 = vmatmul.mubr.bf16.gmra.mxu0 %v293
    %v517 = vpop.f32.mrf.mxu0
    %v518 = vadd.f32 %v433, %v517
    %v519 = vpop.f32.mrf.mxu0
    %v520 = vpop.f32.mrf.mxu0
    %v521 = vadd.f32 %v433, %v520
    %v522 = vpop.f32.mrf.mxu0
    %523 = vdwg.mxu0
    %v524 = vpack.c.bf16 %v521, %v518
    %v526 = vunpack.c.l.b16 %v524
    %v527 = vunpack.c.h.b16 %v524
    %v528 = vpack.c.b16 %v526, %v526
    %v529 = vpack.c.b16 %v527, %v527
    %v530 = vld [vmem:[#allocation10] sm:$0xf]
    %v531 = vld [vmem:[#allocation10 + $0x4] sm:$0xf]
    %v532 = vld [vmem:[#allocation10 + $0x8] sm:$0xf]
    %v533 = vld [vmem:[#allocation10 + $0xc] sm:$0xf]
    %v534 = vld [vmem:[#allocation10 + $0x10] sm:$0xf]
    %v535 = vld [vmem:[#allocation10 + $0x14] sm:$0xf]
    %v536 = vld [vmem:[#allocation10 + $0x18] sm:$0xf]
    %v537 = vld [vmem:[#allocation10 + $0x1c] sm:$0xf]
    %v538 = vld [vmem:[#allocation10 + $0x20] sm:$0xf]
    %v539 = vld [vmem:[#allocation10 + $0x24] sm:$0xf]
    %v540 = vld [vmem:[#allocation10 + $0x28] sm:$0xf]
    %v541 = vld [vmem:[#allocation10 + $0x2c] sm:$0xf]
    %v542 = vld [vmem:[#allocation10 + $0x30] sm:$0xf]
    %v543 = vld [vmem:[#allocation10 + $0x34] sm:$0xf]
    %v544 = vld [vmem:[#allocation10 + $0x38] sm:$0xf]
    %v545 = vld [vmem:[#allocation10 + $0x3c] sm:$0xf]
    %v546 = vld [vmem:[%s15] sm:$0x1]
    %v548 = vlaneseq
    %v549 = vshrl.u32 %v548, 7
    %v550 = vsub.s32 0, %v549
    %v551 = vrot.slane %v546, %v550
    %v569 = vunpack.c.l.b16 %v530
    %v570 = vunpack.c.l.b16 %v531
    %v571 = vunpack.c.l.b16 %v532
    %v572 = vunpack.c.l.b16 %v533
    %v573 = vunpack.c.l.b16 %v534
    %v574 = vunpack.c.l.b16 %v535
    %v575 = vunpack.c.l.b16 %v536
    %v576 = vunpack.c.l.b16 %v537
    %v577 = vunpack.c.l.b16 %v538
    %v578 = vunpack.c.l.b16 %v539
    %v579 = vunpack.c.l.b16 %v540
    %v580 = vunpack.c.l.b16 %v541
    %v581 = vunpack.c.l.b16 %v542
    %v582 = vunpack.c.l.b16 %v543
    %v583 = vunpack.c.l.b16 %v544
    %v584 = vunpack.c.l.b16 %v545
    %v585 = vpack.c.b16 %v570, %v569
    %v586 = vpack.c.b16 %v572, %v571
    %v587 = vpack.c.b16 %v574, %v573
    %v588 = vpack.c.b16 %v576, %v575
    %v589 = vpack.c.b16 %v578, %v577
    %v590 = vpack.c.b16 %v580, %v579
    %v591 = vpack.c.b16 %v582, %v581
    %v592 = vpack.c.b16 %v584, %v583
    %601 = vmatprep.subr.bf16.mxu0 0
    %602 = vmatpush1.bf16.msra.mxu0 %v592
    %603 = vmatprep.subr.bf16.mxu0 0
    %604 = vmatpush1.bf16.msra.mxu0 %v591
    %605 = vmatprep.subr.bf16.mxu0 0
    %606 = vmatpush1.bf16.msra.mxu0 %v590
    %607 = vmatprep.subr.bf16.mxu0 0
    %608 = vmatpush1.bf16.msra.mxu0 %v589
    %609 = vmatprep.subr.bf16.mxu0 0
    %610 = vmatpush1.bf16.msra.mxu0 %v588
    %611 = vmatprep.subr.bf16.mxu0 0
    %612 = vmatpush1.bf16.msra.mxu0 %v587
    %613 = vmatprep.subr.bf16.mxu0 0
    %614 = vmatpush1.bf16.msra.mxu0 %v586
    %615 = vmatprep.subr.bf16.mxu0 0
    %616 = vmatpush1.bf16.msra.mxu0 %v585
    %617 = vmatprep.subr.bf16.mxu0 0
    %618 = vmatpush2.bf16.msra.mxu0 0
    %619 = vmatprep.subr.bf16.mxu0 0
    %620 = vmatpush2.bf16.msra.mxu0 0
    %621 = vmatprep.subr.bf16.mxu0 0
    %622 = vmatpush2.bf16.msra.mxu0 0
    %623 = vmatprep.subr.bf16.mxu0 0
    %624 = vmatpush2.bf16.msra.mxu0 0
    %625 = vmatprep.subr.bf16.mxu0 0
    %626 = vmatpush2.bf16.msra.mxu0 0
    %627 = vmatprep.subr.bf16.mxu0 0
    %628 = vmatpush2.bf16.msra.mxu0 0
    %629 = vmatprep.subr.bf16.mxu0 0
    %630 = vmatpush2.bf16.msra.mxu0 0
    %631 = vmatprep.subr.bf16.mxu0 0
    %632 = vmatpush2.bf16.msra.mxu0 0
    %633 = vmatprep.mubr.bf16.mxu0 0
    %634 = vmatmul.mubr.bf16.gmra.mxu0 %v293
    %v635 = vpop.f32.mrf.mxu0
    %v636 = vadd.f32 %v551, %v635
    %v637 = vpop.f32.mrf.mxu0
    %v638 = vpop.f32.mrf.mxu0
    %v639 = vadd.f32 %v551, %v638
    %v640 = vpop.f32.mrf.mxu0
    %641 = vdwg.mxu0
    %v642 = vpack.c.bf16 %v639, %v636
    %v644 = vunpack.c.l.b16 %v642
    %v645 = vunpack.c.h.b16 %v642
    %v646 = vpack.c.b16 %v644, %v644
    %v647 = vpack.c.b16 %v645, %v645
    %vm648 = vcmask 261120
    %v650 = vsel %vm648, %v410, 0
    %v653 = vsel %vm648, %v528, 0
    %655 = vmatprep.subr.bf16.mxu0 0
    %656 = vmatpush1.bf16.xpose.msra.mxu0 0
    %657 = vmatprep.subr.bf16.mxu0 0
    %658 = vmatpush1.bf16.xpose.msra.mxu0 0
    %659 = vmatprep.subr.bf16.mxu0 0
    %660 = vmatpush1.bf16.xpose.msra.mxu0 0
    %661 = vmatprep.subr.bf16.mxu0 0
    %662 = vmatpush1.bf16.xpose.msra.mxu0 0
    %663 = vmatprep.subr.bf16.mxu0 0
    %664 = vmatpush1.bf16.xpose.msra.mxu0 0
    %665 = vmatprep.subr.bf16.mxu0 0
    %666 = vmatpush1.bf16.xpose.msra.mxu0 0
    %667 = vmatprep.subr.bf16.mxu0 0
    %668 = vmatpush1.bf16.xpose.msra.mxu0 0
    %669 = vmatprep.subr.bf16.mxu0 0
    %670 = vmatpush1.bf16.xpose.msra.mxu0 %v653
    %671 = vmatprep.subr.bf16.mxu0 0
    %672 = vmatpush2.bf16.xpose.msra.mxu0 0
    %673 = vmatprep.subr.bf16.mxu0 0
    %674 = vmatpush2.bf16.xpose.msra.mxu0 0
    %675 = vmatprep.subr.bf16.mxu0 0
    %676 = vmatpush2.bf16.xpose.msra.mxu0 0
    %677 = vmatprep.subr.bf16.mxu0 0
    %678 = vmatpush2.bf16.xpose.msra.mxu0 0
    %679 = vmatprep.subr.bf16.mxu0 0
    %680 = vmatpush2.bf16.xpose.msra.mxu0 0
    %681 = vmatprep.subr.bf16.mxu0 0
    %682 = vmatpush2.bf16.xpose.msra.mxu0 0
    %683 = vmatprep.subr.bf16.mxu0 0
    %684 = vmatpush2.bf16.xpose.msra.mxu0 0
    %685 = vmatprep.subr.bf16.mxu0 0
    %686 = vmatpush2.bf16.xpose.msra.mxu0 0
    %687 = vmatprep.mubr.bf16.mxu0 0
    %688 = vmatmul.mubr.bf16.gmra.mxu0 %v650
    %v689 = vpop.f32.mrf.mxu0
    %v690 = vadd.f32 0.0, %v689
    %v691 = vpop.f32.mrf.mxu0
    %v692 = vpop.f32.mrf.mxu0
    %v693 = vpop.f32.mrf.mxu0
    %694 = vdwg.mxu0
    %v696 = vsel %vm648, %v411, 0
    %v699 = vsel %vm648, %v529, 0
    %701 = vmatprep.subr.bf16.mxu0 0
    %702 = vmatpush1.bf16.xpose.msra.mxu0 0
    %703 = vmatprep.subr.bf16.mxu0 0
    %704 = vmatpush1.bf16.xpose.msra.mxu0 0
    %705 = vmatprep.subr.bf16.mxu0 0
    %706 = vmatpush1.bf16.xpose.msra.mxu0 0
    %707 = vmatprep.subr.bf16.mxu0 0
    %708 = vmatpush1.bf16.xpose.msra.mxu0 0
    %709 = vmatprep.subr.bf16.mxu0 0
    %710 = vmatpush1.bf16.xpose.msra.mxu0 0
    %711 = vmatprep.subr.bf16.mxu0 0
    %712 = vmatpush1.bf16.xpose.msra.mxu0 0
    %713 = vmatprep.subr.bf16.mxu0 0
    %714 = vmatpush1.bf16.xpose.msra.mxu0 0
    %715 = vmatprep.subr.bf16.mxu0 0
    %716 = vmatpush1.bf16.xpose.msra.mxu0 %v699
    %717 = vmatprep.subr.bf16.mxu0 0
    %718 = vmatpush2.bf16.xpose.msra.mxu0 0
    %719 = vmatprep.subr.bf16.mxu0 0
    %720 = vmatpush2.bf16.xpose.msra.mxu0 0
    %721 = vmatprep.subr.bf16.mxu0 0
    %722 = vmatpush2.bf16.xpose.msra.mxu0 0
    %723 = vmatprep.subr.bf16.mxu0 0
    %724 = vmatpush2.bf16.xpose.msra.mxu0 0
    %725 = vmatprep.subr.bf16.mxu0 0
    %726 = vmatpush2.bf16.xpose.msra.mxu0 0
    %727 = vmatprep.subr.bf16.mxu0 0
    %728 = vmatpush2.bf16.xpose.msra.mxu0 0
    %729 = vmatprep.subr.bf16.mxu0 0
    %730 = vmatpush2.bf16.xpose.msra.mxu0 0
    %731 = vmatprep.subr.bf16.mxu0 0
    %732 = vmatpush2.bf16.xpose.msra.mxu0 0
    %733 = vmatprep.mubr.bf16.mxu0 0
    %734 = vmatmul.mubr.bf16.gmra.mxu0 %v696
    %v735 = vpop.f32.mrf.mxu0
    %v736 = vadd.f32 0.0, %v735
    %v737 = vpop.f32.mrf.mxu0
    %v738 = vpop.f32.mrf.mxu0
    %v739 = vpop.f32.mrf.mxu0
    %740 = vdwg.mxu0
    %741 = vrot.lane.b32.xlu0 %v410, 96
    %v742 = vpop.permute.xlu0 %741
    %743 = vrot.lane.b32.xlu0 %v528, 96
    %v744 = vpop.permute.xlu0 %743
    %v746 = vsel %vm648, %v742, 0
    %v749 = vsel %vm648, %v744, 0
    %751 = vmatprep.subr.bf16.mxu0 0
    %752 = vmatpush1.bf16.xpose.msra.mxu0 0
    %753 = vmatprep.subr.bf16.mxu0 0
    %754 = vmatpush1.bf16.xpose.msra.mxu0 0
    %755 = vmatprep.subr.bf16.mxu0 0
    %756 = vmatpush1.bf16.xpose.msra.mxu0 0
    %757 = vmatprep.subr.bf16.mxu0 0
    %758 = vmatpush1.bf16.xpose.msra.mxu0 0
    %759 = vmatprep.subr.bf16.mxu0 0
    %760 = vmatpush1.bf16.xpose.msra.mxu0 0
    %761 = vmatprep.subr.bf16.mxu0 0
    %762 = vmatpush1.bf16.xpose.msra.mxu0 0
    %763 = vmatprep.subr.bf16.mxu0 0
    %764 = vmatpush1.bf16.xpose.msra.mxu0 0
    %765 = vmatprep.subr.bf16.mxu0 0
    %766 = vmatpush1.bf16.xpose.msra.mxu0 %v749
    %767 = vmatprep.subr.bf16.mxu0 0
    %768 = vmatpush2.bf16.xpose.msra.mxu0 0
    %769 = vmatprep.subr.bf16.mxu0 0
    %770 = vmatpush2.bf16.xpose.msra.mxu0 0
    %771 = vmatprep.subr.bf16.mxu0 0
    %772 = vmatpush2.bf16.xpose.msra.mxu0 0
    %773 = vmatprep.subr.bf16.mxu0 0
    %774 = vmatpush2.bf16.xpose.msra.mxu0 0
    %775 = vmatprep.subr.bf16.mxu0 0
    %776 = vmatpush2.bf16.xpose.msra.mxu0 0
    %777 = vmatprep.subr.bf16.mxu0 0
    %778 = vmatpush2.bf16.xpose.msra.mxu0 0
    %779 = vmatprep.subr.bf16.mxu0 0
    %780 = vmatpush2.bf16.xpose.msra.mxu0 0
    %781 = vmatprep.subr.bf16.mxu0 0
    %782 = vmatpush2.bf16.xpose.msra.mxu0 0
    %783 = vmatprep.mubr.bf16.mxu0 0
    %784 = vmatmul.mubr.bf16.gmra.mxu0 %v746
    %v785 = vpop.f32.mrf.mxu0
    %v786 = vadd.f32 0.0, %v785
    %v787 = vpop.f32.mrf.mxu0
    %v788 = vpop.f32.mrf.mxu0
    %v789 = vpop.f32.mrf.mxu0
    %790 = vdwg.mxu0
    %791 = vrot.lane.b32.xlu0 %v411, 96
    %v792 = vpop.permute.xlu0 %791
    %793 = vrot.lane.b32.xlu0 %v529, 96
    %v794 = vpop.permute.xlu0 %793
    %v796 = vsel %vm648, %v792, 0
    %v799 = vsel %vm648, %v794, 0
    %801 = vmatprep.subr.bf16.mxu0 0
    %802 = vmatpush1.bf16.xpose.msra.mxu0 0
    %803 = vmatprep.subr.bf16.mxu0 0
    %804 = vmatpush1.bf16.xpose.msra.mxu0 0
    %805 = vmatprep.subr.bf16.mxu0 0
    %806 = vmatpush1.bf16.xpose.msra.mxu0 0
    %807 = vmatprep.subr.bf16.mxu0 0
    %808 = vmatpush1.bf16.xpose.msra.mxu0 0
    %809 = vmatprep.subr.bf16.mxu0 0
    %810 = vmatpush1.bf16.xpose.msra.mxu0 0
    %811 = vmatprep.subr.bf16.mxu0 0
    %812 = vmatpush1.bf16.xpose.msra.mxu0 0
    %813 = vmatprep.subr.bf16.mxu0 0
    %814 = vmatpush1.bf16.xpose.msra.mxu0 0
    %815 = vmatprep.subr.bf16.mxu0 0
    %816 = vmatpush1.bf16.xpose.msra.mxu0 %v799
    %817 = vmatprep.subr.bf16.mxu0 0
    %818 = vmatpush2.bf16.xpose.msra.mxu0 0
    %819 = vmatprep.subr.bf16.mxu0 0
    %820 = vmatpush2.bf16.xpose.msra.mxu0 0
    %821 = vmatprep.subr.bf16.mxu0 0
    %822 = vmatpush2.bf16.xpose.msra.mxu0 0
    %823 = vmatprep.subr.bf16.mxu0 0
    %824 = vmatpush2.bf16.xpose.msra.mxu0 0
    %825 = vmatprep.subr.bf16.mxu0 0
    %826 = vmatpush2.bf16.xpose.msra.mxu0 0
    %827 = vmatprep.subr.bf16.mxu0 0
    %828 = vmatpush2.bf16.xpose.msra.mxu0 0
    %829 = vmatprep.subr.bf16.mxu0 0
    %830 = vmatpush2.bf16.xpose.msra.mxu0 0
    %831 = vmatprep.subr.bf16.mxu0 0
    %832 = vmatpush2.bf16.xpose.msra.mxu0 0
    %833 = vmatprep.mubr.bf16.mxu0 0
    %834 = vmatmul.mubr.bf16.gmra.mxu0 %v796
    %v835 = vpop.f32.mrf.mxu0
    %v836 = vadd.f32 0.0, %v835
    %v837 = vpop.f32.mrf.mxu0
    %v838 = vpop.f32.mrf.mxu0
    %v839 = vpop.f32.mrf.mxu0
    %840 = vdwg.mxu0
    %841 = vrot.lane.b32.xlu0 %v410, 64
    %v842 = vpop.permute.xlu0 %841
    %843 = vrot.lane.b32.xlu0 %v528, 64
    %v844 = vpop.permute.xlu0 %843
    %v846 = vsel %vm648, %v842, 0
    %v849 = vsel %vm648, %v844, 0
    %851 = vmatprep.subr.bf16.mxu0 0
    %852 = vmatpush1.bf16.xpose.msra.mxu0 0
    %853 = vmatprep.subr.bf16.mxu0 0
    %854 = vmatpush1.bf16.xpose.msra.mxu0 0
    %855 = vmatprep.subr.bf16.mxu0 0
    %856 = vmatpush1.bf16.xpose.msra.mxu0 0
    %857 = vmatprep.subr.bf16.mxu0 0
    %858 = vmatpush1.bf16.xpose.msra.mxu0 0
    %859 = vmatprep.subr.bf16.mxu0 0
    %860 = vmatpush1.bf16.xpose.msra.mxu0 0
    %861 = vmatprep.subr.bf16.mxu0 0
    %862 = vmatpush1.bf16.xpose.msra.mxu0 0
    %863 = vmatprep.subr.bf16.mxu0 0
    %864 = vmatpush1.bf16.xpose.msra.mxu0 0
    %865 = vmatprep.subr.bf16.mxu0 0
    %866 = vmatpush1.bf16.xpose.msra.mxu0 %v849
    %867 = vmatprep.subr.bf16.mxu0 0
    %868 = vmatpush2.bf16.xpose.msra.mxu0 0
    %869 = vmatprep.subr.bf16.mxu0 0
    %870 = vmatpush2.bf16.xpose.msra.mxu0 0
    %871 = vmatprep.subr.bf16.mxu0 0
    %872 = vmatpush2.bf16.xpose.msra.mxu0 0
    %873 = vmatprep.subr.bf16.mxu0 0
    %874 = vmatpush2.bf16.xpose.msra.mxu0 0
    %875 = vmatprep.subr.bf16.mxu0 0
    %876 = vmatpush2.bf16.xpose.msra.mxu0 0
    %877 = vmatprep.subr.bf16.mxu0 0
    %878 = vmatpush2.bf16.xpose.msra.mxu0 0
    %879 = vmatprep.subr.bf16.mxu0 0
    %880 = vmatpush2.bf16.xpose.msra.mxu0 0
    %881 = vmatprep.subr.bf16.mxu0 0
    %882 = vmatpush2.bf16.xpose.msra.mxu0 0
    %883 = vmatprep.mubr.bf16.mxu0 0
    %884 = vmatmul.mubr.bf16.gmra.mxu0 %v846
    %v885 = vpop.f32.mrf.mxu0
    %v886 = vadd.f32 0.0, %v885
    %v887 = vpop.f32.mrf.mxu0
    %v888 = vpop.f32.mrf.mxu0
    %v889 = vpop.f32.mrf.mxu0
    %890 = vdwg.mxu0
    %891 = vrot.lane.b32.xlu0 %v411, 64
    %v892 = vpop.permute.xlu0 %891
    %893 = vrot.lane.b32.xlu0 %v529, 64
    %v894 = vpop.permute.xlu0 %893
    %v896 = vsel %vm648, %v892, 0
    %v899 = vsel %vm648, %v894, 0
    %901 = vmatprep.subr.bf16.mxu0 0
    %902 = vmatpush1.bf16.xpose.msra.mxu0 0
    %903 = vmatprep.subr.bf16.mxu0 0
    %904 = vmatpush1.bf16.xpose.msra.mxu0 0
    %905 = vmatprep.subr.bf16.mxu0 0
    %906 = vmatpush1.bf16.xpose.msra.mxu0 0
    %907 = vmatprep.subr.bf16.mxu0 0
    %908 = vmatpush1.bf16.xpose.msra.mxu0 0
    %909 = vmatprep.subr.bf16.mxu0 0
    %910 = vmatpush1.bf16.xpose.msra.mxu0 0
    %911 = vmatprep.subr.bf16.mxu0 0
    %912 = vmatpush1.bf16.xpose.msra.mxu0 0
    %913 = vmatprep.subr.bf16.mxu0 0
    %914 = vmatpush1.bf16.xpose.msra.mxu0 0
    %915 = vmatprep.subr.bf16.mxu0 0
    %916 = vmatpush1.bf16.xpose.msra.mxu0 %v899
    %917 = vmatprep.subr.bf16.mxu0 0
    %918 = vmatpush2.bf16.xpose.msra.mxu0 0
    %919 = vmatprep.subr.bf16.mxu0 0
    %920 = vmatpush2.bf16.xpose.msra.mxu0 0
    %921 = vmatprep.subr.bf16.mxu0 0
    %922 = vmatpush2.bf16.xpose.msra.mxu0 0
    %923 = vmatprep.subr.bf16.mxu0 0
    %924 = vmatpush2.bf16.xpose.msra.mxu0 0
    %925 = vmatprep.subr.bf16.mxu0 0
    %926 = vmatpush2.bf16.xpose.msra.mxu0 0
    %927 = vmatprep.subr.bf16.mxu0 0
    %928 = vmatpush2.bf16.xpose.msra.mxu0 0
    %929 = vmatprep.subr.bf16.mxu0 0
    %930 = vmatpush2.bf16.xpose.msra.mxu0 0
    %931 = vmatprep.subr.bf16.mxu0 0
    %932 = vmatpush2.bf16.xpose.msra.mxu0 0
    %933 = vmatprep.mubr.bf16.mxu0 0
    %934 = vmatmul.mubr.bf16.gmra.mxu0 %v896
    %v935 = vpop.f32.mrf.mxu0
    %v936 = vadd.f32 0.0, %v935
    %v937 = vpop.f32.mrf.mxu0
    %v938 = vpop.f32.mrf.mxu0
    %v939 = vpop.f32.mrf.mxu0
    %940 = vdwg.mxu0
    %941 = vrot.lane.b32.xlu0 %v410, 32
    %v942 = vpop.permute.xlu0 %941
    %943 = vrot.lane.b32.xlu0 %v528, 32
    %v944 = vpop.permute.xlu0 %943
    %v946 = vsel %vm648, %v942, 0
    %v949 = vsel %vm648, %v944, 0
    %951 = vmatprep.subr.bf16.mxu0 0
    %952 = vmatpush1.bf16.xpose.msra.mxu0 0
    %953 = vmatprep.subr.bf16.mxu0 0
    %954 = vmatpush1.bf16.xpose.msra.mxu0 0
    %955 = vmatprep.subr.bf16.mxu0 0
    %956 = vmatpush1.bf16.xpose.msra.mxu0 0
    %957 = vmatprep.subr.bf16.mxu0 0
    %958 = vmatpush1.bf16.xpose.msra.mxu0 0
    %959 = vmatprep.subr.bf16.mxu0 0
    %960 = vmatpush1.bf16.xpose.msra.mxu0 0
    %961 = vmatprep.subr.bf16.mxu0 0
    %962 = vmatpush1.bf16.xpose.msra.mxu0 0
    %963 = vmatprep.subr.bf16.mxu0 0
    %964 = vmatpush1.bf16.xpose.msra.mxu0 0
    %965 = vmatprep.subr.bf16.mxu0 0
    %966 = vmatpush1.bf16.xpose.msra.mxu0 %v949
    %967 = vmatprep.subr.bf16.mxu0 0
    %968 = vmatpush2.bf16.xpose.msra.mxu0 0
    %969 = vmatprep.subr.bf16.mxu0 0
    %970 = vmatpush2.bf16.xpose.msra.mxu0 0
    %971 = vmatprep.subr.bf16.mxu0 0
    %972 = vmatpush2.bf16.xpose.msra.mxu0 0
    %973 = vmatprep.subr.bf16.mxu0 0
    %974 = vmatpush2.bf16.xpose.msra.mxu0 0
    %975 = vmatprep.subr.bf16.mxu0 0
    %976 = vmatpush2.bf16.xpose.msra.mxu0 0
    %977 = vmatprep.subr.bf16.mxu0 0
    %978 = vmatpush2.bf16.xpose.msra.mxu0 0
    %979 = vmatprep.subr.bf16.mxu0 0
    %980 = vmatpush2.bf16.xpose.msra.mxu0 0
    %981 = vmatprep.subr.bf16.mxu0 0
    %982 = vmatpush2.bf16.xpose.msra.mxu0 0
    %983 = vmatprep.mubr.bf16.mxu0 0
    %984 = vmatmul.mubr.bf16.gmra.mxu0 %v946
    %v985 = vpop.f32.mrf.mxu0
    %v986 = vadd.f32 0.0, %v985
    %v987 = vpop.f32.mrf.mxu0
    %v988 = vpop.f32.mrf.mxu0
    %v989 = vpop.f32.mrf.mxu0
    %990 = vdwg.mxu0
    %991 = vrot.lane.b32.xlu0 %v411, 32
    %v992 = vpop.permute.xlu0 %991
    %993 = vrot.lane.b32.xlu0 %v529, 32
    %v994 = vpop.permute.xlu0 %993
    %v996 = vsel %vm648, %v992, 0
    %v999 = vsel %vm648, %v994, 0
    %1001 = vmatprep.subr.bf16.mxu0 0
    %1002 = vmatpush1.bf16.xpose.msra.mxu0 0
    %1003 = vmatprep.subr.bf16.mxu0 0
    %1004 = vmatpush1.bf16.xpose.msra.mxu0 0
    %1005 = vmatprep.subr.bf16.mxu0 0
    %1006 = vmatpush1.bf16.xpose.msra.mxu0 0
    %1007 = vmatprep.subr.bf16.mxu0 0
    %1008 = vmatpush1.bf16.xpose.msra.mxu0 0
    %1009 = vmatprep.subr.bf16.mxu0 0
    %1010 = vmatpush1.bf16.xpose.msra.mxu0 0
    %1011 = vmatprep.subr.bf16.mxu0 0
    %1012 = vmatpush1.bf16.xpose.msra.mxu0 0
    %1013 = vmatprep.subr.bf16.mxu0 0
    %1014 = vmatpush1.bf16.xpose.msra.mxu0 0
    %1015 = vmatprep.subr.bf16.mxu0 0
    %1016 = vmatpush1.bf16.xpose.msra.mxu0 %v999
    %1017 = vmatprep.subr.bf16.mxu0 0
    %1018 = vmatpush2.bf16.xpose.msra.mxu0 0
    %1019 = vmatprep.subr.bf16.mxu0 0
    %1020 = vmatpush2.bf16.xpose.msra.mxu0 0
    %1021 = vmatprep.subr.bf16.mxu0 0
    %1022 = vmatpush2.bf16.xpose.msra.mxu0 0
    %1023 = vmatprep.subr.bf16.mxu0 0
    %1024 = vmatpush2.bf16.xpose.msra.mxu0 0
    %1025 = vmatprep.subr.bf16.mxu0 0
    %1026 = vmatpush2.bf16.xpose.msra.mxu0 0
    %1027 = vmatprep.subr.bf16.mxu0 0
    %1028 = vmatpush2.bf16.xpose.msra.mxu0 0
    %1029 = vmatprep.subr.bf16.mxu0 0
    %1030 = vmatpush2.bf16.xpose.msra.mxu0 0
    %1031 = vmatprep.subr.bf16.mxu0 0
    %1032 = vmatpush2.bf16.xpose.msra.mxu0 0
    %1033 = vmatprep.mubr.bf16.mxu0 0
    %1034 = vmatmul.mubr.bf16.gmra.mxu0 %v996
    %v1035 = vpop.f32.mrf.mxu0
    %v1036 = vadd.f32 0.0, %v1035
    %v1037 = vpop.f32.mrf.mxu0
    %v1038 = vpop.f32.mrf.mxu0
    %v1039 = vpop.f32.mrf.mxu0
    %1040 = vdwg.mxu0
    %vm1041 = vcmask 64512
    %v1042 = vsel %vm1041, %v690, -inf
    %1043 = vmax.xlane.f32.xlu0 %v1042
    %v1044 = vpop.xlane.xlu0 %1043
    %v1045 = vsel %vm1041, %v736, -inf
    %1046 = vmax.xlane.f32.xlu0 %v1045
    %v1047 = vpop.xlane.xlu0 %1046
    %v1048 = vsel %vm1041, %v786, -inf
    %1049 = vmax.xlane.f32.xlu0 %v1048
    %v1050 = vpop.xlane.xlu0 %1049
    %v1051 = vsel %vm1041, %v836, -inf
    %1052 = vmax.xlane.f32.xlu0 %v1051
    %v1053 = vpop.xlane.xlu0 %1052
    %v1054 = vsel %vm1041, %v886, -inf
    %1055 = vmax.xlane.f32.xlu0 %v1054
    %v1056 = vpop.xlane.xlu0 %1055
    %v1057 = vsel %vm1041, %v936, -inf
    %1058 = vmax.xlane.f32.xlu0 %v1057
    %v1059 = vpop.xlane.xlu0 %1058
    %v1060 = vsel %vm1041, %v986, -inf
    %1061 = vmax.xlane.f32.xlu0 %v1060
    %v1062 = vpop.xlane.xlu0 %1061
    %v1063 = vsel %vm1041, %v1036, -inf
    %1064 = vmax.xlane.f32.xlu0 %v1063
    %v1065 = vpop.xlane.xlu0 %1064
    %v1066 = vsub.f32 %v690, %v1044
    %v1067 = vsub.f32 %v736, %v1047
    %v1068 = vsub.f32 %v786, %v1050
    %v1069 = vsub.f32 %v836, %v1053
    %v1070 = vsub.f32 %v886, %v1056
    %v1071 = vsub.f32 %v936, %v1059
    %v1072 = vsub.f32 %v986, %v1062
    %v1073 = vsub.f32 %v1036, %v1065
    %v1074 = vmul.f32 %v1066, 1.442695
    %v1075 = vpow.pop %v1074
    %v1076 = vmul.f32 %v1067, 1.442695
    %v1077 = vpow.pop %v1076
    %v1078 = vmul.f32 %v1068, 1.442695
    %v1079 = vpow.pop %v1078
    %v1080 = vmul.f32 %v1069, 1.442695
    %v1081 = vpow.pop %v1080
    %v1082 = vmul.f32 %v1070, 1.442695
    %v1083 = vpow.pop %v1082
    %v1084 = vmul.f32 %v1071, 1.442695
    %v1085 = vpow.pop %v1084
    %v1086 = vmul.f32 %v1072, 1.442695
    %v1087 = vpow.pop %v1086
    %v1088 = vmul.f32 %v1073, 1.442695
    %v1089 = vpow.pop %v1088
    %v1090 = vsel %vm1041, %v1075, 0.0
    %1091 = vadd.xlane.f32.xlu0 %v1090
    %v1092 = vpop.xlane.xlu0 %1091
    %v1093 = vsel %vm1041, %v1077, 0.0
    %1094 = vadd.xlane.f32.xlu0 %v1093
    %v1095 = vpop.xlane.xlu0 %1094
    %v1096 = vsel %vm1041, %v1079, 0.0
    %1097 = vadd.xlane.f32.xlu0 %v1096
    %v1098 = vpop.xlane.xlu0 %1097
    %v1099 = vsel %vm1041, %v1081, 0.0
    %1100 = vadd.xlane.f32.xlu0 %v1099
    %v1101 = vpop.xlane.xlu0 %1100
    %v1102 = vsel %vm1041, %v1083, 0.0
    %1103 = vadd.xlane.f32.xlu0 %v1102
    %v1104 = vpop.xlane.xlu0 %1103
    %v1105 = vsel %vm1041, %v1085, 0.0
    %1106 = vadd.xlane.f32.xlu0 %v1105
    %v1107 = vpop.xlane.xlu0 %1106
    %v1108 = vsel %vm1041, %v1087, 0.0
    %1109 = vadd.xlane.f32.xlu0 %v1108
    %v1110 = vpop.xlane.xlu0 %1109
    %v1111 = vsel %vm1041, %v1089, 0.0
    %1112 = vadd.xlane.f32.xlu0 %v1111
    %v1113 = vpop.xlane.xlu0 %1112
    %v1114 = vrcp.pop %v1092
    %v1115 = vrcp.pop %v1095
    %v1116 = vrcp.pop %v1098
    %v1117 = vrcp.pop %v1101
    %v1118 = vrcp.pop %v1104
    %v1119 = vrcp.pop %v1107
    %v1120 = vrcp.pop %v1110
    %v1121 = vrcp.pop %v1113
    %v1122 = vmul.f32 %v1075, %v1114
    %v1123 = vmul.f32 %v1077, %v1115
    %v1124 = vmul.f32 %v1079, %v1116
    %v1125 = vmul.f32 %v1081, %v1117
    %v1126 = vmul.f32 %v1083, %v1118
    %v1127 = vmul.f32 %v1085, %v1119
    %v1128 = vmul.f32 %v1087, %v1120
    %v1129 = vmul.f32 %v1089, %v1121
    %v1130 = vpack.c.bf16 %v1122, %v1122
    %v1131 = vpack.c.bf16 %v1123, %v1123
    %v1132 = vpack.c.bf16 %v1124, %v1124
    %v1133 = vpack.c.bf16 %v1125, %v1125
    %v1134 = vpack.c.bf16 %v1126, %v1126
    %v1135 = vpack.c.bf16 %v1127, %v1127
    %v1136 = vpack.c.bf16 %v1128, %v1128
    %v1137 = vpack.c.bf16 %v1129, %v1129
    %v1139 = vsel %vm1041, %v1130, 0
    %vm1141 = vcmask 1043456
    %v1143 = vsel %vm1141, %v646, 0
    %1145 = vmatprep.subr.bf16.mxu0 0
    %1146 = vmatpush1.bf16.msra.mxu0 0
    %1147 = vmatprep.subr.bf16.mxu0 0
    %1148 = vmatpush1.bf16.msra.mxu0 0
    %1149 = vmatprep.subr.bf16.mxu0 0
    %1150 = vmatpush1.bf16.msra.mxu0 0
    %1151 = vmatprep.subr.bf16.mxu0 0
    %1152 = vmatpush1.bf16.msra.mxu0 0
    %1153 = vmatprep.subr.bf16.mxu0 0
    %1154 = vmatpush1.bf16.msra.mxu0 0
    %1155 = vmatprep.subr.bf16.mxu0 0
    %1156 = vmatpush1.bf16.msra.mxu0 0
    %1157 = vmatprep.subr.bf16.mxu0 0
    %1158 = vmatpush1.bf16.msra.mxu0 0
    %1159 = vmatprep.subr.bf16.mxu0 0
    %1160 = vmatpush1.bf16.msra.mxu0 %v1143
    %1161 = vmatprep.subr.bf16.mxu0 0
    %1162 = vmatpush2.bf16.msra.mxu0 0
    %1163 = vmatprep.subr.bf16.mxu0 0
    %1164 = vmatpush2.bf16.msra.mxu0 0
    %1165 = vmatprep.subr.bf16.mxu0 0
    %1166 = vmatpush2.bf16.msra.mxu0 0
    %1167 = vmatprep.subr.bf16.mxu0 0
    %1168 = vmatpush2.bf16.msra.mxu0 0
    %1169 = vmatprep.subr.bf16.mxu0 0
    %1170 = vmatpush2.bf16.msra.mxu0 0
    %1171 = vmatprep.subr.bf16.mxu0 0
    %1172 = vmatpush2.bf16.msra.mxu0 0
    %1173 = vmatprep.subr.bf16.mxu0 0
    %1174 = vmatpush2.bf16.msra.mxu0 0
    %1175 = vmatprep.subr.bf16.mxu0 0
    %1176 = vmatpush2.bf16.msra.mxu0 0
    %1177 = vmatprep.mubr.bf16.mxu0 0
    %1178 = vmatmul.mubr.bf16.gmra.mxu0 %v1139
    %v1179 = vpop.f32.mrf.mxu0
    %v1180 = vadd.f32 0.0, %v1179
    %v1181 = vpop.f32.mrf.mxu0
    %v1182 = vpop.f32.mrf.mxu0
    %v1183 = vpop.f32.mrf.mxu0
    %1184 = vdwg.mxu0
    %v1186 = vsel %vm1041, %v1131, 0
    %v1189 = vsel %vm1141, %v647, 0
    %1191 = vmatprep.subr.bf16.mxu0 0
    %1192 = vmatpush1.bf16.msra.mxu0 0
    %1193 = vmatprep.subr.bf16.mxu0 0
    %1194 = vmatpush1.bf16.msra.mxu0 0
    %1195 = vmatprep.subr.bf16.mxu0 0
    %1196 = vmatpush1.bf16.msra.mxu0 0
    %1197 = vmatprep.subr.bf16.mxu0 0
    %1198 = vmatpush1.bf16.msra.mxu0 0
    %1199 = vmatprep.subr.bf16.mxu0 0
    %1200 = vmatpush1.bf16.msra.mxu0 0
    %1201 = vmatprep.subr.bf16.mxu0 0
    %1202 = vmatpush1.bf16.msra.mxu0 0
    %1203 = vmatprep.subr.bf16.mxu0 0
    %1204 = vmatpush1.bf16.msra.mxu0 0
    %1205 = vmatprep.subr.bf16.mxu0 0
    %1206 = vmatpush1.bf16.msra.mxu0 %v1189
    %1207 = vmatprep.subr.bf16.mxu0 0
    %1208 = vmatpush2.bf16.msra.mxu0 0
    %1209 = vmatprep.subr.bf16.mxu0 0
    %1210 = vmatpush2.bf16.msra.mxu0 0
    %1211 = vmatprep.subr.bf16.mxu0 0
    %1212 = vmatpush2.bf16.msra.mxu0 0
    %1213 = vmatprep.subr.bf16.mxu0 0
    %1214 = vmatpush2.bf16.msra.mxu0 0
    %1215 = vmatprep.subr.bf16.mxu0 0
    %1216 = vmatpush2.bf16.msra.mxu0 0
    %1217 = vmatprep.subr.bf16.mxu0 0
    %1218 = vmatpush2.bf16.msra.mxu0 0
    %1219 = vmatprep.subr.bf16.mxu0 0
    %1220 = vmatpush2.bf16.msra.mxu0 0
    %1221 = vmatprep.subr.bf16.mxu0 0
    %1222 = vmatpush2.bf16.msra.mxu0 0
    %1223 = vmatprep.mubr.bf16.mxu0 0
    %1224 = vmatmul.mubr.bf16.gmra.mxu0 %v1186
    %v1225 = vpop.f32.mrf.mxu0
    %v1226 = vadd.f32 0.0, %v1225
    %v1227 = vpop.f32.mrf.mxu0
    %v1228 = vpop.f32.mrf.mxu0
    %v1229 = vpop.f32.mrf.mxu0
    %1230 = vdwg.mxu0
    %v1231 = vpack.c.bf16 %v1226, %v1180
    %v1232 = vld [vmem:[#allocation11] sm:$0xf]
    %v1233 = vld [vmem:[#allocation11 + $0x4] sm:$0xf]
    %v1234 = vld [vmem:[#allocation11 + $0x8] sm:$0xf]
    %v1235 = vld [vmem:[#allocation11 + $0xc] sm:$0xf]
    %1236 = vrot.lane.b32.xlu0 %v646, 96
    %v1237 = vpop.permute.xlu0 %1236
    %v1239 = vsel %vm1041, %v1132, 0
    %v1242 = vsel %vm1141, %v1237, 0
    %1244 = vmatprep.subr.bf16.mxu0 0
    %1245 = vmatpush1.bf16.msra.mxu0 0
    %1246 = vmatprep.subr.bf16.mxu0 0
    %1247 = vmatpush1.bf16.msra.mxu0 0
    %1248 = vmatprep.subr.bf16.mxu0 0
    %1249 = vmatpush1.bf16.msra.mxu0 0
    %1250 = vmatprep.subr.bf16.mxu0 0
    %1251 = vmatpush1.bf16.msra.mxu0 0
    %1252 = vmatprep.subr.bf16.mxu0 0
    %1253 = vmatpush1.bf16.msra.mxu0 0
    %1254 = vmatprep.subr.bf16.mxu0 0
    %1255 = vmatpush1.bf16.msra.mxu0 0
    %1256 = vmatprep.subr.bf16.mxu0 0
    %1257 = vmatpush1.bf16.msra.mxu0 0
    %1258 = vmatprep.subr.bf16.mxu0 0
    %1259 = vmatpush1.bf16.msra.mxu0 %v1242
    %1260 = vmatprep.subr.bf16.mxu0 0
    %1261 = vmatpush2.bf16.msra.mxu0 0
    %1262 = vmatprep.subr.bf16.mxu0 0
    %1263 = vmatpush2.bf16.msra.mxu0 0
    %1264 = vmatprep.subr.bf16.mxu0 0
    %1265 = vmatpush2.bf16.msra.mxu0 0
    %1266 = vmatprep.subr.bf16.mxu0 0
    %1267 = vmatpush2.bf16.msra.mxu0 0
    %1268 = vmatprep.subr.bf16.mxu0 0
    %1269 = vmatpush2.bf16.msra.mxu0 0
    %1270 = vmatprep.subr.bf16.mxu0 0
    %1271 = vmatpush2.bf16.msra.mxu0 0
    %1272 = vmatprep.subr.bf16.mxu0 0
    %1273 = vmatpush2.bf16.msra.mxu0 0
    %1274 = vmatprep.subr.bf16.mxu0 0
    %1275 = vmatpush2.bf16.msra.mxu0 0
    %1276 = vmatprep.mubr.bf16.mxu0 0
    %1277 = vmatmul.mubr.bf16.gmra.mxu0 %v1239
    %v1278 = vpop.f32.mrf.mxu0
    %v1279 = vadd.f32 0.0, %v1278
    %v1280 = vpop.f32.mrf.mxu0
    %v1281 = vpop.f32.mrf.mxu0
    %v1282 = vpop.f32.mrf.mxu0
    %1283 = vdwg.mxu0
    %1284 = vrot.lane.b32.xlu0 %v647, 96
    %v1285 = vpop.permute.xlu0 %1284
    %v1287 = vsel %vm1041, %v1133, 0
    %v1290 = vsel %vm1141, %v1285, 0
    %1292 = vmatprep.subr.bf16.mxu0 0
    %1293 = vmatpush1.bf16.msra.mxu0 0
    %1294 = vmatprep.subr.bf16.mxu0 0
    %1295 = vmatpush1.bf16.msra.mxu0 0
    %1296 = vmatprep.subr.bf16.mxu0 0
    %1297 = vmatpush1.bf16.msra.mxu0 0
    %1298 = vmatprep.subr.bf16.mxu0 0
    %1299 = vmatpush1.bf16.msra.mxu0 0
    %1300 = vmatprep.subr.bf16.mxu0 0
    %1301 = vmatpush1.bf16.msra.mxu0 0
    %1302 = vmatprep.subr.bf16.mxu0 0
    %1303 = vmatpush1.bf16.msra.mxu0 0
    %1304 = vmatprep.subr.bf16.mxu0 0
    %1305 = vmatpush1.bf16.msra.mxu0 0
    %1306 = vmatprep.subr.bf16.mxu0 0
    %1307 = vmatpush1.bf16.msra.mxu0 %v1290
    %1308 = vmatprep.subr.bf16.mxu0 0
    %1309 = vmatpush2.bf16.msra.mxu0 0
    %1310 = vmatprep.subr.bf16.mxu0 0
    %1311 = vmatpush2.bf16.msra.mxu0 0
    %1312 = vmatprep.subr.bf16.mxu0 0
    %1313 = vmatpush2.bf16.msra.mxu0 0
    %1314 = vmatprep.subr.bf16.mxu0 0
    %1315 = vmatpush2.bf16.msra.mxu0 0
    %1316 = vmatprep.subr.bf16.mxu0 0
    %1317 = vmatpush2.bf16.msra.mxu0 0
    %1318 = vmatprep.subr.bf16.mxu0 0
    %1319 = vmatpush2.bf16.msra.mxu0 0
    %1320 = vmatprep.subr.bf16.mxu0 0
    %1321 = vmatpush2.bf16.msra.mxu0 0
    %1322 = vmatprep.subr.bf16.mxu0 0
    %1323 = vmatpush2.bf16.msra.mxu0 0
    %1324 = vmatprep.mubr.bf16.mxu0 0
    %1325 = vmatmul.mubr.bf16.gmra.mxu0 %v1287
    %v1326 = vpop.f32.mrf.mxu0
    %v1327 = vadd.f32 0.0, %v1326
    %v1328 = vpop.f32.mrf.mxu0
    %v1329 = vpop.f32.mrf.mxu0
    %v1330 = vpop.f32.mrf.mxu0
    %1331 = vdwg.mxu0
    %v1332 = vpack.c.bf16 %v1327, %v1279
    %v1333 = vld [vmem:[#allocation11 + $0x10] sm:$0xf]
    %v1334 = vld [vmem:[#allocation11 + $0x14] sm:$0xf]
    %v1335 = vld [vmem:[#allocation11 + $0x18] sm:$0xf]
    %v1336 = vld [vmem:[#allocation11 + $0x1c] sm:$0xf]
    %v1341 = vunpack.c.l.b16 %v1333
    %v1342 = vunpack.c.l.b16 %v1334
    %v1343 = vunpack.c.l.b16 %v1335
    %v1344 = vunpack.c.l.b16 %v1336
    %v1345 = vpack.c.b16 %v1342, %v1341
    %v1346 = vpack.c.b16 %v1344, %v1343
    %v1350 = vsel %vm648, %v1332, 0
    %1352 = vmatprep.subr.bf16.mxu0 0
    %1353 = vmatpush1.bf16.msra.mxu0 0
    %1354 = vmatprep.subr.bf16.mxu0 0
    %1355 = vmatpush1.bf16.msra.mxu0 0
    %1356 = vmatprep.subr.bf16.mxu0 0
    %1357 = vmatpush1.bf16.msra.mxu0 0
    %1358 = vmatprep.subr.bf16.mxu0 0
    %1359 = vmatpush1.bf16.msra.mxu0 0
    %1360 = vmatprep.subr.bf16.mxu0 0
    %1361 = vmatpush1.bf16.msra.mxu0 0
    %1362 = vmatprep.subr.bf16.mxu0 0
    %1363 = vmatpush1.bf16.msra.mxu0 0
    %1364 = vmatprep.subr.bf16.mxu0 0
    %1365 = vmatpush1.bf16.msra.mxu0 %v1346
    %1366 = vmatprep.subr.bf16.mxu0 0
    %1367 = vmatpush1.bf16.msra.mxu0 %v1345
    %1368 = vmatprep.subr.bf16.mxu0 0
    %1369 = vmatpush2.bf16.msra.mxu0 0
    %1370 = vmatprep.subr.bf16.mxu0 0
    %1371 = vmatpush2.bf16.msra.mxu0 0
    %1372 = vmatprep.subr.bf16.mxu0 0
    %1373 = vmatpush2.bf16.msra.mxu0 0
    %1374 = vmatprep.subr.bf16.mxu0 0
    %1375 = vmatpush2.bf16.msra.mxu0 0
    %1376 = vmatprep.subr.bf16.mxu0 0
    %1377 = vmatpush2.bf16.msra.mxu0 0
    %1378 = vmatprep.subr.bf16.mxu0 0
    %1379 = vmatpush2.bf16.msra.mxu0 0
    %1380 = vmatprep.subr.bf16.mxu0 0
    %1381 = vmatpush2.bf16.msra.mxu0 0
    %1382 = vmatprep.subr.bf16.mxu0 0
    %1383 = vmatpush2.bf16.msra.mxu0 0
    %1384 = vmatprep.mubr.bf16.mxu0 0
    %1385 = vmatmul.mubr.bf16.gmra.mxu0 %v1350
    %v1386 = vpop.f32.mrf.mxu0
    %v1387 = vadd.f32 0.0, %v1386
    %v1388 = vpop.f32.mrf.mxu0
    %v1389 = vpop.f32.mrf.mxu0
    %v1390 = vadd.f32 0.0, %v1389
    %v1391 = vpop.f32.mrf.mxu0
    %1392 = vdwg.mxu0
    %v1397 = vunpack.c.l.b16 %v1232
    %v1398 = vunpack.c.l.b16 %v1233
    %v1399 = vunpack.c.l.b16 %v1234
    %v1400 = vunpack.c.l.b16 %v1235
    %v1401 = vpack.c.b16 %v1398, %v1397
    %v1402 = vpack.c.b16 %v1400, %v1399
    %v1406 = vsel %vm648, %v1231, 0
    %1408 = vmatprep.subr.bf16.mxu0 0
    %1409 = vmatpush1.bf16.msra.mxu0 0
    %1410 = vmatprep.subr.bf16.mxu0 0
    %1411 = vmatpush1.bf16.msra.mxu0 0
    %1412 = vmatprep.subr.bf16.mxu0 0
    %1413 = vmatpush1.bf16.msra.mxu0 0
    %1414 = vmatprep.subr.bf16.mxu0 0
    %1415 = vmatpush1.bf16.msra.mxu0 0
    %1416 = vmatprep.subr.bf16.mxu0 0
    %1417 = vmatpush1.bf16.msra.mxu0 0
    %1418 = vmatprep.subr.bf16.mxu0 0
    %1419 = vmatpush1.bf16.msra.mxu0 0
    %1420 = vmatprep.subr.bf16.mxu0 0
    %1421 = vmatpush1.bf16.msra.mxu0 %v1402
    %1422 = vmatprep.subr.bf16.mxu0 0
    %1423 = vmatpush1.bf16.msra.mxu0 %v1401
    %1424 = vmatprep.subr.bf16.mxu0 0
    %1425 = vmatpush2.bf16.msra.mxu0 0
    %1426 = vmatprep.subr.bf16.mxu0 0
    %1427 = vmatpush2.bf16.msra.mxu0 0
    %1428 = vmatprep.subr.bf16.mxu0 0
    %1429 = vmatpush2.bf16.msra.mxu0 0
    %1430 = vmatprep.subr.bf16.mxu0 0
    %1431 = vmatpush2.bf16.msra.mxu0 0
    %1432 = vmatprep.subr.bf16.mxu0 0
    %1433 = vmatpush2.bf16.msra.mxu0 0
    %1434 = vmatprep.subr.bf16.mxu0 0
    %1435 = vmatpush2.bf16.msra.mxu0 0
    %1436 = vmatprep.subr.bf16.mxu0 0
    %1437 = vmatpush2.bf16.msra.mxu0 0
    %1438 = vmatprep.subr.bf16.mxu0 0
    %1439 = vmatpush2.bf16.msra.mxu0 0
    %1440 = vmatprep.mubr.bf16.mxu0 0
    %1441 = vmatmul.mubr.bf16.gmra.mxu0 %v1406
    %v1442 = vpop.f32.mrf.mxu0
    %v1443 = vadd.f32 %v1387, %v1442
    %v1444 = vpop.f32.mrf.mxu0
    %v1445 = vpop.f32.mrf.mxu0
    %v1446 = vadd.f32 %v1390, %v1445
    %v1447 = vpop.f32.mrf.mxu0
    %1448 = vdwg.mxu0
    %1449 = vrot.lane.b32.xlu0 %v646, 64
    %v1450 = vpop.permute.xlu0 %1449
    %v1452 = vsel %vm1041, %v1134, 0
    %v1455 = vsel %vm1141, %v1450, 0
    %1457 = vmatprep.subr.bf16.mxu0 0
    %1458 = vmatpush1.bf16.msra.mxu0 0
    %1459 = vmatprep.subr.bf16.mxu0 0
    %1460 = vmatpush1.bf16.msra.mxu0 0
    %1461 = vmatprep.subr.bf16.mxu0 0
    %1462 = vmatpush1.bf16.msra.mxu0 0
    %1463 = vmatprep.subr.bf16.mxu0 0
    %1464 = vmatpush1.bf16.msra.mxu0 0
    %1465 = vmatprep.subr.bf16.mxu0 0
    %1466 = vmatpush1.bf16.msra.mxu0 0
    %1467 = vmatprep.subr.bf16.mxu0 0
    %1468 = vmatpush1.bf16.msra.mxu0 0
    %1469 = vmatprep.subr.bf16.mxu0 0
    %1470 = vmatpush1.bf16.msra.mxu0 0
    %1471 = vmatprep.subr.bf16.mxu0 0
    %1472 = vmatpush1.bf16.msra.mxu0 %v1455
    %1473 = vmatprep.subr.bf16.mxu0 0
    %1474 = vmatpush2.bf16.msra.mxu0 0
    %1475 = vmatprep.subr.bf16.mxu0 0
    %1476 = vmatpush2.bf16.msra.mxu0 0
    %1477 = vmatprep.subr.bf16.mxu0 0
    %1478 = vmatpush2.bf16.msra.mxu0 0
    %1479 = vmatprep.subr.bf16.mxu0 0
    %1480 = vmatpush2.bf16.msra.mxu0 0
    %1481 = vmatprep.subr.bf16.mxu0 0
    %1482 = vmatpush2.bf16.msra.mxu0 0
    %1483 = vmatprep.subr.bf16.mxu0 0
    %1484 = vmatpush2.bf16.msra.mxu0 0
    %1485 = vmatprep.subr.bf16.mxu0 0
    %1486 = vmatpush2.bf16.msra.mxu0 0
    %1487 = vmatprep.subr.bf16.mxu0 0
    %1488 = vmatpush2.bf16.msra.mxu0 0
    %1489 = vmatprep.mubr.bf16.mxu0 0
    %1490 = vmatmul.mubr.bf16.gmra.mxu0 %v1452
    %v1491 = vpop.f32.mrf.mxu0
    %v1492 = vadd.f32 0.0, %v1491
    %v1493 = vpop.f32.mrf.mxu0
    %v1494 = vpop.f32.mrf.mxu0
    %v1495 = vpop.f32.mrf.mxu0
    %1496 = vdwg.mxu0
    %1497 = vrot.lane.b32.xlu0 %v647, 64
    %v1498 = vpop.permute.xlu0 %1497
    %v1500 = vsel %vm1041, %v1135, 0
    %v1503 = vsel %vm1141, %v1498, 0
    %1505 = vmatprep.subr.bf16.mxu0 0
    %1506 = vmatpush1.bf16.msra.mxu0 0
    %1507 = vmatprep.subr.bf16.mxu0 0
    %1508 = vmatpush1.bf16.msra.mxu0 0
    %1509 = vmatprep.subr.bf16.mxu0 0
    %1510 = vmatpush1.bf16.msra.mxu0 0
    %1511 = vmatprep.subr.bf16.mxu0 0
    %1512 = vmatpush1.bf16.msra.mxu0 0
    %1513 = vmatprep.subr.bf16.mxu0 0
    %1514 = vmatpush1.bf16.msra.mxu0 0
    %1515 = vmatprep.subr.bf16.mxu0 0
    %1516 = vmatpush1.bf16.msra.mxu0 0
    %1517 = vmatprep.subr.bf16.mxu0 0
    %1518 = vmatpush1.bf16.msra.mxu0 0
    %1519 = vmatprep.subr.bf16.mxu0 0
    %1520 = vmatpush1.bf16.msra.mxu0 %v1503
    %1521 = vmatprep.subr.bf16.mxu0 0
    %1522 = vmatpush2.bf16.msra.mxu0 0
    %1523 = vmatprep.subr.bf16.mxu0 0
    %1524 = vmatpush2.bf16.msra.mxu0 0
    %1525 = vmatprep.subr.bf16.mxu0 0
    %1526 = vmatpush2.bf16.msra.mxu0 0
    %1527 = vmatprep.subr.bf16.mxu0 0
    %1528 = vmatpush2.bf16.msra.mxu0 0
    %1529 = vmatprep.subr.bf16.mxu0 0
    %1530 = vmatpush2.bf16.msra.mxu0 0
    %1531 = vmatprep.subr.bf16.mxu0 0
    %1532 = vmatpush2.bf16.msra.mxu0 0
    %1533 = vmatprep.subr.bf16.mxu0 0
    %1534 = vmatpush2.bf16.msra.mxu0 0
    %1535 = vmatprep.subr.bf16.mxu0 0
    %1536 = vmatpush2.bf16.msra.mxu0 0
    %1537 = vmatprep.mubr.bf16.mxu0 0
    %1538 = vmatmul.mubr.bf16.gmra.mxu0 %v1500
    %v1539 = vpop.f32.mrf.mxu0
    %v1540 = vadd.f32 0.0, %v1539
    %v1541 = vpop.f32.mrf.mxu0
    %v1542 = vpop.f32.mrf.mxu0
    %v1543 = vpop.f32.mrf.mxu0
    %1544 = vdwg.mxu0
    %v1545 = vpack.c.bf16 %v1540, %v1492
    %v1546 = vld [vmem:[#allocation11 + $0x20] sm:$0xf]
    %v1547 = vld [vmem:[#allocation11 + $0x24] sm:$0xf]
    %v1548 = vld [vmem:[#allocation11 + $0x28] sm:$0xf]
    %v1549 = vld [vmem:[#allocation11 + $0x2c] sm:$0xf]
    %v1554 = vunpack.c.l.b16 %v1546
    %v1555 = vunpack.c.l.b16 %v1547
    %v1556 = vunpack.c.l.b16 %v1548
    %v1557 = vunpack.c.l.b16 %v1549
    %v1558 = vpack.c.b16 %v1555, %v1554
    %v1559 = vpack.c.b16 %v1557, %v1556
    %v1563 = vsel %vm648, %v1545, 0
    %1565 = vmatprep.subr.bf16.mxu0 0
    %1566 = vmatpush1.bf16.msra.mxu0 0
    %1567 = vmatprep.subr.bf16.mxu0 0
    %1568 = vmatpush1.bf16.msra.mxu0 0
    %1569 = vmatprep.subr.bf16.mxu0 0
    %1570 = vmatpush1.bf16.msra.mxu0 0
    %1571 = vmatprep.subr.bf16.mxu0 0
    %1572 = vmatpush1.bf16.msra.mxu0 0
    %1573 = vmatprep.subr.bf16.mxu0 0
    %1574 = vmatpush1.bf16.msra.mxu0 0
    %1575 = vmatprep.subr.bf16.mxu0 0
    %1576 = vmatpush1.bf16.msra.mxu0 0
    %1577 = vmatprep.subr.bf16.mxu0 0
    %1578 = vmatpush1.bf16.msra.mxu0 %v1559
    %1579 = vmatprep.subr.bf16.mxu0 0
    %1580 = vmatpush1.bf16.msra.mxu0 %v1558
    %1581 = vmatprep.subr.bf16.mxu0 0
    %1582 = vmatpush2.bf16.msra.mxu0 0
    %1583 = vmatprep.subr.bf16.mxu0 0
    %1584 = vmatpush2.bf16.msra.mxu0 0
    %1585 = vmatprep.subr.bf16.mxu0 0
    %1586 = vmatpush2.bf16.msra.mxu0 0
    %1587 = vmatprep.subr.bf16.mxu0 0
    %1588 = vmatpush2.bf16.msra.mxu0 0
    %1589 = vmatprep.subr.bf16.mxu0 0
    %1590 = vmatpush2.bf16.msra.mxu0 0
    %1591 = vmatprep.subr.bf16.mxu0 0
    %1592 = vmatpush2.bf16.msra.mxu0 0
    %1593 = vmatprep.subr.bf16.mxu0 0
    %1594 = vmatpush2.bf16.msra.mxu0 0
    %1595 = vmatprep.subr.bf16.mxu0 0
    %1596 = vmatpush2.bf16.msra.mxu0 0
    %1597 = vmatprep.mubr.bf16.mxu0 0
    %1598 = vmatmul.mubr.bf16.gmra.mxu0 %v1563
    %v1599 = vpop.f32.mrf.mxu0
    %v1600 = vadd.f32 0.0, %v1599
    %v1601 = vpop.f32.mrf.mxu0
    %v1602 = vpop.f32.mrf.mxu0
    %v1603 = vadd.f32 0.0, %v1602
    %v1604 = vpop.f32.mrf.mxu0
    %1605 = vdwg.mxu0
    %v1606 = vadd.f32 %v1443, %v1600
    %v1607 = vadd.f32 %v1446, %v1603
    %1608 = vrot.lane.b32.xlu0 %v646, 32
    %v1609 = vpop.permute.xlu0 %1608
    %v1611 = vsel %vm1041, %v1136, 0
    %v1614 = vsel %vm1141, %v1609, 0
    %1616 = vmatprep.subr.bf16.mxu0 0
    %1617 = vmatpush1.bf16.msra.mxu0 0
    %1618 = vmatprep.subr.bf16.mxu0 0
    %1619 = vmatpush1.bf16.msra.mxu0 0
    %1620 = vmatprep.subr.bf16.mxu0 0
    %1621 = vmatpush1.bf16.msra.mxu0 0
    %1622 = vmatprep.subr.bf16.mxu0 0
    %1623 = vmatpush1.bf16.msra.mxu0 0
    %1624 = vmatprep.subr.bf16.mxu0 0
    %1625 = vmatpush1.bf16.msra.mxu0 0
    %1626 = vmatprep.subr.bf16.mxu0 0
    %1627 = vmatpush1.bf16.msra.mxu0 0
    %1628 = vmatprep.subr.bf16.mxu0 0
    %1629 = vmatpush1.bf16.msra.mxu0 0
    %1630 = vmatprep.subr.bf16.mxu0 0
    %1631 = vmatpush1.bf16.msra.mxu0 %v1614
    %1632 = vmatprep.subr.bf16.mxu0 0
    %1633 = vmatpush2.bf16.msra.mxu0 0
    %1634 = vmatprep.subr.bf16.mxu0 0
    %1635 = vmatpush2.bf16.msra.mxu0 0
    %1636 = vmatprep.subr.bf16.mxu0 0
    %1637 = vmatpush2.bf16.msra.mxu0 0
    %1638 = vmatprep.subr.bf16.mxu0 0
    %1639 = vmatpush2.bf16.msra.mxu0 0
    %1640 = vmatprep.subr.bf16.mxu0 0
    %1641 = vmatpush2.bf16.msra.mxu0 0
    %1642 = vmatprep.subr.bf16.mxu0 0
    %1643 = vmatpush2.bf16.msra.mxu0 0
    %1644 = vmatprep.subr.bf16.mxu0 0
    %1645 = vmatpush2.bf16.msra.mxu0 0
    %1646 = vmatprep.subr.bf16.mxu0 0
    %1647 = vmatpush2.bf16.msra.mxu0 0
    %1648 = vmatprep.mubr.bf16.mxu0 0
    %1649 = vmatmul.mubr.bf16.gmra.mxu0 %v1611
    %v1650 = vpop.f32.mrf.mxu0
    %v1651 = vadd.f32 0.0, %v1650
    %v1652 = vpop.f32.mrf.mxu0
    %v1653 = vpop.f32.mrf.mxu0
    %v1654 = vpop.f32.mrf.mxu0
    %1655 = vdwg.mxu0
    %1656 = vrot.lane.b32.xlu0 %v647, 32
    %v1657 = vpop.permute.xlu0 %1656
    %v1659 = vsel %vm1041, %v1137, 0
    %v1662 = vsel %vm1141, %v1657, 0
    %1664 = vmatprep.subr.bf16.mxu0 0
    %1665 = vmatpush1.bf16.msra.mxu0 0
    %1666 = vmatprep.subr.bf16.mxu0 0
    %1667 = vmatpush1.bf16.msra.mxu0 0
    %1668 = vmatprep.subr.bf16.mxu0 0
    %1669 = vmatpush1.bf16.msra.mxu0 0
    %1670 = vmatprep.subr.bf16.mxu0 0
    %1671 = vmatpush1.bf16.msra.mxu0 0
    %1672 = vmatprep.subr.bf16.mxu0 0
    %1673 = vmatpush1.bf16.msra.mxu0 0
    %1674 = vmatprep.subr.bf16.mxu0 0
    %1675 = vmatpush1.bf16.msra.mxu0 0
    %1676 = vmatprep.subr.bf16.mxu0 0
    %1677 = vmatpush1.bf16.msra.mxu0 0
    %1678 = vmatprep.subr.bf16.mxu0 0
    %1679 = vmatpush1.bf16.msra.mxu0 %v1662
    %1680 = vmatprep.subr.bf16.mxu0 0
    %1681 = vmatpush2.bf16.msra.mxu0 0
    %1682 = vmatprep.subr.bf16.mxu0 0
    %1683 = vmatpush2.bf16.msra.mxu0 0
    %1684 = vmatprep.subr.bf16.mxu0 0
    %1685 = vmatpush2.bf16.msra.mxu0 0
    %1686 = vmatprep.subr.bf16.mxu0 0
    %1687 = vmatpush2.bf16.msra.mxu0 0
    %1688 = vmatprep.subr.bf16.mxu0 0
    %1689 = vmatpush2.bf16.msra.mxu0 0
    %1690 = vmatprep.subr.bf16.mxu0 0
    %1691 = vmatpush2.bf16.msra.mxu0 0
    %1692 = vmatprep.subr.bf16.mxu0 0
    %1693 = vmatpush2.bf16.msra.mxu0 0
    %1694 = vmatprep.subr.bf16.mxu0 0
    %1695 = vmatpush2.bf16.msra.mxu0 0
    %1696 = vmatprep.mubr.bf16.mxu0 0
    %1697 = vmatmul.mubr.bf16.gmra.mxu0 %v1659
    %v1698 = vpop.f32.mrf.mxu0
    %v1699 = vadd.f32 0.0, %v1698
    %v1700 = vpop.f32.mrf.mxu0
    %v1701 = vpop.f32.mrf.mxu0
    %v1702 = vpop.f32.mrf.mxu0
    %1703 = vdwg.mxu0
    %v1704 = vpack.c.bf16 %v1699, %v1651
    %v1705 = vld [vmem:[#allocation11 + $0x30] sm:$0xf]
    %v1706 = vld [vmem:[#allocation11 + $0x34] sm:$0xf]
    %v1707 = vld [vmem:[#allocation11 + $0x38] sm:$0xf]
    %v1708 = vld [vmem:[#allocation11 + $0x3c] sm:$0xf]
    %v1713 = vunpack.c.l.b16 %v1705
    %v1714 = vunpack.c.l.b16 %v1706
    %v1715 = vunpack.c.l.b16 %v1707
    %v1716 = vunpack.c.l.b16 %v1708
    %v1717 = vpack.c.b16 %v1714, %v1713
    %v1718 = vpack.c.b16 %v1716, %v1715
    %v1722 = vsel %vm648, %v1704, 0
    %1724 = vmatprep.subr.bf16.mxu0 0
    %1725 = vmatpush1.bf16.msra.mxu0 0
    %1726 = vmatprep.subr.bf16.mxu0 0
    %1727 = vmatpush1.bf16.msra.mxu0 0
    %1728 = vmatprep.subr.bf16.mxu0 0
    %1729 = vmatpush1.bf16.msra.mxu0 0
    %1730 = vmatprep.subr.bf16.mxu0 0
    %1731 = vmatpush1.bf16.msra.mxu0 0
    %1732 = vmatprep.subr.bf16.mxu0 0
    %1733 = vmatpush1.bf16.msra.mxu0 0
    %1734 = vmatprep.subr.bf16.mxu0 0
    %1735 = vmatpush1.bf16.msra.mxu0 0
    %1736 = vmatprep.subr.bf16.mxu0 0
    %1737 = vmatpush1.bf16.msra.mxu0 %v1718
    %1738 = vmatprep.subr.bf16.mxu0 0
    %1739 = vmatpush1.bf16.msra.mxu0 %v1717
    %1740 = vmatprep.subr.bf16.mxu0 0
    %1741 = vmatpush2.bf16.msra.mxu0 0
    %1742 = vmatprep.subr.bf16.mxu0 0
    %1743 = vmatpush2.bf16.msra.mxu0 0
    %1744 = vmatprep.subr.bf16.mxu0 0
    %1745 = vmatpush2.bf16.msra.mxu0 0
    %1746 = vmatprep.subr.bf16.mxu0 0
    %1747 = vmatpush2.bf16.msra.mxu0 0
    %1748 = vmatprep.subr.bf16.mxu0 0
    %1749 = vmatpush2.bf16.msra.mxu0 0
    %1750 = vmatprep.subr.bf16.mxu0 0
    %1751 = vmatpush2.bf16.msra.mxu0 0
    %1752 = vmatprep.subr.bf16.mxu0 0
    %1753 = vmatpush2.bf16.msra.mxu0 0
    %1754 = vmatprep.subr.bf16.mxu0 0
    %1755 = vmatpush2.bf16.msra.mxu0 0
    %1756 = vmatprep.mubr.bf16.mxu0 0
    %1757 = vmatmul.mubr.bf16.gmra.mxu0 %v1722
    %v1758 = vpop.f32.mrf.mxu0
    %v1759 = vadd.f32 0.0, %v1758
    %v1760 = vpop.f32.mrf.mxu0
    %v1761 = vpop.f32.mrf.mxu0
    %v1762 = vadd.f32 0.0, %v1761
    %v1763 = vpop.f32.mrf.mxu0
    %1764 = vdwg.mxu0
    %v1765 = vadd.f32 %v1606, %v1759
    %v1766 = vadd.f32 %v1607, %v1762
    %v1767 = vld [vmem:[%s19] sm:$0x1]
    %v1769 = vlaneseq
    %v1770 = vshrl.u32 %v1769, 7
    %v1771 = vsub.s32 0, %v1770
    %v1772 = vrot.slane %v1767, %v1771
    %v1774 = vadd.f32 %v1765, %v1772
    %v1775 = vadd.f32 %v1766, %v1772
    %1776 = vst [vmem:[#allocation23] sm:$0xff] %v1774
    %1777 = vst [vmem:[#allocation23 + $0x8] sm:$0xff] %v1775
    %v1778 = vadd.f32 %v1774, %v287
    %v1779 = vadd.f32 %v1775, %v288
    %1780 = vadd.xlane.f32.xlu0 %v1778
    %v1781 = vpop.xlane.xlu0 %1780
    %1782 = vadd.xlane.f32.xlu0 %v1779
    %v1783 = vpop.xlane.xlu0 %1782
    %v1784 = vrcp.pop 128.0
    %v1785 = vmul.f32 %v1781, %v1784
    %v1786 = vmul.f32 %v1783, %v1784
    %v1787 = vsub.f32 %v1778, %v1785
    %v1788 = vsub.f32 %v1779, %v1786
    %v1789 = vmul.f32 %v1787, %v1787
    %v1790 = vmul.f32 %v1788, %v1788
    %1791 = vadd.xlane.f32.xlu0 %v1789
    %v1792 = vpop.xlane.xlu0 %1791
    %1793 = vadd.xlane.f32.xlu0 %v1790
    %v1794 = vpop.xlane.xlu0 %1793
    %v1795 = vmul.f32 %v1792, %v1784
    %v1796 = vmul.f32 %v1794, %v1784
    %v1797 = vadd.f32 %v1795, 1e-05
    %v1798 = vadd.f32 %v1796, 1e-05
    %v1799 = vrsqrt.pop %v1797
    %v1800 = vrsqrt.pop %v1798
    %v1801 = vmul.f32 %v1787, %v1799
    %v1802 = vmul.f32 %v1788, %v1800
    %v1803 = vld [vmem:[%s21] sm:$0x1]
    %v1805 = vlaneseq
    %v1806 = vshrl.u32 %v1805, 7
    %v1807 = vsub.s32 0, %v1806
    %v1808 = vrot.slane %v1803, %v1807
    %v1810 = vmul.f32 %v1801, %v1808
    %v1811 = vmul.f32 %v1802, %v1808
    %v1812 = vld [vmem:[%s23] sm:$0x1]
    %v1814 = vlaneseq
    %v1815 = vshrl.u32 %v1814, 7
    %v1816 = vsub.s32 0, %v1815
    %v1817 = vrot.slane %v1812, %v1816
    %v1819 = vadd.f32 %v1810, %v1817
    %v1820 = vadd.f32 %v1811, %v1817
    %v1821 = vpack.c.bf16 %v1820, %v1819
    %v1822 = vpack.c.bf16 %v290, %v289
    %v1823 = vpack.c.bf16 %v292, %v291
    %v1824 = vld [vmem:[#allocation13] sm:$0xf]
    %v1825 = vld [vmem:[#allocation13 + $0x4] sm:$0xf]
    %v1826 = vld [vmem:[#allocation13 + $0x8] sm:$0xf]
    %v1827 = vld [vmem:[#allocation13 + $0xc] sm:$0xf]
    %v1828 = vld [vmem:[#allocation13 + $0x10] sm:$0xf]
    %v1829 = vld [vmem:[#allocation13 + $0x14] sm:$0xf]
    %v1830 = vld [vmem:[#allocation13 + $0x18] sm:$0xf]
    %v1831 = vld [vmem:[#allocation13 + $0x1c] sm:$0xf]
    %v1832 = vld [vmem:[#allocation13 + $0x20] sm:$0xf]
    %v1833 = vld [vmem:[#allocation13 + $0x24] sm:$0xf]
    %v1834 = vld [vmem:[#allocation13 + $0x28] sm:$0xf]
    %v1835 = vld [vmem:[#allocation13 + $0x2c] sm:$0xf]
    %v1836 = vld [vmem:[#allocation13 + $0x30] sm:$0xf]
    %v1837 = vld [vmem:[#allocation13 + $0x34] sm:$0xf]
    %v1838 = vld [vmem:[#allocation13 + $0x38] sm:$0xf]
    %v1839 = vld [vmem:[#allocation13 + $0x3c] sm:$0xf]
    %v1840 = vld [vmem:[%s27] sm:$0x1]
    %v1842 = vlaneseq
    %v1843 = vshrl.u32 %v1842, 7
    %v1844 = vsub.s32 0, %v1843
    %v1845 = vrot.slane %v1840, %v1844
    %v1863 = vunpack.c.l.b16 %v1824
    %v1864 = vunpack.c.l.b16 %v1825
    %v1865 = vunpack.c.l.b16 %v1826
    %v1866 = vunpack.c.l.b16 %v1827
    %v1867 = vunpack.c.l.b16 %v1828
    %v1868 = vunpack.c.l.b16 %v1829
    %v1869 = vunpack.c.l.b16 %v1830
    %v1870 = vunpack.c.l.b16 %v1831
    %v1871 = vunpack.c.l.b16 %v1832
    %v1872 = vunpack.c.l.b16 %v1833
    %v1873 = vunpack.c.l.b16 %v1834
    %v1874 = vunpack.c.l.b16 %v1835
    %v1875 = vunpack.c.l.b16 %v1836
    %v1876 = vunpack.c.l.b16 %v1837
    %v1877 = vunpack.c.l.b16 %v1838
    %v1878 = vunpack.c.l.b16 %v1839
    %v1879 = vpack.c.b16 %v1864, %v1863
    %v1880 = vpack.c.b16 %v1866, %v1865
    %v1881 = vpack.c.b16 %v1868, %v1867
    %v1882 = vpack.c.b16 %v1870, %v1869
    %v1883 = vpack.c.b16 %v1872, %v1871
    %v1884 = vpack.c.b16 %v1874, %v1873
    %v1885 = vpack.c.b16 %v1876, %v1875
    %v1886 = vpack.c.b16 %v1878, %v1877
    %1895 = vmatprep.subr.bf16.mxu0 0
    %1896 = vmatpush1.bf16.msra.mxu0 %v1886
    %1897 = vmatprep.subr.bf16.mxu0 0
    %1898 = vmatpush1.bf16.msra.mxu0 %v1885
    %1899 = vmatprep.subr.bf16.mxu0 0
    %1900 = vmatpush1.bf16.msra.mxu0 %v1884
    %1901 = vmatprep.subr.bf16.mxu0 0
    %1902 = vmatpush1.bf16.msra.mxu0 %v1883
    %1903 = vmatprep.subr.bf16.mxu0 0
    %1904 = vmatpush1.bf16.msra.mxu0 %v1882
    %1905 = vmatprep.subr.bf16.mxu0 0
    %1906 = vmatpush1.bf16.msra.mxu0 %v1881
    %1907 = vmatprep.subr.bf16.mxu0 0
    %1908 = vmatpush1.bf16.msra.mxu0 %v1880
    %1909 = vmatprep.subr.bf16.mxu0 0
    %1910 = vmatpush1.bf16.msra.mxu0 %v1879
    %1911 = vmatprep.subr.bf16.mxu0 0
    %1912 = vmatpush2.bf16.msra.mxu0 0
    %1913 = vmatprep.subr.bf16.mxu0 0
    %1914 = vmatpush2.bf16.msra.mxu0 0
    %1915 = vmatprep.subr.bf16.mxu0 0
    %1916 = vmatpush2.bf16.msra.mxu0 0
    %1917 = vmatprep.subr.bf16.mxu0 0
    %1918 = vmatpush2.bf16.msra.mxu0 0
    %1919 = vmatprep.subr.bf16.mxu0 0
    %1920 = vmatpush2.bf16.msra.mxu0 0
    %1921 = vmatprep.subr.bf16.mxu0 0
    %1922 = vmatpush2.bf16.msra.mxu0 0
    %1923 = vmatprep.subr.bf16.mxu0 0
    %1924 = vmatpush2.bf16.msra.mxu0 0
    %1925 = vmatprep.subr.bf16.mxu0 0
    %1926 = vmatpush2.bf16.msra.mxu0 0
    %1927 = vmatprep.mubr.bf16.mxu0 0
    %1928 = vmatmul.mubr.bf16.gmra.mxu0 %v1821
    %v1929 = vpop.f32.mrf.mxu0
    %v1930 = vadd.f32 %v1845, %v1929
    %v1931 = vpop.f32.mrf.mxu0
    %v1932 = vpop.f32.mrf.mxu0
    %v1933 = vadd.f32 %v1845, %v1932
    %v1934 = vpop.f32.mrf.mxu0
    %1935 = vdwg.mxu0
    %v1936 = vpack.c.bf16 %v1933, %v1930
    %v1938 = vunpack.c.l.b16 %v1936
    %v1939 = vunpack.c.h.b16 %v1936
    %v1940 = vpack.c.b16 %v1938, %v1938
    %v1941 = vpack.c.b16 %v1939, %v1939
    %v1942 = vld [vmem:[#allocation14] sm:$0xf]
    %v1943 = vld [vmem:[#allocation14 + $0x4] sm:$0xf]
    %v1944 = vld [vmem:[#allocation14 + $0x8] sm:$0xf]
    %v1945 = vld [vmem:[#allocation14 + $0xc] sm:$0xf]
    %v1946 = vld [vmem:[#allocation14 + $0x10] sm:$0xf]
    %v1947 = vld [vmem:[#allocation14 + $0x14] sm:$0xf]
    %v1948 = vld [vmem:[#allocation14 + $0x18] sm:$0xf]
    %v1949 = vld [vmem:[#allocation14 + $0x1c] sm:$0xf]
    %v1950 = vld [vmem:[#allocation14 + $0x20] sm:$0xf]
    %v1951 = vld [vmem:[#allocation14 + $0x24] sm:$0xf]
    %v1952 = vld [vmem:[#allocation14 + $0x28] sm:$0xf]
    %v1953 = vld [vmem:[#allocation14 + $0x2c] sm:$0xf]
    %v1954 = vld [vmem:[#allocation14 + $0x30] sm:$0xf]
    %v1955 = vld [vmem:[#allocation14 + $0x34] sm:$0xf]
    %v1956 = vld [vmem:[#allocation14 + $0x38] sm:$0xf]
    %v1957 = vld [vmem:[#allocation14 + $0x3c] sm:$0xf]
    %v1958 = vld [vmem:[%s31] sm:$0x1]
    %v1960 = vlaneseq
    %v1961 = vshrl.u32 %v1960, 7
    %v1962 = vsub.s32 0, %v1961
    %v1963 = vrot.slane %v1958, %v1962
    %v1981 = vunpack.c.l.b16 %v1942
    %v1982 = vunpack.c.l.b16 %v1943
    %v1983 = vunpack.c.l.b16 %v1944
    %v1984 = vunpack.c.l.b16 %v1945
    %v1985 = vunpack.c.l.b16 %v1946
    %v1986 = vunpack.c.l.b16 %v1947
    %v1987 = vunpack.c.l.b16 %v1948
    %v1988 = vunpack.c.l.b16 %v1949
    %v1989 = vunpack.c.l.b16 %v1950
    %v1990 = vunpack.c.l.b16 %v1951
    %v1991 = vunpack.c.l.b16 %v1952
    %v1992 = vunpack.c.l.b16 %v1953
    %v1993 = vunpack.c.l.b16 %v1954
    %v1994 = vunpack.c.l.b16 %v1955
    %v1995 = vunpack.c.l.b16 %v1956
    %v1996 = vunpack.c.l.b16 %v1957
    %v1997 = vpack.c.b16 %v1982, %v1981
    %v1998 = vpack.c.b16 %v1984, %v1983
    %v1999 = vpack.c.b16 %v1986, %v1985
    %v2000 = vpack.c.b16 %v1988, %v1987
    %v2001 = vpack.c.b16 %v1990, %v1989
    %v2002 = vpack.c.b16 %v1992, %v1991
    %v2003 = vpack.c.b16 %v1994, %v1993
    %v2004 = vpack.c.b16 %v1996, %v1995
    %2013 = vmatprep.subr.bf16.mxu0 0
    %2014 = vmatpush1.bf16.msra.mxu0 %v2004
    %2015 = vmatprep.subr.bf16.mxu0 0
    %2016 = vmatpush1.bf16.msra.mxu0 %v2003
    %2017 = vmatprep.subr.bf16.mxu0 0
    %2018 = vmatpush1.bf16.msra.mxu0 %v2002
    %2019 = vmatprep.subr.bf16.mxu0 0
    %2020 = vmatpush1.bf16.msra.mxu0 %v2001
    %2021 = vmatprep.subr.bf16.mxu0 0
    %2022 = vmatpush1.bf16.msra.mxu0 %v2000
    %2023 = vmatprep.subr.bf16.mxu0 0
    %2024 = vmatpush1.bf16.msra.mxu0 %v1999
    %2025 = vmatprep.subr.bf16.mxu0 0
    %2026 = vmatpush1.bf16.msra.mxu0 %v1998
    %2027 = vmatprep.subr.bf16.mxu0 0
    %2028 = vmatpush1.bf16.msra.mxu0 %v1997
    %2029 = vmatprep.subr.bf16.mxu0 0
    %2030 = vmatpush2.bf16.msra.mxu0 0
    %2031 = vmatprep.subr.bf16.mxu0 0
    %2032 = vmatpush2.bf16.msra.mxu0 0
    %2033 = vmatprep.subr.bf16.mxu0 0
    %2034 = vmatpush2.bf16.msra.mxu0 0
    %2035 = vmatprep.subr.bf16.mxu0 0
    %2036 = vmatpush2.bf16.msra.mxu0 0
    %2037 = vmatprep.subr.bf16.mxu0 0
    %2038 = vmatpush2.bf16.msra.mxu0 0
    %2039 = vmatprep.subr.bf16.mxu0 0
    %2040 = vmatpush2.bf16.msra.mxu0 0
    %2041 = vmatprep.subr.bf16.mxu0 0
    %2042 = vmatpush2.bf16.msra.mxu0 0
    %2043 = vmatprep.subr.bf16.mxu0 0
    %2044 = vmatpush2.bf16.msra.mxu0 0
    %2045 = vmatprep.mubr.bf16.mxu0 0
    %2046 = vmatmul.mubr.bf16.gmra.mxu0 %v1822
    %v2047 = vpop.f32.mrf.mxu0
    %v2048 = vadd.f32 %v1963, %v2047
    %v2049 = vpop.f32.mrf.mxu0
    %v2050 = vpop.f32.mrf.mxu0
    %v2051 = vadd.f32 %v1963, %v2050
    %v2052 = vpop.f32.mrf.mxu0
    %2053 = vmatprep.mubr.bf16.mxu0 0
    %2054 = vmatmul.mubr.bf16.gmra.mxu0 %v1823
    %v2055 = vpop.f32.mrf.mxu0
    %v2056 = vadd.f32 %v1963, %v2055
    %v2057 = vpop.f32.mrf.mxu0
    %v2058 = vpop.f32.mrf.mxu0
    %v2059 = vadd.f32 %v1963, %v2058
    %v2060 = vpop.f32.mrf.mxu0
    %2061 = vdwg.mxu0
    %v2062 = vpack.c.bf16 %v2051, %v2048
    %v2063 = vpack.c.bf16 %v2059, %v2056
    %v2064 = vld [vmem:[#allocation16] sm:$0xf]
    %v2065 = vld [vmem:[#allocation16 + $0x4] sm:$0xf]
    %v2066 = vld [vmem:[#allocation16 + $0x8] sm:$0xf]
    %v2067 = vld [vmem:[#allocation16 + $0xc] sm:$0xf]
    %v2068 = vld [vmem:[#allocation16 + $0x10] sm:$0xf]
    %v2069 = vld [vmem:[#allocation16 + $0x14] sm:$0xf]
    %v2070 = vld [vmem:[#allocation16 + $0x18] sm:$0xf]
    %v2071 = vld [vmem:[#allocation16 + $0x1c] sm:$0xf]
    %v2072 = vld [vmem:[#allocation16 + $0x20] sm:$0xf]
    %v2073 = vld [vmem:[#allocation16 + $0x24] sm:$0xf]
    %v2074 = vld [vmem:[#allocation16 + $0x28] sm:$0xf]
    %v2075 = vld [vmem:[#allocation16 + $0x2c] sm:$0xf]
    %v2076 = vld [vmem:[#allocation16 + $0x30] sm:$0xf]
    %v2077 = vld [vmem:[#allocation16 + $0x34] sm:$0xf]
    %v2078 = vld [vmem:[#allocation16 + $0x38] sm:$0xf]
    %v2079 = vld [vmem:[#allocation16 + $0x3c] sm:$0xf]
    %v2080 = vld [vmem:[%s35] sm:$0x1]
    %v2082 = vlaneseq
    %v2083 = vshrl.u32 %v2082, 7
    %v2084 = vsub.s32 0, %v2083
    %v2085 = vrot.slane %v2080, %v2084
    %v2103 = vunpack.c.l.b16 %v2064
    %v2104 = vunpack.c.l.b16 %v2065
    %v2105 = vunpack.c.l.b16 %v2066
    %v2106 = vunpack.c.l.b16 %v2067
    %v2107 = vunpack.c.l.b16 %v2068
    %v2108 = vunpack.c.l.b16 %v2069
    %v2109 = vunpack.c.l.b16 %v2070
    %v2110 = vunpack.c.l.b16 %v2071
    %v2111 = vunpack.c.l.b16 %v2072
    %v2112 = vunpack.c.l.b16 %v2073
    %v2113 = vunpack.c.l.b16 %v2074
    %v2114 = vunpack.c.l.b16 %v2075
    %v2115 = vunpack.c.l.b16 %v2076
    %v2116 = vunpack.c.l.b16 %v2077
    %v2117 = vunpack.c.l.b16 %v2078
    %v2118 = vunpack.c.l.b16 %v2079
    %v2119 = vpack.c.b16 %v2104, %v2103
    %v2120 = vpack.c.b16 %v2106, %v2105
    %v2121 = vpack.c.b16 %v2108, %v2107
    %v2122 = vpack.c.b16 %v2110, %v2109
    %v2123 = vpack.c.b16 %v2112, %v2111
    %v2124 = vpack.c.b16 %v2114, %v2113
    %v2125 = vpack.c.b16 %v2116, %v2115
    %v2126 = vpack.c.b16 %v2118, %v2117
    %2135 = vmatprep.subr.bf16.mxu0 0
    %2136 = vmatpush1.bf16.msra.mxu0 %v2126
    %2137 = vmatprep.subr.bf16.mxu0 0
    %2138 = vmatpush1.bf16.msra.mxu0 %v2125
    %2139 = vmatprep.subr.bf16.mxu0 0
    %2140 = vmatpush1.bf16.msra.mxu0 %v2124
    %2141 = vmatprep.subr.bf16.mxu0 0
    %2142 = vmatpush1.bf16.msra.mxu0 %v2123
    %2143 = vmatprep.subr.bf16.mxu0 0
    %2144 = vmatpush1.bf16.msra.mxu0 %v2122
    %2145 = vmatprep.subr.bf16.mxu0 0
    %2146 = vmatpush1.bf16.msra.mxu0 %v2121
    %2147 = vmatprep.subr.bf16.mxu0 0
    %2148 = vmatpush1.bf16.msra.mxu0 %v2120
    %2149 = vmatprep.subr.bf16.mxu0 0
    %2150 = vmatpush1.bf16.msra.mxu0 %v2119
    %2151 = vmatprep.subr.bf16.mxu0 0
    %2152 = vmatpush2.bf16.msra.mxu0 0
    %2153 = vmatprep.subr.bf16.mxu0 0
    %2154 = vmatpush2.bf16.msra.mxu0 0
    %2155 = vmatprep.subr.bf16.mxu0 0
    %2156 = vmatpush2.bf16.msra.mxu0 0
    %2157 = vmatprep.subr.bf16.mxu0 0
    %2158 = vmatpush2.bf16.msra.mxu0 0
    %2159 = vmatprep.subr.bf16.mxu0 0
    %2160 = vmatpush2.bf16.msra.mxu0 0
    %2161 = vmatprep.subr.bf16.mxu0 0
    %2162 = vmatpush2.bf16.msra.mxu0 0
    %2163 = vmatprep.subr.bf16.mxu0 0
    %2164 = vmatpush2.bf16.msra.mxu0 0
    %2165 = vmatprep.subr.bf16.mxu0 0
    %2166 = vmatpush2.bf16.msra.mxu0 0
    %2167 = vmatprep.mubr.bf16.mxu0 0
    %2168 = vmatmul.mubr.bf16.gmra.mxu0 %v1822
    %v2169 = vpop.f32.mrf.mxu0
    %v2170 = vadd.f32 %v2085, %v2169
    %v2171 = vpop.f32.mrf.mxu0
    %v2172 = vpop.f32.mrf.mxu0
    %v2173 = vadd.f32 %v2085, %v2172
    %v2174 = vpop.f32.mrf.mxu0
    %2175 = vmatprep.mubr.bf16.mxu0 0
    %2176 = vmatmul.mubr.bf16.gmra.mxu0 %v1823
    %v2177 = vpop.f32.mrf.mxu0
    %v2178 = vadd.f32 %v2085, %v2177
    %v2179 = vpop.f32.mrf.mxu0
    %v2180 = vpop.f32.mrf.mxu0
    %v2181 = vadd.f32 %v2085, %v2180
    %v2182 = vpop.f32.mrf.mxu0
    %2183 = vdwg.mxu0
    %v2184 = vpack.c.bf16 %v2173, %v2170
    %v2185 = vpack.c.bf16 %v2181, %v2178
    %v2187 = vsel %vm648, %v1940, 0
    %v2190 = vsel %vm648, %v2062, 0
    %2192 = vmatprep.subr.bf16.mxu0 0
    %2193 = vmatpush1.bf16.xpose.msra.mxu0 0
    %2194 = vmatprep.subr.bf16.mxu0 0
    %2195 = vmatpush1.bf16.xpose.msra.mxu0 0
    %2196 = vmatprep.subr.bf16.mxu0 0
    %2197 = vmatpush1.bf16.xpose.msra.mxu0 0
    %2198 = vmatprep.subr.bf16.mxu0 0
    %2199 = vmatpush1.bf16.xpose.msra.mxu0 0
    %2200 = vmatprep.subr.bf16.mxu0 0
    %2201 = vmatpush1.bf16.xpose.msra.mxu0 0
    %2202 = vmatprep.subr.bf16.mxu0 0
    %2203 = vmatpush1.bf16.xpose.msra.mxu0 0
    %2204 = vmatprep.subr.bf16.mxu0 0
    %2205 = vmatpush1.bf16.xpose.msra.mxu0 0
    %2206 = vmatprep.subr.bf16.mxu0 0
    %2207 = vmatpush1.bf16.xpose.msra.mxu0 %v2190
    %2208 = vmatprep.subr.bf16.mxu0 0
    %2209 = vmatpush2.bf16.xpose.msra.mxu0 0
    %2210 = vmatprep.subr.bf16.mxu0 0
    %2211 = vmatpush2.bf16.xpose.msra.mxu0 0
    %2212 = vmatprep.subr.bf16.mxu0 0
    %2213 = vmatpush2.bf16.xpose.msra.mxu0 0
    %2214 = vmatprep.subr.bf16.mxu0 0
    %2215 = vmatpush2.bf16.xpose.msra.mxu0 0
    %2216 = vmatprep.subr.bf16.mxu0 0
    %2217 = vmatpush2.bf16.xpose.msra.mxu0 0
    %2218 = vmatprep.subr.bf16.mxu0 0
    %2219 = vmatpush2.bf16.xpose.msra.mxu0 0
    %2220 = vmatprep.subr.bf16.mxu0 0
    %2221 = vmatpush2.bf16.xpose.msra.mxu0 0
    %2222 = vmatprep.subr.bf16.mxu0 0
    %2223 = vmatpush2.bf16.xpose.msra.mxu0 0
    %2224 = vmatprep.mubr.bf16.mxu0 0
    %2225 = vmatmul.mubr.bf16.gmra.mxu0 %v2187
    %v2226 = vpop.f32.mrf.mxu0
    %v2227 = vadd.f32 0.0, %v2226
    %v2228 = vpop.f32.mrf.mxu0
    %v2229 = vpop.f32.mrf.mxu0
    %v2230 = vpop.f32.mrf.mxu0
    %2231 = vdwg.mxu0
    %v2233 = vsel %vm648, %v1941, 0
    %v2236 = vsel %vm648, %v2063, 0
    %2238 = vmatprep.subr.bf16.mxu0 0
    %2239 = vmatpush1.bf16.xpose.msra.mxu0 0
    %2240 = vmatprep.subr.bf16.mxu0 0
    %2241 = vmatpush1.bf16.xpose.msra.mxu0 0
    %2242 = vmatprep.subr.bf16.mxu0 0
    %2243 = vmatpush1.bf16.xpose.msra.mxu0 0
    %2244 = vmatprep.subr.bf16.mxu0 0
    %2245 = vmatpush1.bf16.xpose.msra.mxu0 0
    %2246 = vmatprep.subr.bf16.mxu0 0
    %2247 = vmatpush1.bf16.xpose.msra.mxu0 0
    %2248 = vmatprep.subr.bf16.mxu0 0
    %2249 = vmatpush1.bf16.xpose.msra.mxu0 0
    %2250 = vmatprep.subr.bf16.mxu0 0
    %2251 = vmatpush1.bf16.xpose.msra.mxu0 0
    %2252 = vmatprep.subr.bf16.mxu0 0
    %2253 = vmatpush1.bf16.xpose.msra.mxu0 %v2236
    %2254 = vmatprep.subr.bf16.mxu0 0
    %2255 = vmatpush2.bf16.xpose.msra.mxu0 0
    %2256 = vmatprep.subr.bf16.mxu0 0
    %2257 = vmatpush2.bf16.xpose.msra.mxu0 0
    %2258 = vmatprep.subr.bf16.mxu0 0
    %2259 = vmatpush2.bf16.xpose.msra.mxu0 0
    %2260 = vmatprep.subr.bf16.mxu0 0
    %2261 = vmatpush2.bf16.xpose.msra.mxu0 0
    %2262 = vmatprep.subr.bf16.mxu0 0
    %2263 = vmatpush2.bf16.xpose.msra.mxu0 0
    %2264 = vmatprep.subr.bf16.mxu0 0
    %2265 = vmatpush2.bf16.xpose.msra.mxu0 0
    %2266 = vmatprep.subr.bf16.mxu0 0
    %2267 = vmatpush2.bf16.xpose.msra.mxu0 0
    %2268 = vmatprep.subr.bf16.mxu0 0
    %2269 = vmatpush2.bf16.xpose.msra.mxu0 0
    %2270 = vmatprep.mubr.bf16.mxu0 0
    %2271 = vmatmul.mubr.bf16.gmra.mxu0 %v2233
    %v2272 = vpop.f32.mrf.mxu0
    %v2273 = vadd.f32 0.0, %v2272
    %v2274 = vpop.f32.mrf.mxu0
    %v2275 = vpop.f32.mrf.mxu0
    %v2276 = vpop.f32.mrf.mxu0
    %2277 = vdwg.mxu0
    %2278 = vrot.lane.b32.xlu0 %v1940, 96
    %v2279 = vpop.permute.xlu0 %2278
    %2281 = vrot.lane.b32.xlu0 %v2062, 96
    %v2282 = vpop.permute.xlu0 %2281
    %v2284 = vsel %vm648, %v2279, 0
    %v2287 = vsel %vm648, %v2282, 0
    %2289 = vmatprep.subr.bf16.mxu0 0
    %2290 = vmatpush1.bf16.xpose.msra.mxu0 0
    %2291 = vmatprep.subr.bf16.mxu0 0
    %2292 = vmatpush1.bf16.xpose.msra.mxu0 0
    %2293 = vmatprep.subr.bf16.mxu0 0
    %2294 = vmatpush1.bf16.xpose.msra.mxu0 0
    %2295 = vmatprep.subr.bf16.mxu0 0
    %2296 = vmatpush1.bf16.xpose.msra.mxu0 0
    %2297 = vmatprep.subr.bf16.mxu0 0
    %2298 = vmatpush1.bf16.xpose.msra.mxu0 0
    %2299 = vmatprep.subr.bf16.mxu0 0
    %2300 = vmatpush1.bf16.xpose.msra.mxu0 0
    %2301 = vmatprep.subr.bf16.mxu0 0
    %2302 = vmatpush1.bf16.xpose.msra.mxu0 0
    %2303 = vmatprep.subr.bf16.mxu0 0
    %2304 = vmatpush1.bf16.xpose.msra.mxu0 %v2287
    %2305 = vmatprep.subr.bf16.mxu0 0
    %2306 = vmatpush2.bf16.xpose.msra.mxu0 0
    %2307 = vmatprep.subr.bf16.mxu0 0
    %2308 = vmatpush2.bf16.xpose.msra.mxu0 0
    %2309 = vmatprep.subr.bf16.mxu0 0
    %2310 = vmatpush2.bf16.xpose.msra.mxu0 0
    %2311 = vmatprep.subr.bf16.mxu0 0
    %2312 = vmatpush2.bf16.xpose.msra.mxu0 0
    %2313 = vmatprep.subr.bf16.mxu0 0
    %2314 = vmatpush2.bf16.xpose.msra.mxu0 0
    %2315 = vmatprep.subr.bf16.mxu0 0
    %2316 = vmatpush2.bf16.xpose.msra.mxu0 0
    %2317 = vmatprep.subr.bf16.mxu0 0
    %2318 = vmatpush2.bf16.xpose.msra.mxu0 0
    %2319 = vmatprep.subr.bf16.mxu0 0
    %2320 = vmatpush2.bf16.xpose.msra.mxu0 0
    %2321 = vmatprep.mubr.bf16.mxu0 0
    %2322 = vmatmul.mubr.bf16.gmra.mxu0 %v2284
    %v2323 = vpop.f32.mrf.mxu0
    %v2324 = vadd.f32 0.0, %v2323
    %v2325 = vpop.f32.mrf.mxu0
    %v2326 = vpop.f32.mrf.mxu0
    %v2327 = vpop.f32.mrf.mxu0
    %2328 = vdwg.mxu0
    %2329 = vrot.lane.b32.xlu0 %v1941, 96
    %v2330 = vpop.permute.xlu0 %2329
    %2332 = vrot.lane.b32.xlu0 %v2063, 96
    %v2333 = vpop.permute.xlu0 %2332
    %v2335 = vsel %vm648, %v2330, 0
    %v2338 = vsel %vm648, %v2333, 0
    %2340 = vmatprep.subr.bf16.mxu0 0
    %2341 = vmatpush1.bf16.xpose.msra.mxu0 0
    %2342 = vmatprep.subr.bf16.mxu0 0
    %2343 = vmatpush1.bf16.xpose.msra.mxu0 0
    %2344 = vmatprep.subr.bf16.mxu0 0
    %2345 = vmatpush1.bf16.xpose.msra.mxu0 0
    %2346 = vmatprep.subr.bf16.mxu0 0
    %2347 = vmatpush1.bf16.xpose.msra.mxu0 0
    %2348 = vmatprep.subr.bf16.mxu0 0
    %2349 = vmatpush1.bf16.xpose.msra.mxu0 0
    %2350 = vmatprep.subr.bf16.mxu0 0
    %2351 = vmatpush1.bf16.xpose.msra.mxu0 0
    %2352 = vmatprep.subr.bf16.mxu0 0
    %2353 = vmatpush1.bf16.xpose.msra.mxu0 0
    %2354 = vmatprep.subr.bf16.mxu0 0
    %2355 = vmatpush1.bf16.xpose.msra.mxu0 %v2338
    %2356 = vmatprep.subr.bf16.mxu0 0
    %2357 = vmatpush2.bf16.xpose.msra.mxu0 0
    %2358 = vmatprep.subr.bf16.mxu0 0
    %2359 = vmatpush2.bf16.xpose.msra.mxu0 0
    %2360 = vmatprep.subr.bf16.mxu0 0
    %2361 = vmatpush2.bf16.xpose.msra.mxu0 0
    %2362 = vmatprep.subr.bf16.mxu0 0
    %2363 = vmatpush2.bf16.xpose.msra.mxu0 0
    %2364 = vmatprep.subr.bf16.mxu0 0
    %2365 = vmatpush2.bf16.xpose.msra.mxu0 0
    %2366 = vmatprep.subr.bf16.mxu0 0
    %2367 = vmatpush2.bf16.xpose.msra.mxu0 0
    %2368 = vmatprep.subr.bf16.mxu0 0
    %2369 = vmatpush2.bf16.xpose.msra.mxu0 0
    %2370 = vmatprep.subr.bf16.mxu0 0
    %2371 = vmatpush2.bf16.xpose.msra.mxu0 0
    %2372 = vmatprep.mubr.bf16.mxu0 0
    %2373 = vmatmul.mubr.bf16.gmra.mxu0 %v2335
    %v2374 = vpop.f32.mrf.mxu0
    %v2375 = vadd.f32 0.0, %v2374
    %v2376 = vpop.f32.mrf.mxu0
    %v2377 = vpop.f32.mrf.mxu0
    %v2378 = vpop.f32.mrf.mxu0
    %2379 = vdwg.mxu0
    %2380 = vrot.lane.b32.xlu0 %v1940, 64
    %v2381 = vpop.permute.xlu0 %2380
    %2382 = vrot.lane.b32.xlu0 %v2062, 64
    %v2383 = vpop.permute.xlu0 %2382
    %v2385 = vsel %vm648, %v2381, 0
    %v2388 = vsel %vm648, %v2383, 0
    %2390 = vmatprep.subr.bf16.mxu0 0
    %2391 = vmatpush1.bf16.xpose.msra.mxu0 0
    %2392 = vmatprep.subr.bf16.mxu0 0
    %2393 = vmatpush1.bf16.xpose.msra.mxu0 0
    %2394 = vmatprep.subr.bf16.mxu0 0
    %2395 = vmatpush1.bf16.xpose.msra.mxu0 0
    %2396 = vmatprep.subr.bf16.mxu0 0
    %2397 = vmatpush1.bf16.xpose.msra.mxu0 0
    %2398 = vmatprep.subr.bf16.mxu0 0
    %2399 = vmatpush1.bf16.xpose.msra.mxu0 0
    %2400 = vmatprep.subr.bf16.mxu0 0
    %2401 = vmatpush1.bf16.xpose.msra.mxu0 0
    %2402 = vmatprep.subr.bf16.mxu0 0
    %2403 = vmatpush1.bf16.xpose.msra.mxu0 0
    %2404 = vmatprep.subr.bf16.mxu0 0
    %2405 = vmatpush1.bf16.xpose.msra.mxu0 %v2388
    %2406 = vmatprep.subr.bf16.mxu0 0
    %2407 = vmatpush2.bf16.xpose.msra.mxu0 0
    %2408 = vmatprep.subr.bf16.mxu0 0
    %2409 = vmatpush2.bf16.xpose.msra.mxu0 0
    %2410 = vmatprep.subr.bf16.mxu0 0
    %2411 = vmatpush2.bf16.xpose.msra.mxu0 0
    %2412 = vmatprep.subr.bf16.mxu0 0
    %2413 = vmatpush2.bf16.xpose.msra.mxu0 0
    %2414 = vmatprep.subr.bf16.mxu0 0
    %2415 = vmatpush2.bf16.xpose.msra.mxu0 0
    %2416 = vmatprep.subr.bf16.mxu0 0
    %2417 = vmatpush2.bf16.xpose.msra.mxu0 0
    %2418 = vmatprep.subr.bf16.mxu0 0
    %2419 = vmatpush2.bf16.xpose.msra.mxu0 0
    %2420 = vmatprep.subr.bf16.mxu0 0
    %2421 = vmatpush2.bf16.xpose.msra.mxu0 0
    %2422 = vmatprep.mubr.bf16.mxu0 0
    %2423 = vmatmul.mubr.bf16.gmra.mxu0 %v2385
    %v2424 = vpop.f32.mrf.mxu0
    %v2425 = vadd.f32 0.0, %v2424
    %v2426 = vpop.f32.mrf.mxu0
    %v2427 = vpop.f32.mrf.mxu0
    %v2428 = vpop.f32.mrf.mxu0
    %2429 = vdwg.mxu0
    %2430 = vrot.lane.b32.xlu0 %v1941, 64
    %v2431 = vpop.permute.xlu0 %2430
    %2432 = vrot.lane.b32.xlu0 %v2063, 64
    %v2433 = vpop.permute.xlu0 %2432
    %v2435 = vsel %vm648, %v2431, 0
    %v2438 = vsel %vm648, %v2433, 0
    %2440 = vmatprep.subr.bf16.mxu0 0
    %2441 = vmatpush1.bf16.xpose.msra.mxu0 0
    %2442 = vmatprep.subr.bf16.mxu0 0
    %2443 = vmatpush1.bf16.xpose.msra.mxu0 0
    %2444 = vmatprep.subr.bf16.mxu0 0
    %2445 = vmatpush1.bf16.xpose.msra.mxu0 0
    %2446 = vmatprep.subr.bf16.mxu0 0
    %2447 = vmatpush1.bf16.xpose.msra.mxu0 0
    %2448 = vmatprep.subr.bf16.mxu0 0
    %2449 = vmatpush1.bf16.xpose.msra.mxu0 0
    %2450 = vmatprep.subr.bf16.mxu0 0
    %2451 = vmatpush1.bf16.xpose.msra.mxu0 0
    %2452 = vmatprep.subr.bf16.mxu0 0
    %2453 = vmatpush1.bf16.xpose.msra.mxu0 0
    %2454 = vmatprep.subr.bf16.mxu0 0
    %2455 = vmatpush1.bf16.xpose.msra.mxu0 %v2438
    %2456 = vmatprep.subr.bf16.mxu0 0
    %2457 = vmatpush2.bf16.xpose.msra.mxu0 0
    %2458 = vmatprep.subr.bf16.mxu0 0
    %2459 = vmatpush2.bf16.xpose.msra.mxu0 0
    %2460 = vmatprep.subr.bf16.mxu0 0
    %2461 = vmatpush2.bf16.xpose.msra.mxu0 0
    %2462 = vmatprep.subr.bf16.mxu0 0
    %2463 = vmatpush2.bf16.xpose.msra.mxu0 0
    %2464 = vmatprep.subr.bf16.mxu0 0
    %2465 = vmatpush2.bf16.xpose.msra.mxu0 0
    %2466 = vmatprep.subr.bf16.mxu0 0
    %2467 = vmatpush2.bf16.xpose.msra.mxu0 0
    %2468 = vmatprep.subr.bf16.mxu0 0
    %2469 = vmatpush2.bf16.xpose.msra.mxu0 0
    %2470 = vmatprep.subr.bf16.mxu0 0
    %2471 = vmatpush2.bf16.xpose.msra.mxu0 0
    %2472 = vmatprep.mubr.bf16.mxu0 0
    %2473 = vmatmul.mubr.bf16.gmra.mxu0 %v2435
    %v2474 = vpop.f32.mrf.mxu0
    %v2475 = vadd.f32 0.0, %v2474
    %v2476 = vpop.f32.mrf.mxu0
    %v2477 = vpop.f32.mrf.mxu0
    %v2478 = vpop.f32.mrf.mxu0
    %2479 = vdwg.mxu0
    %2480 = vrot.lane.b32.xlu0 %v1940, 32
    %v2481 = vpop.permute.xlu0 %2480
    %2482 = vrot.lane.b32.xlu0 %v2062, 32
    %v2483 = vpop.permute.xlu0 %2482
    %v2485 = vsel %vm648, %v2481, 0
    %v2488 = vsel %vm648, %v2483, 0
    %2490 = vmatprep.subr.bf16.mxu0 0
    %2491 = vmatpush1.bf16.xpose.msra.mxu0 0
    %2492 = vmatprep.subr.bf16.mxu0 0
    %2493 = vmatpush1.bf16.xpose.msra.mxu0 0
    %2494 = vmatprep.subr.bf16.mxu0 0
    %2495 = vmatpush1.bf16.xpose.msra.mxu0 0
    %2496 = vmatprep.subr.bf16.mxu0 0
    %2497 = vmatpush1.bf16.xpose.msra.mxu0 0
    %2498 = vmatprep.subr.bf16.mxu0 0
    %2499 = vmatpush1.bf16.xpose.msra.mxu0 0
    %2500 = vmatprep.subr.bf16.mxu0 0
    %2501 = vmatpush1.bf16.xpose.msra.mxu0 0
    %2502 = vmatprep.subr.bf16.mxu0 0
    %2503 = vmatpush1.bf16.xpose.msra.mxu0 0
    %2504 = vmatprep.subr.bf16.mxu0 0
    %2505 = vmatpush1.bf16.xpose.msra.mxu0 %v2488
    %2506 = vmatprep.subr.bf16.mxu0 0
    %2507 = vmatpush2.bf16.xpose.msra.mxu0 0
    %2508 = vmatprep.subr.bf16.mxu0 0
    %2509 = vmatpush2.bf16.xpose.msra.mxu0 0
    %2510 = vmatprep.subr.bf16.mxu0 0
    %2511 = vmatpush2.bf16.xpose.msra.mxu0 0
    %2512 = vmatprep.subr.bf16.mxu0 0
    %2513 = vmatpush2.bf16.xpose.msra.mxu0 0
    %2514 = vmatprep.subr.bf16.mxu0 0
    %2515 = vmatpush2.bf16.xpose.msra.mxu0 0
    %2516 = vmatprep.subr.bf16.mxu0 0
    %2517 = vmatpush2.bf16.xpose.msra.mxu0 0
    %2518 = vmatprep.subr.bf16.mxu0 0
    %2519 = vmatpush2.bf16.xpose.msra.mxu0 0
    %2520 = vmatprep.subr.bf16.mxu0 0
    %2521 = vmatpush2.bf16.xpose.msra.mxu0 0
    %2522 = vmatprep.mubr.bf16.mxu0 0
    %2523 = vmatmul.mubr.bf16.gmra.mxu0 %v2485
    %v2524 = vpop.f32.mrf.mxu0
    %v2525 = vadd.f32 0.0, %v2524
    %v2526 = vpop.f32.mrf.mxu0
    %v2527 = vpop.f32.mrf.mxu0
    %v2528 = vpop.f32.mrf.mxu0
    %2529 = vdwg.mxu0
    %2530 = vrot.lane.b32.xlu0 %v1941, 32
    %v2531 = vpop.permute.xlu0 %2530
    %2532 = vrot.lane.b32.xlu0 %v2063, 32
    %v2533 = vpop.permute.xlu0 %2532
    %v2535 = vsel %vm648, %v2531, 0
    %v2538 = vsel %vm648, %v2533, 0
    %2540 = vmatprep.subr.bf16.mxu0 0
    %2541 = vmatpush1.bf16.xpose.msra.mxu0 0
    %2542 = vmatprep.subr.bf16.mxu0 0
    %2543 = vmatpush1.bf16.xpose.msra.mxu0 0
    %2544 = vmatprep.subr.bf16.mxu0 0
    %2545 = vmatpush1.bf16.xpose.msra.mxu0 0
    %2546 = vmatprep.subr.bf16.mxu0 0
    %2547 = vmatpush1.bf16.xpose.msra.mxu0 0
    %2548 = vmatprep.subr.bf16.mxu0 0
    %2549 = vmatpush1.bf16.xpose.msra.mxu0 0
    %2550 = vmatprep.subr.bf16.mxu0 0
    %2551 = vmatpush1.bf16.xpose.msra.mxu0 0
    %2552 = vmatprep.subr.bf16.mxu0 0
    %2553 = vmatpush1.bf16.xpose.msra.mxu0 0
    %2554 = vmatprep.subr.bf16.mxu0 0
    %2555 = vmatpush1.bf16.xpose.msra.mxu0 %v2538
    %2556 = vmatprep.subr.bf16.mxu0 0
    %2557 = vmatpush2.bf16.xpose.msra.mxu0 0
    %2558 = vmatprep.subr.bf16.mxu0 0
    %2559 = vmatpush2.bf16.xpose.msra.mxu0 0
    %2560 = vmatprep.subr.bf16.mxu0 0
    %2561 = vmatpush2.bf16.xpose.msra.mxu0 0
    %2562 = vmatprep.subr.bf16.mxu0 0
    %2563 = vmatpush2.bf16.xpose.msra.mxu0 0
    %2564 = vmatprep.subr.bf16.mxu0 0
    %2565 = vmatpush2.bf16.xpose.msra.mxu0 0
    %2566 = vmatprep.subr.bf16.mxu0 0
    %2567 = vmatpush2.bf16.xpose.msra.mxu0 0
    %2568 = vmatprep.subr.bf16.mxu0 0
    %2569 = vmatpush2.bf16.xpose.msra.mxu0 0
    %2570 = vmatprep.subr.bf16.mxu0 0
    %2571 = vmatpush2.bf16.xpose.msra.mxu0 0
    %2572 = vmatprep.mubr.bf16.mxu0 0
    %2573 = vmatmul.mubr.bf16.gmra.mxu0 %v2535
    %v2574 = vpop.f32.mrf.mxu0
    %v2575 = vadd.f32 0.0, %v2574
    %v2576 = vpop.f32.mrf.mxu0
    %v2577 = vpop.f32.mrf.mxu0
    %v2578 = vpop.f32.mrf.mxu0
    %2579 = vdwg.mxu0
    %vm2580 = vcmask 130048
    %v2581 = vsel %vm2580, %v2227, -inf
    %2582 = vmax.xlane.f32.xlu0 %v2581
    %v2583 = vpop.xlane.xlu0 %2582
    %v2584 = vsel %vm2580, %v2273, -inf
    %2585 = vmax.xlane.f32.xlu0 %v2584
    %v2586 = vpop.xlane.xlu0 %2585
    %v2587 = vsel %vm2580, %v2324, -inf
    %2588 = vmax.xlane.f32.xlu0 %v2587
    %v2589 = vpop.xlane.xlu0 %2588
    %v2590 = vsel %vm2580, %v2375, -inf
    %2591 = vmax.xlane.f32.xlu0 %v2590
    %v2592 = vpop.xlane.xlu0 %2591
    %v2593 = vsel %vm2580, %v2425, -inf
    %2594 = vmax.xlane.f32.xlu0 %v2593
    %v2595 = vpop.xlane.xlu0 %2594
    %v2596 = vsel %vm2580, %v2475, -inf
    %2597 = vmax.xlane.f32.xlu0 %v2596
    %v2598 = vpop.xlane.xlu0 %2597
    %v2599 = vsel %vm2580, %v2525, -inf
    %2600 = vmax.xlane.f32.xlu0 %v2599
    %v2601 = vpop.xlane.xlu0 %2600
    %v2602 = vsel %vm2580, %v2575, -inf
    %2603 = vmax.xlane.f32.xlu0 %v2602
    %v2604 = vpop.xlane.xlu0 %2603
    %v2605 = vsub.f32 %v2227, %v2583
    %v2606 = vsub.f32 %v2273, %v2586
    %v2607 = vsub.f32 %v2324, %v2589
    %v2608 = vsub.f32 %v2375, %v2592
    %v2609 = vsub.f32 %v2425, %v2595
    %v2610 = vsub.f32 %v2475, %v2598
    %v2611 = vsub.f32 %v2525, %v2601
    %v2612 = vsub.f32 %v2575, %v2604
    %v2613 = vmul.f32 %v2605, 1.442695
    %v2614 = vpow.pop %v2613
    %v2615 = vmul.f32 %v2606, 1.442695
    %v2616 = vpow.pop %v2615
    %v2617 = vmul.f32 %v2607, 1.442695
    %v2618 = vpow.pop %v2617
    %v2619 = vmul.f32 %v2608, 1.442695
    %v2620 = vpow.pop %v2619
    %v2621 = vmul.f32 %v2609, 1.442695
    %v2622 = vpow.pop %v2621
    %v2623 = vmul.f32 %v2610, 1.442695
    %v2624 = vpow.pop %v2623
    %v2625 = vmul.f32 %v2611, 1.442695
    %v2626 = vpow.pop %v2625
    %v2627 = vmul.f32 %v2612, 1.442695
    %v2628 = vpow.pop %v2627
    %v2629 = vsel %vm2580, %v2614, 0.0
    %2630 = vadd.xlane.f32.xlu0 %v2629
    %v2631 = vpop.xlane.xlu0 %2630
    %v2632 = vsel %vm2580, %v2616, 0.0
    %2633 = vadd.xlane.f32.xlu0 %v2632
    %v2634 = vpop.xlane.xlu0 %2633
    %v2635 = vsel %vm2580, %v2618, 0.0
    %2636 = vadd.xlane.f32.xlu0 %v2635
    %v2637 = vpop.xlane.xlu0 %2636
    %v2638 = vsel %vm2580, %v2620, 0.0
    %2639 = vadd.xlane.f32.xlu0 %v2638
    %v2640 = vpop.xlane.xlu0 %2639
    %v2641 = vsel %vm2580, %v2622, 0.0
    %2642 = vadd.xlane.f32.xlu0 %v2641
    %v2643 = vpop.xlane.xlu0 %2642
    %v2644 = vsel %vm2580, %v2624, 0.0
    %2645 = vadd.xlane.f32.xlu0 %v2644
    %v2646 = vpop.xlane.xlu0 %2645
    %v2647 = vsel %vm2580, %v2626, 0.0
    %2648 = vadd.xlane.f32.xlu0 %v2647
    %v2649 = vpop.xlane.xlu0 %2648
    %v2650 = vsel %vm2580, %v2628, 0.0
    %2651 = vadd.xlane.f32.xlu0 %v2650
    %v2652 = vpop.xlane.xlu0 %2651
    %v2653 = vrcp.pop %v2631
    %v2654 = vrcp.pop %v2634
    %v2655 = vrcp.pop %v2637
    %v2656 = vrcp.pop %v2640
    %v2657 = vrcp.pop %v2643
    %v2658 = vrcp.pop %v2646
    %v2659 = vrcp.pop %v2649
    %v2660 = vrcp.pop %v2652
    %v2661 = vmul.f32 %v2614, %v2653
    %v2662 = vmul.f32 %v2616, %v2654
    %v2663 = vmul.f32 %v2618, %v2655
    %v2664 = vmul.f32 %v2620, %v2656
    %v2665 = vmul.f32 %v2622, %v2657
    %v2666 = vmul.f32 %v2624, %v2658
    %v2667 = vmul.f32 %v2626, %v2659
    %v2668 = vmul.f32 %v2628, %v2660
    %v2669 = vpack.c.bf16 %v2661, %v2661
    %v2670 = vpack.c.bf16 %v2662, %v2662
    %v2671 = vpack.c.bf16 %v2663, %v2663
    %v2672 = vpack.c.bf16 %v2664, %v2664
    %v2673 = vpack.c.bf16 %v2665, %v2665
    %v2674 = vpack.c.bf16 %v2666, %v2666
    %v2675 = vpack.c.bf16 %v2667, %v2667
    %v2676 = vpack.c.bf16 %v2668, %v2668
    %v2678 = vsel %vm2580, %v2669, 0
    %2680 = vmatprep.subr.bf16.mxu0 0
    %2681 = vmatpush1.bf16.msra.mxu0 0
    %2682 = vmatprep.subr.bf16.mxu0 0
    %2683 = vmatpush1.bf16.msra.mxu0 0
    %2684 = vmatprep.subr.bf16.mxu0 0
    %2685 = vmatpush1.bf16.msra.mxu0 0
    %2686 = vmatprep.subr.bf16.mxu0 0
    %2687 = vmatpush1.bf16.msra.mxu0 0
    %2688 = vmatprep.subr.bf16.mxu0 0
    %2689 = vmatpush1.bf16.msra.mxu0 0
    %2690 = vmatprep.subr.bf16.mxu0 0
    %2691 = vmatpush1.bf16.msra.mxu0 0
    %2692 = vmatprep.subr.bf16.mxu0 0
    %2693 = vmatpush1.bf16.msra.mxu0 0
    %2694 = vmatprep.subr.bf16.mxu0 0
    %2695 = vmatpush1.bf16.msra.mxu0 %v2184
    %2696 = vmatprep.subr.bf16.mxu0 0
    %2697 = vmatpush2.bf16.msra.mxu0 0
    %2698 = vmatprep.subr.bf16.mxu0 0
    %2699 = vmatpush2.bf16.msra.mxu0 0
    %2700 = vmatprep.subr.bf16.mxu0 0
    %2701 = vmatpush2.bf16.msra.mxu0 0
    %2702 = vmatprep.subr.bf16.mxu0 0
    %2703 = vmatpush2.bf16.msra.mxu0 0
    %2704 = vmatprep.subr.bf16.mxu0 0
    %2705 = vmatpush2.bf16.msra.mxu0 0
    %2706 = vmatprep.subr.bf16.mxu0 0
    %2707 = vmatpush2.bf16.msra.mxu0 0
    %2708 = vmatprep.subr.bf16.mxu0 0
    %2709 = vmatpush2.bf16.msra.mxu0 0
    %2710 = vmatprep.subr.bf16.mxu0 0
    %2711 = vmatpush2.bf16.msra.mxu0 0
    %2712 = vmatprep.mubr.bf16.mxu0 0
    %2713 = vmatmul.mubr.bf16.gmra.mxu0 %v2678
    %v2714 = vpop.f32.mrf.mxu0
    %v2715 = vadd.f32 0.0, %v2714
    %v2716 = vpop.f32.mrf.mxu0
    %v2717 = vpop.f32.mrf.mxu0
    %v2718 = vpop.f32.mrf.mxu0
    %2719 = vdwg.mxu0
    %v2721 = vsel %vm2580, %v2670, 0
    %2723 = vmatprep.subr.bf16.mxu0 0
    %2724 = vmatpush1.bf16.msra.mxu0 0
    %2725 = vmatprep.subr.bf16.mxu0 0
    %2726 = vmatpush1.bf16.msra.mxu0 0
    %2727 = vmatprep.subr.bf16.mxu0 0
    %2728 = vmatpush1.bf16.msra.mxu0 0
    %2729 = vmatprep.subr.bf16.mxu0 0
    %2730 = vmatpush1.bf16.msra.mxu0 0
    %2731 = vmatprep.subr.bf16.mxu0 0
    %2732 = vmatpush1.bf16.msra.mxu0 0
    %2733 = vmatprep.subr.bf16.mxu0 0
    %2734 = vmatpush1.bf16.msra.mxu0 0
    %2735 = vmatprep.subr.bf16.mxu0 0
    %2736 = vmatpush1.bf16.msra.mxu0 0
    %2737 = vmatprep.subr.bf16.mxu0 0
    %2738 = vmatpush1.bf16.msra.mxu0 %v2185
    %2739 = vmatprep.subr.bf16.mxu0 0
    %2740 = vmatpush2.bf16.msra.mxu0 0
    %2741 = vmatprep.subr.bf16.mxu0 0
    %2742 = vmatpush2.bf16.msra.mxu0 0
    %2743 = vmatprep.subr.bf16.mxu0 0
    %2744 = vmatpush2.bf16.msra.mxu0 0
    %2745 = vmatprep.subr.bf16.mxu0 0
    %2746 = vmatpush2.bf16.msra.mxu0 0
    %2747 = vmatprep.subr.bf16.mxu0 0
    %2748 = vmatpush2.bf16.msra.mxu0 0
    %2749 = vmatprep.subr.bf16.mxu0 0
    %2750 = vmatpush2.bf16.msra.mxu0 0
    %2751 = vmatprep.subr.bf16.mxu0 0
    %2752 = vmatpush2.bf16.msra.mxu0 0
    %2753 = vmatprep.subr.bf16.mxu0 0
    %2754 = vmatpush2.bf16.msra.mxu0 0
    %2755 = vmatprep.mubr.bf16.mxu0 0
    %2756 = vmatmul.mubr.bf16.gmra.mxu0 %v2721
    %v2757 = vpop.f32.mrf.mxu0
    %v2758 = vadd.f32 0.0, %v2757
    %v2759 = vpop.f32.mrf.mxu0
    %v2760 = vpop.f32.mrf.mxu0
    %v2761 = vpop.f32.mrf.mxu0
    %2762 = vdwg.mxu0
    %v2763 = vpack.c.bf16 %v2758, %v2715
    %v2764 = vld [vmem:[#allocation17] sm:$0xf]
    %v2765 = vld [vmem:[#allocation17 + $0x4] sm:$0xf]
    %v2766 = vld [vmem:[#allocation17 + $0x8] sm:$0xf]
    %v2767 = vld [vmem:[#allocation17 + $0xc] sm:$0xf]
    %2769 = vrot.lane.b32.xlu0 %v2184, 96
    %v2770 = vpop.permute.xlu0 %2769
    %v2773 = vsel %vm2580, %v2671, 0
    %2775 = vmatprep.subr.bf16.mxu0 0
    %2776 = vmatpush1.bf16.msra.mxu0 0
    %2777 = vmatprep.subr.bf16.mxu0 0
    %2778 = vmatpush1.bf16.msra.mxu0 0
    %2779 = vmatprep.subr.bf16.mxu0 0
    %2780 = vmatpush1.bf16.msra.mxu0 0
    %2781 = vmatprep.subr.bf16.mxu0 0
    %2782 = vmatpush1.bf16.msra.mxu0 0
    %2783 = vmatprep.subr.bf16.mxu0 0
    %2784 = vmatpush1.bf16.msra.mxu0 0
    %2785 = vmatprep.subr.bf16.mxu0 0
    %2786 = vmatpush1.bf16.msra.mxu0 0
    %2787 = vmatprep.subr.bf16.mxu0 0
    %2788 = vmatpush1.bf16.msra.mxu0 0
    %2789 = vmatprep.subr.bf16.mxu0 0
    %2790 = vmatpush1.bf16.msra.mxu0 %v2770
    %2791 = vmatprep.subr.bf16.mxu0 0
    %2792 = vmatpush2.bf16.msra.mxu0 0
    %2793 = vmatprep.subr.bf16.mxu0 0
    %2794 = vmatpush2.bf16.msra.mxu0 0
    %2795 = vmatprep.subr.bf16.mxu0 0
    %2796 = vmatpush2.bf16.msra.mxu0 0
    %2797 = vmatprep.subr.bf16.mxu0 0
    %2798 = vmatpush2.bf16.msra.mxu0 0
    %2799 = vmatprep.subr.bf16.mxu0 0
    %2800 = vmatpush2.bf16.msra.mxu0 0
    %2801 = vmatprep.subr.bf16.mxu0 0
    %2802 = vmatpush2.bf16.msra.mxu0 0
    %2803 = vmatprep.subr.bf16.mxu0 0
    %2804 = vmatpush2.bf16.msra.mxu0 0
    %2805 = vmatprep.subr.bf16.mxu0 0
    %2806 = vmatpush2.bf16.msra.mxu0 0
    %2807 = vmatprep.mubr.bf16.mxu0 0
    %2808 = vmatmul.mubr.bf16.gmra.mxu0 %v2773
    %v2809 = vpop.f32.mrf.mxu0
    %v2810 = vadd.f32 0.0, %v2809
    %v2811 = vpop.f32.mrf.mxu0
    %v2812 = vpop.f32.mrf.mxu0
    %v2813 = vpop.f32.mrf.mxu0
    %2814 = vdwg.mxu0
    %2816 = vrot.lane.b32.xlu0 %v2185, 96
    %v2817 = vpop.permute.xlu0 %2816
    %v2820 = vsel %vm2580, %v2672, 0
    %2822 = vmatprep.subr.bf16.mxu0 0
    %2823 = vmatpush1.bf16.msra.mxu0 0
    %2824 = vmatprep.subr.bf16.mxu0 0
    %2825 = vmatpush1.bf16.msra.mxu0 0
    %2826 = vmatprep.subr.bf16.mxu0 0
    %2827 = vmatpush1.bf16.msra.mxu0 0
    %2828 = vmatprep.subr.bf16.mxu0 0
    %2829 = vmatpush1.bf16.msra.mxu0 0
    %2830 = vmatprep.subr.bf16.mxu0 0
    %2831 = vmatpush1.bf16.msra.mxu0 0
    %2832 = vmatprep.subr.bf16.mxu0 0
    %2833 = vmatpush1.bf16.msra.mxu0 0
    %2834 = vmatprep.subr.bf16.mxu0 0
    %2835 = vmatpush1.bf16.msra.mxu0 0
    %2836 = vmatprep.subr.bf16.mxu0 0
    %2837 = vmatpush1.bf16.msra.mxu0 %v2817
    %2838 = vmatprep.subr.bf16.mxu0 0
    %2839 = vmatpush2.bf16.msra.mxu0 0
    %2840 = vmatprep.subr.bf16.mxu0 0
    %2841 = vmatpush2.bf16.msra.mxu0 0
    %2842 = vmatprep.subr.bf16.mxu0 0
    %2843 = vmatpush2.bf16.msra.mxu0 0
    %2844 = vmatprep.subr.bf16.mxu0 0
    %2845 = vmatpush2.bf16.msra.mxu0 0
    %2846 = vmatprep.subr.bf16.mxu0 0
    %2847 = vmatpush2.bf16.msra.mxu0 0
    %2848 = vmatprep.subr.bf16.mxu0 0
    %2849 = vmatpush2.bf16.msra.mxu0 0
    %2850 = vmatprep.subr.bf16.mxu0 0
    %2851 = vmatpush2.bf16.msra.mxu0 0
    %2852 = vmatprep.subr.bf16.mxu0 0
    %2853 = vmatpush2.bf16.msra.mxu0 0
    %2854 = vmatprep.mubr.bf16.mxu0 0
    %2855 = vmatmul.mubr.bf16.gmra.mxu0 %v2820
    %v2856 = vpop.f32.mrf.mxu0
    %v2857 = vadd.f32 0.0, %v2856
    %v2858 = vpop.f32.mrf.mxu0
    %v2859 = vpop.f32.mrf.mxu0
    %v2860 = vpop.f32.mrf.mxu0
    %2861 = vdwg.mxu0
    %v2862 = vpack.c.bf16 %v2857, %v2810
    %v2863 = vld [vmem:[#allocation17 + $0x10] sm:$0xf]
    %v2864 = vld [vmem:[#allocation17 + $0x14] sm:$0xf]
    %v2865 = vld [vmem:[#allocation17 + $0x18] sm:$0xf]
    %v2866 = vld [vmem:[#allocation17 + $0x1c] sm:$0xf]
    %v2871 = vunpack.c.l.b16 %v2863
    %v2872 = vunpack.c.l.b16 %v2864
    %v2873 = vunpack.c.l.b16 %v2865
    %v2874 = vunpack.c.l.b16 %v2866
    %v2875 = vpack.c.b16 %v2872, %v2871
    %v2876 = vpack.c.b16 %v2874, %v2873
    %v2880 = vsel %vm648, %v2862, 0
    %2882 = vmatprep.subr.bf16.mxu0 0
    %2883 = vmatpush1.bf16.msra.mxu0 0
    %2884 = vmatprep.subr.bf16.mxu0 0
    %2885 = vmatpush1.bf16.msra.mxu0 0
    %2886 = vmatprep.subr.bf16.mxu0 0
    %2887 = vmatpush1.bf16.msra.mxu0 0
    %2888 = vmatprep.subr.bf16.mxu0 0
    %2889 = vmatpush1.bf16.msra.mxu0 0
    %2890 = vmatprep.subr.bf16.mxu0 0
    %2891 = vmatpush1.bf16.msra.mxu0 0
    %2892 = vmatprep.subr.bf16.mxu0 0
    %2893 = vmatpush1.bf16.msra.mxu0 0
    %2894 = vmatprep.subr.bf16.mxu0 0
    %2895 = vmatpush1.bf16.msra.mxu0 %v2876
    %2896 = vmatprep.subr.bf16.mxu0 0
    %2897 = vmatpush1.bf16.msra.mxu0 %v2875
    %2898 = vmatprep.subr.bf16.mxu0 0
    %2899 = vmatpush2.bf16.msra.mxu0 0
    %2900 = vmatprep.subr.bf16.mxu0 0
    %2901 = vmatpush2.bf16.msra.mxu0 0
    %2902 = vmatprep.subr.bf16.mxu0 0
    %2903 = vmatpush2.bf16.msra.mxu0 0
    %2904 = vmatprep.subr.bf16.mxu0 0
    %2905 = vmatpush2.bf16.msra.mxu0 0
    %2906 = vmatprep.subr.bf16.mxu0 0
    %2907 = vmatpush2.bf16.msra.mxu0 0
    %2908 = vmatprep.subr.bf16.mxu0 0
    %2909 = vmatpush2.bf16.msra.mxu0 0
    %2910 = vmatprep.subr.bf16.mxu0 0
    %2911 = vmatpush2.bf16.msra.mxu0 0
    %2912 = vmatprep.subr.bf16.mxu0 0
    %2913 = vmatpush2.bf16.msra.mxu0 0
    %2914 = vmatprep.mubr.bf16.mxu0 0
    %2915 = vmatmul.mubr.bf16.gmra.mxu0 %v2880
    %v2916 = vpop.f32.mrf.mxu0
    %v2917 = vadd.f32 0.0, %v2916
    %v2918 = vpop.f32.mrf.mxu0
    %v2919 = vpop.f32.mrf.mxu0
    %v2920 = vadd.f32 0.0, %v2919
    %v2921 = vpop.f32.mrf.mxu0
    %2922 = vdwg.mxu0
    %v2927 = vunpack.c.l.b16 %v2764
    %v2928 = vunpack.c.l.b16 %v2765
    %v2929 = vunpack.c.l.b16 %v2766
    %v2930 = vunpack.c.l.b16 %v2767
    %v2931 = vpack.c.b16 %v2928, %v2927
    %v2932 = vpack.c.b16 %v2930, %v2929
    %v2936 = vsel %vm648, %v2763, 0
    %2938 = vmatprep.subr.bf16.mxu0 0
    %2939 = vmatpush1.bf16.msra.mxu0 0
    %2940 = vmatprep.subr.bf16.mxu0 0
    %2941 = vmatpush1.bf16.msra.mxu0 0
    %2942 = vmatprep.subr.bf16.mxu0 0
    %2943 = vmatpush1.bf16.msra.mxu0 0
    %2944 = vmatprep.subr.bf16.mxu0 0
    %2945 = vmatpush1.bf16.msra.mxu0 0
    %2946 = vmatprep.subr.bf16.mxu0 0
    %2947 = vmatpush1.bf16.msra.mxu0 0
    %2948 = vmatprep.subr.bf16.mxu0 0
    %2949 = vmatpush1.bf16.msra.mxu0 0
    %2950 = vmatprep.subr.bf16.mxu0 0
    %2951 = vmatpush1.bf16.msra.mxu0 %v2932
    %2952 = vmatprep.subr.bf16.mxu0 0
    %2953 = vmatpush1.bf16.msra.mxu0 %v2931
    %2954 = vmatprep.subr.bf16.mxu0 0
    %2955 = vmatpush2.bf16.msra.mxu0 0
    %2956 = vmatprep.subr.bf16.mxu0 0
    %2957 = vmatpush2.bf16.msra.mxu0 0
    %2958 = vmatprep.subr.bf16.mxu0 0
    %2959 = vmatpush2.bf16.msra.mxu0 0
    %2960 = vmatprep.subr.bf16.mxu0 0
    %2961 = vmatpush2.bf16.msra.mxu0 0
    %2962 = vmatprep.subr.bf16.mxu0 0
    %2963 = vmatpush2.bf16.msra.mxu0 0
    %2964 = vmatprep.subr.bf16.mxu0 0
    %2965 = vmatpush2.bf16.msra.mxu0 0
    %2966 = vmatprep.subr.bf16.mxu0 0
    %2967 = vmatpush2.bf16.msra.mxu0 0
    %2968 = vmatprep.subr.bf16.mxu0 0
    %2969 = vmatpush2.bf16.msra.mxu0 0
    %2970 = vmatprep.mubr.bf16.mxu0 0
    %2971 = vmatmul.mubr.bf16.gmra.mxu0 %v2936
    %v2972 = vpop.f32.mrf.mxu0
    %v2973 = vadd.f32 %v2917, %v2972
    %v2974 = vpop.f32.mrf.mxu0
    %v2975 = vpop.f32.mrf.mxu0
    %v2976 = vadd.f32 %v2920, %v2975
    %v2977 = vpop.f32.mrf.mxu0
    %2978 = vdwg.mxu0
    %2979 = vrot.lane.b32.xlu0 %v2184, 64
    %v2980 = vpop.permute.xlu0 %2979
    %v2983 = vsel %vm2580, %v2673, 0
    %2985 = vmatprep.subr.bf16.mxu0 0
    %2986 = vmatpush1.bf16.msra.mxu0 0
    %2987 = vmatprep.subr.bf16.mxu0 0
    %2988 = vmatpush1.bf16.msra.mxu0 0
    %2989 = vmatprep.subr.bf16.mxu0 0
    %2990 = vmatpush1.bf16.msra.mxu0 0
    %2991 = vmatprep.subr.bf16.mxu0 0
    %2992 = vmatpush1.bf16.msra.mxu0 0
    %2993 = vmatprep.subr.bf16.mxu0 0
    %2994 = vmatpush1.bf16.msra.mxu0 0
    %2995 = vmatprep.subr.bf16.mxu0 0
    %2996 = vmatpush1.bf16.msra.mxu0 0
    %2997 = vmatprep.subr.bf16.mxu0 0
    %2998 = vmatpush1.bf16.msra.mxu0 0
    %2999 = vmatprep.subr.bf16.mxu0 0
    %3000 = vmatpush1.bf16.msra.mxu0 %v2980
    %3001 = vmatprep.subr.bf16.mxu0 0
    %3002 = vmatpush2.bf16.msra.mxu0 0
    %3003 = vmatprep.subr.bf16.mxu0 0
    %3004 = vmatpush2.bf16.msra.mxu0 0
    %3005 = vmatprep.subr.bf16.mxu0 0
    %3006 = vmatpush2.bf16.msra.mxu0 0
    %3007 = vmatprep.subr.bf16.mxu0 0
    %3008 = vmatpush2.bf16.msra.mxu0 0
    %3009 = vmatprep.subr.bf16.mxu0 0
    %3010 = vmatpush2.bf16.msra.mxu0 0
    %3011 = vmatprep.subr.bf16.mxu0 0
    %3012 = vmatpush2.bf16.msra.mxu0 0
    %3013 = vmatprep.subr.bf16.mxu0 0
    %3014 = vmatpush2.bf16.msra.mxu0 0
    %3015 = vmatprep.subr.bf16.mxu0 0
    %3016 = vmatpush2.bf16.msra.mxu0 0
    %3017 = vmatprep.mubr.bf16.mxu0 0
    %3018 = vmatmul.mubr.bf16.gmra.mxu0 %v2983
    %v3019 = vpop.f32.mrf.mxu0
    %v3020 = vadd.f32 0.0, %v3019
    %v3021 = vpop.f32.mrf.mxu0
    %v3022 = vpop.f32.mrf.mxu0
    %v3023 = vpop.f32.mrf.mxu0
    %3024 = vdwg.mxu0
    %3025 = vrot.lane.b32.xlu0 %v2185, 64
    %v3026 = vpop.permute.xlu0 %3025
    %v3029 = vsel %vm2580, %v2674, 0
    %3031 = vmatprep.subr.bf16.mxu0 0
    %3032 = vmatpush1.bf16.msra.mxu0 0
    %3033 = vmatprep.subr.bf16.mxu0 0
    %3034 = vmatpush1.bf16.msra.mxu0 0
    %3035 = vmatprep.subr.bf16.mxu0 0
    %3036 = vmatpush1.bf16.msra.mxu0 0
    %3037 = vmatprep.subr.bf16.mxu0 0
    %3038 = vmatpush1.bf16.msra.mxu0 0
    %3039 = vmatprep.subr.bf16.mxu0 0
    %3040 = vmatpush1.bf16.msra.mxu0 0
    %3041 = vmatprep.subr.bf16.mxu0 0
    %3042 = vmatpush1.bf16.msra.mxu0 0
    %3043 = vmatprep.subr.bf16.mxu0 0
    %3044 = vmatpush1.bf16.msra.mxu0 0
    %3045 = vmatprep.subr.bf16.mxu0 0
    %3046 = vmatpush1.bf16.msra.mxu0 %v3026
    %3047 = vmatprep.subr.bf16.mxu0 0
    %3048 = vmatpush2.bf16.msra.mxu0 0
    %3049 = vmatprep.subr.bf16.mxu0 0
    %3050 = vmatpush2.bf16.msra.mxu0 0
    %3051 = vmatprep.subr.bf16.mxu0 0
    %3052 = vmatpush2.bf16.msra.mxu0 0
    %3053 = vmatprep.subr.bf16.mxu0 0
    %3054 = vmatpush2.bf16.msra.mxu0 0
    %3055 = vmatprep.subr.bf16.mxu0 0
    %3056 = vmatpush2.bf16.msra.mxu0 0
    %3057 = vmatprep.subr.bf16.mxu0 0
    %3058 = vmatpush2.bf16.msra.mxu0 0
    %3059 = vmatprep.subr.bf16.mxu0 0
    %3060 = vmatpush2.bf16.msra.mxu0 0
    %3061 = vmatprep.subr.bf16.mxu0 0
    %3062 = vmatpush2.bf16.msra.mxu0 0
    %3063 = vmatprep.mubr.bf16.mxu0 0
    %3064 = vmatmul.mubr.bf16.gmra.mxu0 %v3029
    %v3065 = vpop.f32.mrf.mxu0
    %v3066 = vadd.f32 0.0, %v3065
    %v3067 = vpop.f32.mrf.mxu0
    %v3068 = vpop.f32.mrf.mxu0
    %v3069 = vpop.f32.mrf.mxu0
    %3070 = vdwg.mxu0
    %v3071 = vpack.c.bf16 %v3066, %v3020
    %v3072 = vld [vmem:[#allocation17 + $0x20] sm:$0xf]
    %v3073 = vld [vmem:[#allocation17 + $0x24] sm:$0xf]
    %v3074 = vld [vmem:[#allocation17 + $0x28] sm:$0xf]
    %v3075 = vld [vmem:[#allocation17 + $0x2c] sm:$0xf]
    %v3080 = vunpack.c.l.b16 %v3072
    %v3081 = vunpack.c.l.b16 %v3073
    %v3082 = vunpack.c.l.b16 %v3074
    %v3083 = vunpack.c.l.b16 %v3075
    %v3084 = vpack.c.b16 %v3081, %v3080
    %v3085 = vpack.c.b16 %v3083, %v3082
    %v3089 = vsel %vm648, %v3071, 0
    %3091 = vmatprep.subr.bf16.mxu0 0
    %3092 = vmatpush1.bf16.msra.mxu0 0
    %3093 = vmatprep.subr.bf16.mxu0 0
    %3094 = vmatpush1.bf16.msra.mxu0 0
    %3095 = vmatprep.subr.bf16.mxu0 0
    %3096 = vmatpush1.bf16.msra.mxu0 0
    %3097 = vmatprep.subr.bf16.mxu0 0
    %3098 = vmatpush1.bf16.msra.mxu0 0
    %3099 = vmatprep.subr.bf16.mxu0 0
    %3100 = vmatpush1.bf16.msra.mxu0 0
    %3101 = vmatprep.subr.bf16.mxu0 0
    %3102 = vmatpush1.bf16.msra.mxu0 0
    %3103 = vmatprep.subr.bf16.mxu0 0
    %3104 = vmatpush1.bf16.msra.mxu0 %v3085
    %3105 = vmatprep.subr.bf16.mxu0 0
    %3106 = vmatpush1.bf16.msra.mxu0 %v3084
    %3107 = vmatprep.subr.bf16.mxu0 0
    %3108 = vmatpush2.bf16.msra.mxu0 0
    %3109 = vmatprep.subr.bf16.mxu0 0
    %3110 = vmatpush2.bf16.msra.mxu0 0
    %3111 = vmatprep.subr.bf16.mxu0 0
    %3112 = vmatpush2.bf16.msra.mxu0 0
    %3113 = vmatprep.subr.bf16.mxu0 0
    %3114 = vmatpush2.bf16.msra.mxu0 0
    %3115 = vmatprep.subr.bf16.mxu0 0
    %3116 = vmatpush2.bf16.msra.mxu0 0
    %3117 = vmatprep.subr.bf16.mxu0 0
    %3118 = vmatpush2.bf16.msra.mxu0 0
    %3119 = vmatprep.subr.bf16.mxu0 0
    %3120 = vmatpush2.bf16.msra.mxu0 0
    %3121 = vmatprep.subr.bf16.mxu0 0
    %3122 = vmatpush2.bf16.msra.mxu0 0
    %3123 = vmatprep.mubr.bf16.mxu0 0
    %3124 = vmatmul.mubr.bf16.gmra.mxu0 %v3089
    %v3125 = vpop.f32.mrf.mxu0
    %v3126 = vadd.f32 0.0, %v3125
    %v3127 = vpop.f32.mrf.mxu0
    %v3128 = vpop.f32.mrf.mxu0
    %v3129 = vadd.f32 0.0, %v3128
    %v3130 = vpop.f32.mrf.mxu0
    %3131 = vdwg.mxu0
    %v3132 = vadd.f32 %v2973, %v3126
    %v3133 = vadd.f32 %v2976, %v3129
    %3134 = vrot.lane.b32.xlu0 %v2184, 32
    %v3135 = vpop.permute.xlu0 %3134
    %v3138 = vsel %vm2580, %v2675, 0
    %3140 = vmatprep.subr.bf16.mxu0 0
    %3141 = vmatpush1.bf16.msra.mxu0 0
    %3142 = vmatprep.subr.bf16.mxu0 0
    %3143 = vmatpush1.bf16.msra.mxu0 0
    %3144 = vmatprep.subr.bf16.mxu0 0
    %3145 = vmatpush1.bf16.msra.mxu0 0
    %3146 = vmatprep.subr.bf16.mxu0 0
    %3147 = vmatpush1.bf16.msra.mxu0 0
    %3148 = vmatprep.subr.bf16.mxu0 0
    %3149 = vmatpush1.bf16.msra.mxu0 0
    %3150 = vmatprep.subr.bf16.mxu0 0
    %3151 = vmatpush1.bf16.msra.mxu0 0
    %3152 = vmatprep.subr.bf16.mxu0 0
    %3153 = vmatpush1.bf16.msra.mxu0 0
    %3154 = vmatprep.subr.bf16.mxu0 0
    %3155 = vmatpush1.bf16.msra.mxu0 %v3135
    %3156 = vmatprep.subr.bf16.mxu0 0
    %3157 = vmatpush2.bf16.msra.mxu0 0
    %3158 = vmatprep.subr.bf16.mxu0 0
    %3159 = vmatpush2.bf16.msra.mxu0 0
    %3160 = vmatprep.subr.bf16.mxu0 0
    %3161 = vmatpush2.bf16.msra.mxu0 0
    %3162 = vmatprep.subr.bf16.mxu0 0
    %3163 = vmatpush2.bf16.msra.mxu0 0
    %3164 = vmatprep.subr.bf16.mxu0 0
    %3165 = vmatpush2.bf16.msra.mxu0 0
    %3166 = vmatprep.subr.bf16.mxu0 0
    %3167 = vmatpush2.bf16.msra.mxu0 0
    %3168 = vmatprep.subr.bf16.mxu0 0
    %3169 = vmatpush2.bf16.msra.mxu0 0
    %3170 = vmatprep.subr.bf16.mxu0 0
    %3171 = vmatpush2.bf16.msra.mxu0 0
    %3172 = vmatprep.mubr.bf16.mxu0 0
    %3173 = vmatmul.mubr.bf16.gmra.mxu0 %v3138
    %v3174 = vpop.f32.mrf.mxu0
    %v3175 = vadd.f32 0.0, %v3174
    %v3176 = vpop.f32.mrf.mxu0
    %v3177 = vpop.f32.mrf.mxu0
    %v3178 = vpop.f32.mrf.mxu0
    %3179 = vdwg.mxu0
    %3180 = vrot.lane.b32.xlu0 %v2185, 32
    %v3181 = vpop.permute.xlu0 %3180
    %v3184 = vsel %vm2580, %v2676, 0
    %3186 = vmatprep.subr.bf16.mxu0 0
    %3187 = vmatpush1.bf16.msra.mxu0 0
    %3188 = vmatprep.subr.bf16.mxu0 0
    %3189 = vmatpush1.bf16.msra.mxu0 0
    %3190 = vmatprep.subr.bf16.mxu0 0
    %3191 = vmatpush1.bf16.msra.mxu0 0
    %3192 = vmatprep.subr.bf16.mxu0 0
    %3193 = vmatpush1.bf16.msra.mxu0 0
    %3194 = vmatprep.subr.bf16.mxu0 0
    %3195 = vmatpush1.bf16.msra.mxu0 0
    %3196 = vmatprep.subr.bf16.mxu0 0
    %3197 = vmatpush1.bf16.msra.mxu0 0
    %3198 = vmatprep.subr.bf16.mxu0 0
    %3199 = vmatpush1.bf16.msra.mxu0 0
    %3200 = vmatprep.subr.bf16.mxu0 0
    %3201 = vmatpush1.bf16.msra.mxu0 %v3181
    %3202 = vmatprep.subr.bf16.mxu0 0
    %3203 = vmatpush2.bf16.msra.mxu0 0
    %3204 = vmatprep.subr.bf16.mxu0 0
    %3205 = vmatpush2.bf16.msra.mxu0 0
    %3206 = vmatprep.subr.bf16.mxu0 0
    %3207 = vmatpush2.bf16.msra.mxu0 0
    %3208 = vmatprep.subr.bf16.mxu0 0
    %3209 = vmatpush2.bf16.msra.mxu0 0
    %3210 = vmatprep.subr.bf16.mxu0 0
    %3211 = vmatpush2.bf16.msra.mxu0 0
    %3212 = vmatprep.subr.bf16.mxu0 0
    %3213 = vmatpush2.bf16.msra.mxu0 0
    %3214 = vmatprep.subr.bf16.mxu0 0
    %3215 = vmatpush2.bf16.msra.mxu0 0
    %3216 = vmatprep.subr.bf16.mxu0 0
    %3217 = vmatpush2.bf16.msra.mxu0 0
    %3218 = vmatprep.mubr.bf16.mxu0 0
    %3219 = vmatmul.mubr.bf16.gmra.mxu0 %v3184
    %v3220 = vpop.f32.mrf.mxu0
    %v3221 = vadd.f32 0.0, %v3220
    %v3222 = vpop.f32.mrf.mxu0
    %v3223 = vpop.f32.mrf.mxu0
    %v3224 = vpop.f32.mrf.mxu0
    %3225 = vdwg.mxu0
    %v3226 = vpack.c.bf16 %v3221, %v3175
    %v3227 = vld [vmem:[#allocation17 + $0x30] sm:$0xf]
    %v3228 = vld [vmem:[#allocation17 + $0x34] sm:$0xf]
    %v3229 = vld [vmem:[#allocation17 + $0x38] sm:$0xf]
    %v3230 = vld [vmem:[#allocation17 + $0x3c] sm:$0xf]
    %v3235 = vunpack.c.l.b16 %v3227
    %v3236 = vunpack.c.l.b16 %v3228
    %v3237 = vunpack.c.l.b16 %v3229
    %v3238 = vunpack.c.l.b16 %v3230
    %v3239 = vpack.c.b16 %v3236, %v3235
    %v3240 = vpack.c.b16 %v3238, %v3237
    %v3244 = vsel %vm648, %v3226, 0
    %3246 = vmatprep.subr.bf16.mxu0 0
    %3247 = vmatpush1.bf16.msra.mxu0 0
    %3248 = vmatprep.subr.bf16.mxu0 0
    %3249 = vmatpush1.bf16.msra.mxu0 0
    %3250 = vmatprep.subr.bf16.mxu0 0
    %3251 = vmatpush1.bf16.msra.mxu0 0
    %3252 = vmatprep.subr.bf16.mxu0 0
    %3253 = vmatpush1.bf16.msra.mxu0 0
    %3254 = vmatprep.subr.bf16.mxu0 0
    %3255 = vmatpush1.bf16.msra.mxu0 0
    %3256 = vmatprep.subr.bf16.mxu0 0
    %3257 = vmatpush1.bf16.msra.mxu0 0
    %3258 = vmatprep.subr.bf16.mxu0 0
    %3259 = vmatpush1.bf16.msra.mxu0 %v3240
    %3260 = vmatprep.subr.bf16.mxu0 0
    %3261 = vmatpush1.bf16.msra.mxu0 %v3239
    %3262 = vmatprep.subr.bf16.mxu0 0
    %3263 = vmatpush2.bf16.msra.mxu0 0
    %3264 = vmatprep.subr.bf16.mxu0 0
    %3265 = vmatpush2.bf16.msra.mxu0 0
    %3266 = vmatprep.subr.bf16.mxu0 0
    %3267 = vmatpush2.bf16.msra.mxu0 0
    %3268 = vmatprep.subr.bf16.mxu0 0
    %3269 = vmatpush2.bf16.msra.mxu0 0
    %3270 = vmatprep.subr.bf16.mxu0 0
    %3271 = vmatpush2.bf16.msra.mxu0 0
    %3272 = vmatprep.subr.bf16.mxu0 0
    %3273 = vmatpush2.bf16.msra.mxu0 0
    %3274 = vmatprep.subr.bf16.mxu0 0
    %3275 = vmatpush2.bf16.msra.mxu0 0
    %3276 = vmatprep.subr.bf16.mxu0 0
    %3277 = vmatpush2.bf16.msra.mxu0 0
    %3278 = vmatprep.mubr.bf16.mxu0 0
    %3279 = vmatmul.mubr.bf16.gmra.mxu0 %v3244
    %v3280 = vpop.f32.mrf.mxu0
    %v3281 = vadd.f32 0.0, %v3280
    %v3282 = vpop.f32.mrf.mxu0
    %v3283 = vpop.f32.mrf.mxu0
    %v3284 = vadd.f32 0.0, %v3283
    %v3285 = vpop.f32.mrf.mxu0
    %3286 = vdwg.mxu0
    %v3287 = vadd.f32 %v3132, %v3281
    %v3288 = vadd.f32 %v3133, %v3284
    %v3289 = vld [vmem:[%s39] sm:$0x1]
    %v3291 = vlaneseq
    %v3292 = vshrl.u32 %v3291, 7
    %v3293 = vsub.s32 0, %v3292
    %v3294 = vrot.slane %v3289, %v3293
    %v3296 = vadd.f32 %v3287, %v3294
    %v3297 = vadd.f32 %v3288, %v3294
    %v3298 = vadd.f32 %v3296, %v1819
    %v3299 = vadd.f32 %v3297, %v1820
    %3300 = vadd.xlane.f32.xlu0 %v3298
    %v3301 = vpop.xlane.xlu0 %3300
    %3302 = vadd.xlane.f32.xlu0 %v3299
    %v3303 = vpop.xlane.xlu0 %3302
    %v3304 = vmul.f32 %v3301, %v1784
    %v3305 = vmul.f32 %v3303, %v1784
    %v3306 = vsub.f32 %v3298, %v3304
    %v3307 = vsub.f32 %v3299, %v3305
    %v3308 = vmul.f32 %v3306, %v3306
    %v3309 = vmul.f32 %v3307, %v3307
    %3310 = vadd.xlane.f32.xlu0 %v3308
    %v3311 = vpop.xlane.xlu0 %3310
    %3312 = vadd.xlane.f32.xlu0 %v3309
    %v3313 = vpop.xlane.xlu0 %3312
    %v3314 = vmul.f32 %v3311, %v1784
    %v3315 = vmul.f32 %v3313, %v1784
    %v3316 = vadd.f32 %v3314, 1e-05
    %v3317 = vadd.f32 %v3315, 1e-05
    %v3318 = vrsqrt.pop %v3316
    %v3319 = vrsqrt.pop %v3317
    %v3320 = vmul.f32 %v3306, %v3318
    %v3321 = vmul.f32 %v3307, %v3319
    %v3322 = vld [vmem:[%s41] sm:$0x1]
    %v3324 = vlaneseq
    %v3325 = vshrl.u32 %v3324, 7
    %v3326 = vsub.s32 0, %v3325
    %v3327 = vrot.slane %v3322, %v3326
    %v3329 = vmul.f32 %v3320, %v3327
    %v3330 = vmul.f32 %v3321, %v3327
    %v3331 = vld [vmem:[%s43] sm:$0x1]
    %v3333 = vlaneseq
    %v3334 = vshrl.u32 %v3333, 7
    %v3335 = vsub.s32 0, %v3334
    %v3336 = vrot.slane %v3331, %v3335
    %v3338 = vadd.f32 %v3329, %v3336
    %v3339 = vadd.f32 %v3330, %v3336
    %v3340 = vpack.c.bf16 %v3339, %v3338
    %v3341 = vld [vmem:[#allocation19] sm:$0xff]
    %v3342 = vld [vmem:[#allocation19 + $0x8] sm:$0xff]
    %v3343 = vld [vmem:[#allocation19 + $0x10] sm:$0xff]
    %v3344 = vld [vmem:[#allocation19 + $0x18] sm:$0xff]
    %v3345 = vld [vmem:[#allocation19 + $0x20] sm:$0xff]
    %v3346 = vld [vmem:[#allocation19 + $0x28] sm:$0xff]
    %v3347 = vld [vmem:[#allocation19 + $0x30] sm:$0xff]
    %v3348 = vld [vmem:[#allocation19 + $0x38] sm:$0xff]
    %v3349 = vld [vmem:[#allocation19 + $0x40] sm:$0xff]
    %v3350 = vld [vmem:[#allocation19 + $0x48] sm:$0xff]
    %v3351 = vld [vmem:[#allocation19 + $0x50] sm:$0xff]
    %v3352 = vld [vmem:[#allocation19 + $0x58] sm:$0xff]
    %v3353 = vld [vmem:[#allocation19 + $0x60] sm:$0xff]
    %v3354 = vld [vmem:[#allocation19 + $0x68] sm:$0xff]
    %v3355 = vld [vmem:[#allocation19 + $0x70] sm:$0xff]
    %v3356 = vld [vmem:[#allocation19 + $0x78] sm:$0xff]
    %v3357 = vld [vmem:[#allocation19 + $0x80] sm:$0xff]
    %v3358 = vld [vmem:[#allocation19 + $0x88] sm:$0xff]
    %v3359 = vld [vmem:[#allocation19 + $0x90] sm:$0xff]
    %v3360 = vld [vmem:[#allocation19 + $0x98] sm:$0xff]
    %v3361 = vld [vmem:[#allocation19 + $0xa0] sm:$0xff]
    %v3362 = vld [vmem:[#allocation19 + $0xa8] sm:$0xff]
    %v3363 = vld [vmem:[#allocation19 + $0xb0] sm:$0xff]
    %v3364 = vld [vmem:[#allocation19 + $0xb8] sm:$0xff]
    %v3365 = vld [vmem:[#allocation19 + $0xc0] sm:$0xff]
    %v3366 = vld [vmem:[#allocation19 + $0xc8] sm:$0xff]
    %v3367 = vld [vmem:[#allocation19 + $0xd0] sm:$0xff]
    %v3368 = vld [vmem:[#allocation19 + $0xd8] sm:$0xff]
    %v3369 = vld [vmem:[#allocation19 + $0xe0] sm:$0xff]
    %v3370 = vld [vmem:[#allocation19 + $0xe8] sm:$0xff]
    %v3371 = vld [vmem:[#allocation19 + $0xf0] sm:$0xff]
    %v3372 = vld [vmem:[#allocation19 + $0xf8] sm:$0xff]
    %v3373 = vld [vmem:[%s47] sm:$0xf]
    %v3375 = vlaneseq
    %v3376 = vshrl.u32 %v3375, 7
    %v3377 = vsub.s32 0, %v3376
    %v3378 = vrot.slane %v3373, %v3377
    %v3379 = vlaneseq
    %v3380 = vshrl.u32 %v3379, 7
    %v3381 = vsub.s32 1, %v3380
    %v3382 = vrot.slane %v3373, %v3381
    %v3383 = vlaneseq
    %v3384 = vshrl.u32 %v3383, 7
    %v3385 = vsub.s32 2, %v3384
    %v3386 = vrot.slane %v3373, %v3385
    %v3387 = vlaneseq
    %v3388 = vshrl.u32 %v3387, 7
    %v3389 = vsub.s32 3, %v3388
    %v3390 = vrot.slane %v3373, %v3389
    %v3427 = vunpack.c.l.b16 %v3341
    %v3428 = vunpack.c.h.b16 %v3341
    %v3429 = vunpack.c.l.b16 %v3342
    %v3430 = vunpack.c.h.b16 %v3342
    %v3431 = vunpack.c.l.b16 %v3343
    %v3432 = vunpack.c.h.b16 %v3343
    %v3433 = vunpack.c.l.b16 %v3344
    %v3434 = vunpack.c.h.b16 %v3344
    %v3435 = vunpack.c.l.b16 %v3345
    %v3436 = vunpack.c.h.b16 %v3345
    %v3437 = vunpack.c.l.b16 %v3346
    %v3438 = vunpack.c.h.b16 %v3346
    %v3439 = vunpack.c.l.b16 %v3347
    %v3440 = vunpack.c.h.b16 %v3347
    %v3441 = vunpack.c.l.b16 %v3348
    %v3442 = vunpack.c.h.b16 %v3348
    %v3443 = vunpack.c.l.b16 %v3349
    %v3444 = vunpack.c.h.b16 %v3349
    %v3445 = vunpack.c.l.b16 %v3350
    %v3446 = vunpack.c.h.b16 %v3350
    %v3447 = vunpack.c.l.b16 %v3351
    %v3448 = vunpack.c.h.b16 %v3351
    %v3449 = vunpack.c.l.b16 %v3352
    %v3450 = vunpack.c.h.b16 %v3352
    %v3451 = vunpack.c.l.b16 %v3353
    %v3452 = vunpack.c.h.b16 %v3353
    %v3453 = vunpack.c.l.b16 %v3354
    %v3454 = vunpack.c.h.b16 %v3354
    %v3455 = vunpack.c.l.b16 %v3355
    %v3456 = vunpack.c.h.b16 %v3355
    %v3457 = vunpack.c.l.b16 %v3356
    %v3458 = vunpack.c.h.b16 %v3356
    %v3459 = vunpack.c.l.b16 %v3357
    %v3460 = vunpack.c.h.b16 %v3357
    %v3461 = vunpack.c.l.b16 %v3358
    %v3462 = vunpack.c.h.b16 %v3358
    %v3463 = vunpack.c.l.b16 %v3359
    %v3464 = vunpack.c.h.b16 %v3359
    %v3465 = vunpack.c.l.b16 %v3360
    %v3466 = vunpack.c.h.b16 %v3360
    %v3467 = vunpack.c.l.b16 %v3361
    %v3468 = vunpack.c.h.b16 %v3361
    %v3469 = vunpack.c.l.b16 %v3362
    %v3470 = vunpack.c.h.b16 %v3362
    %v3471 = vunpack.c.l.b16 %v3363
    %v3472 = vunpack.c.h.b16 %v3363
    %v3473 = vunpack.c.l.b16 %v3364
    %v3474 = vunpack.c.h.b16 %v3364
    %v3475 = vunpack.c.l.b16 %v3365
    %v3476 = vunpack.c.h.b16 %v3365
    %v3477 = vunpack.c.l.b16 %v3366
    %v3478 = vunpack.c.h.b16 %v3366
    %v3479 = vunpack.c.l.b16 %v3367
    %v3480 = vunpack.c.h.b16 %v3367
    %v3481 = vunpack.c.l.b16 %v3368
    %v3482 = vunpack.c.h.b16 %v3368
    %v3483 = vunpack.c.l.b16 %v3369
    %v3484 = vunpack.c.h.b16 %v3369
    %v3485 = vunpack.c.l.b16 %v3370
    %v3486 = vunpack.c.h.b16 %v3370
    %v3487 = vunpack.c.l.b16 %v3371
    %v3488 = vunpack.c.h.b16 %v3371
    %v3489 = vunpack.c.l.b16 %v3372
    %v3490 = vunpack.c.h.b16 %v3372
    %v3491 = vpack.c.b16 %v3431, %v3427
    %v3492 = vpack.c.b16 %v3432, %v3428
    %v3493 = vpack.c.b16 %v3433, %v3429
    %v3494 = vpack.c.b16 %v3434, %v3430
    %v3495 = vpack.c.b16 %v3439, %v3435
    %v3496 = vpack.c.b16 %v3440, %v3436
    %v3497 = vpack.c.b16 %v3441, %v3437
    %v3498 = vpack.c.b16 %v3442, %v3438
    %v3499 = vpack.c.b16 %v3447, %v3443
    %v3500 = vpack.c.b16 %v3448, %v3444
    %v3501 = vpack.c.b16 %v3449, %v3445
    %v3502 = vpack.c.b16 %v3450, %v3446
    %v3503 = vpack.c.b16 %v3455, %v3451
    %v3504 = vpack.c.b16 %v3456, %v3452
    %v3505 = vpack.c.b16 %v3457, %v3453
    %v3506 = vpack.c.b16 %v3458, %v3454
    %v3507 = vpack.c.b16 %v3463, %v3459
    %v3508 = vpack.c.b16 %v3464, %v3460
    %v3509 = vpack.c.b16 %v3465, %v3461
    %v3510 = vpack.c.b16 %v3466, %v3462
    %v3511 = vpack.c.b16 %v3471, %v3467
    %v3512 = vpack.c.b16 %v3472, %v3468
    %v3513 = vpack.c.b16 %v3473, %v3469
    %v3514 = vpack.c.b16 %v3474, %v3470
    %v3515 = vpack.c.b16 %v3479, %v3475
    %v3516 = vpack.c.b16 %v3480, %v3476
    %v3517 = vpack.c.b16 %v3481, %v3477
    %v3518 = vpack.c.b16 %v3482, %v3478
    %v3519 = vpack.c.b16 %v3487, %v3483
    %v3520 = vpack.c.b16 %v3488, %v3484
    %v3521 = vpack.c.b16 %v3489, %v3485
    %v3522 = vpack.c.b16 %v3490, %v3486
    %3555 = vmatprep.subr.bf16.mxu0 %v3520
    %3556 = vmatpush1.bf16.msra.mxu0 %v3519
    %3557 = vmatprep.subr.bf16.mxu0 %v3516
    %3558 = vmatpush1.bf16.msra.mxu0 %v3515
    %3559 = vmatprep.subr.bf16.mxu0 %v3512
    %3560 = vmatpush1.bf16.msra.mxu0 %v3511
    %3561 = vmatprep.subr.bf16.mxu0 %v3508
    %3562 = vmatpush1.bf16.msra.mxu0 %v3507
    %3563 = vmatprep.subr.bf16.mxu0 %v3504
    %3564 = vmatpush1.bf16.msra.mxu0 %v3503
    %3565 = vmatprep.subr.bf16.mxu0 %v3500
    %3566 = vmatpush1.bf16.msra.mxu0 %v3499
    %3567 = vmatprep.subr.bf16.mxu0 %v3496
    %3568 = vmatpush1.bf16.msra.mxu0 %v3495
    %3569 = vmatprep.subr.bf16.mxu0 %v3492
    %3570 = vmatpush1.bf16.msra.mxu0 %v3491
    %3571 = vmatprep.subr.bf16.mxu0 0
    %3572 = vmatpush2.bf16.msra.mxu0 0
    %3573 = vmatprep.subr.bf16.mxu0 0
    %3574 = vmatpush2.bf16.msra.mxu0 0
    %3575 = vmatprep.subr.bf16.mxu0 0
    %3576 = vmatpush2.bf16.msra.mxu0 0
    %3577 = vmatprep.subr.bf16.mxu0 0
    %3578 = vmatpush2.bf16.msra.mxu0 0
    %3579 = vmatprep.subr.bf16.mxu0 0
    %3580 = vmatpush2.bf16.msra.mxu0 0
    %3581 = vmatprep.subr.bf16.mxu0 0
    %3582 = vmatpush2.bf16.msra.mxu0 0
    %3583 = vmatprep.subr.bf16.mxu0 0
    %3584 = vmatpush2.bf16.msra.mxu0 0
    %3585 = vmatprep.subr.bf16.mxu0 0
    %3586 = vmatpush2.bf16.msra.mxu0 0
    %3587 = vmatprep.mubr.bf16.mxu0 0
    %3588 = vmatmul.mubr.bf16.gmra.mxu0 %v3340
    %v3589 = vpop.f32.mrf.mxu0
    %v3590 = vadd.f32 %v3378, %v3589
    %v3591 = vpop.f32.mrf.mxu0
    %v3592 = vadd.f32 %v3382, %v3591
    %v3593 = vpop.f32.mrf.mxu0
    %v3594 = vadd.f32 %v3378, %v3593
    %v3595 = vpop.f32.mrf.mxu0
    %v3596 = vadd.f32 %v3382, %v3595
    %3597 = vdwg.mxu0
    %3598 = vmatprep.subr.bf16.mxu0 %v3522
    %3599 = vmatpush1.bf16.msra.mxu0 %v3521
    %3600 = vmatprep.subr.bf16.mxu0 %v3518
    %3601 = vmatpush1.bf16.msra.mxu0 %v3517
    %3602 = vmatprep.subr.bf16.mxu0 %v3514
    %3603 = vmatpush1.bf16.msra.mxu0 %v3513
    %3604 = vmatprep.subr.bf16.mxu0 %v3510
    %3605 = vmatpush1.bf16.msra.mxu0 %v3509
    %3606 = vmatprep.subr.bf16.mxu0 %v3506
    %3607 = vmatpush1.bf16.msra.mxu0 %v3505
    %3608 = vmatprep.subr.bf16.mxu0 %v3502
    %3609 = vmatpush1.bf16.msra.mxu0 %v3501
    %3610 = vmatprep.subr.bf16.mxu0 %v3498
    %3611 = vmatpush1.bf16.msra.mxu0 %v3497
    %3612 = vmatprep.subr.bf16.mxu0 %v3494
    %3613 = vmatpush1.bf16.msra.mxu0 %v3493
    %3614 = vmatprep.subr.bf16.mxu0 0
    %3615 = vmatpush2.bf16.msra.mxu0 0
    %3616 = vmatprep.subr.bf16.mxu0 0
    %3617 = vmatpush2.bf16.msra.mxu0 0
    %3618 = vmatprep.subr.bf16.mxu0 0
    %3619 = vmatpush2.bf16.msra.mxu0 0
    %3620 = vmatprep.subr.bf16.mxu0 0
    %3621 = vmatpush2.bf16.msra.mxu0 0
    %3622 = vmatprep.subr.bf16.mxu0 0
    %3623 = vmatpush2.bf16.msra.mxu0 0
    %3624 = vmatprep.subr.bf16.mxu0 0
    %3625 = vmatpush2.bf16.msra.mxu0 0
    %3626 = vmatprep.subr.bf16.mxu0 0
    %3627 = vmatpush2.bf16.msra.mxu0 0
    %3628 = vmatprep.subr.bf16.mxu0 0
    %3629 = vmatpush2.bf16.msra.mxu0 0
    %3630 = vmatprep.mubr.bf16.mxu0 0
    %3631 = vmatmul.mubr.bf16.gmra.mxu0 %v3340
    %v3632 = vpop.f32.mrf.mxu0
    %v3633 = vadd.f32 %v3386, %v3632
    %v3634 = vpop.f32.mrf.mxu0
    %v3635 = vadd.f32 %v3390, %v3634
    %v3636 = vpop.f32.mrf.mxu0
    %v3637 = vadd.f32 %v3386, %v3636
    %v3638 = vpop.f32.mrf.mxu0
    %v3639 = vadd.f32 %v3390, %v3638
    %3640 = vdwg.mxu0
    %v3641 = vmax.f32 %v3590, 0.0
    %v3642 = vmax.f32 %v3592, 0.0
    %v3643 = vmax.f32 %v3633, 0.0
    %v3644 = vmax.f32 %v3635, 0.0
    %v3645 = vmax.f32 %v3594, 0.0
    %v3646 = vmax.f32 %v3596, 0.0
    %v3647 = vmax.f32 %v3637, 0.0
    %v3648 = vmax.f32 %v3639, 0.0
    %v3649 = vpack.c.bf16 %v3645, %v3641
    %v3650 = vpack.c.bf16 %v3646, %v3642
    %v3651 = vpack.c.bf16 %v3647, %v3643
    %v3652 = vpack.c.bf16 %v3648, %v3644
    %v3653 = vld [vmem:[#allocation20] sm:$0xf]
    %v3654 = vld [vmem:[#allocation20 + $0x4] sm:$0xf]
    %v3655 = vld [vmem:[#allocation20 + $0x8] sm:$0xf]
    %v3656 = vld [vmem:[#allocation20 + $0xc] sm:$0xf]
    %v3657 = vld [vmem:[#allocation20 + $0x10] sm:$0xf]
    %v3658 = vld [vmem:[#allocation20 + $0x14] sm:$0xf]
    %v3659 = vld [vmem:[#allocation20 + $0x18] sm:$0xf]
    %v3660 = vld [vmem:[#allocation20 + $0x1c] sm:$0xf]
    %v3661 = vld [vmem:[#allocation20 + $0x20] sm:$0xf]
    %v3662 = vld [vmem:[#allocation20 + $0x24] sm:$0xf]
    %v3663 = vld [vmem:[#allocation20 + $0x28] sm:$0xf]
    %v3664 = vld [vmem:[#allocation20 + $0x2c] sm:$0xf]
    %v3665 = vld [vmem:[#allocation20 + $0x30] sm:$0xf]
    %v3666 = vld [vmem:[#allocation20 + $0x34] sm:$0xf]
    %v3667 = vld [vmem:[#allocation20 + $0x38] sm:$0xf]
    %v3668 = vld [vmem:[#allocation20 + $0x3c] sm:$0xf]
    %v3669 = vld [vmem:[#allocation20 + $0x40] sm:$0xf]
    %v3670 = vld [vmem:[#allocation20 + $0x44] sm:$0xf]
    %v3671 = vld [vmem:[#allocation20 + $0x48] sm:$0xf]
    %v3672 = vld [vmem:[#allocation20 + $0x4c] sm:$0xf]
    %v3673 = vld [vmem:[#allocation20 + $0x50] sm:$0xf]
    %v3674 = vld [vmem:[#allocation20 + $0x54] sm:$0xf]
    %v3675 = vld [vmem:[#allocation20 + $0x58] sm:$0xf]
    %v3676 = vld [vmem:[#allocation20 + $0x5c] sm:$0xf]
    %v3677 = vld [vmem:[#allocation20 + $0x60] sm:$0xf]
    %v3678 = vld [vmem:[#allocation20 + $0x64] sm:$0xf]
    %v3679 = vld [vmem:[#allocation20 + $0x68] sm:$0xf]
    %v3680 = vld [vmem:[#allocation20 + $0x6c] sm:$0xf]
    %v3681 = vld [vmem:[#allocation20 + $0x70] sm:$0xf]
    %v3682 = vld [vmem:[#allocation20 + $0x74] sm:$0xf]
    %v3683 = vld [vmem:[#allocation20 + $0x78] sm:$0xf]
    %v3684 = vld [vmem:[#allocation20 + $0x7c] sm:$0xf]
    %v3685 = vld [vmem:[#allocation20 + $0x80] sm:$0xf]
    %v3686 = vld [vmem:[#allocation20 + $0x84] sm:$0xf]
    %v3687 = vld [vmem:[#allocation20 + $0x88] sm:$0xf]
    %v3688 = vld [vmem:[#allocation20 + $0x8c] sm:$0xf]
    %v3689 = vld [vmem:[#allocation20 + $0x90] sm:$0xf]
    %v3690 = vld [vmem:[#allocation20 + $0x94] sm:$0xf]
    %v3691 = vld [vmem:[#allocation20 + $0x98] sm:$0xf]
    %v3692 = vld [vmem:[#allocation20 + $0x9c] sm:$0xf]
    %v3693 = vld [vmem:[#allocation20 + $0xa0] sm:$0xf]
    %v3694 = vld [vmem:[#allocation20 + $0xa4] sm:$0xf]
    %v3695 = vld [vmem:[#allocation20 + $0xa8] sm:$0xf]
    %v3696 = vld [vmem:[#allocation20 + $0xac] sm:$0xf]
    %v3697 = vld [vmem:[#allocation20 + $0xb0] sm:$0xf]
    %v3698 = vld [vmem:[#allocation20 + $0xb4] sm:$0xf]
    %v3699 = vld [vmem:[#allocation20 + $0xb8] sm:$0xf]
    %v3700 = vld [vmem:[#allocation20 + $0xbc] sm:$0xf]
    %v3701 = vld [vmem:[#allocation20 + $0xc0] sm:$0xf]
    %v3702 = vld [vmem:[#allocation20 + $0xc4] sm:$0xf]
    %v3703 = vld [vmem:[#allocation20 + $0xc8] sm:$0xf]
    %v3704 = vld [vmem:[#allocation20 + $0xcc] sm:$0xf]
    %v3705 = vld [vmem:[#allocation20 + $0xd0] sm:$0xf]
    %v3706 = vld [vmem:[#allocation20 + $0xd4] sm:$0xf]
    %v3707 = vld [vmem:[#allocation20 + $0xd8] sm:$0xf]
    %v3708 = vld [vmem:[#allocation20 + $0xdc] sm:$0xf]
    %v3709 = vld [vmem:[#allocation20 + $0xe0] sm:$0xf]
    %v3710 = vld [vmem:[#allocation20 + $0xe4] sm:$0xf]
    %v3711 = vld [vmem:[#allocation20 + $0xe8] sm:$0xf]
    %v3712 = vld [vmem:[#allocation20 + $0xec] sm:$0xf]
    %v3713 = vld [vmem:[#allocation20 + $0xf0] sm:$0xf]
    %v3714 = vld [vmem:[#allocation20 + $0xf4] sm:$0xf]
    %v3715 = vld [vmem:[#allocation20 + $0xf8] sm:$0xf]
    %v3716 = vld [vmem:[#allocation20 + $0xfc] sm:$0xf]
    %v3717 = vld [vmem:[%s51] sm:$0x1]
    %v3719 = vlaneseq
    %v3720 = vshrl.u32 %v3719, 7
    %v3721 = vsub.s32 0, %v3720
    %v3722 = vrot.slane %v3717, %v3721
    %v3788 = vunpack.c.l.b16 %v3653
    %v3789 = vunpack.c.l.b16 %v3654
    %v3790 = vunpack.c.l.b16 %v3655
    %v3791 = vunpack.c.l.b16 %v3656
    %v3792 = vunpack.c.l.b16 %v3657
    %v3793 = vunpack.c.l.b16 %v3658
    %v3794 = vunpack.c.l.b16 %v3659
    %v3795 = vunpack.c.l.b16 %v3660
    %v3796 = vunpack.c.l.b16 %v3661
    %v3797 = vunpack.c.l.b16 %v3662
    %v3798 = vunpack.c.l.b16 %v3663
    %v3799 = vunpack.c.l.b16 %v3664
    %v3800 = vunpack.c.l.b16 %v3665
    %v3801 = vunpack.c.l.b16 %v3666
    %v3802 = vunpack.c.l.b16 %v3667
    %v3803 = vunpack.c.l.b16 %v3668
    %v3804 = vunpack.c.l.b16 %v3669
    %v3805 = vunpack.c.l.b16 %v3670
    %v3806 = vunpack.c.l.b16 %v3671
    %v3807 = vunpack.c.l.b16 %v3672
    %v3808 = vunpack.c.l.b16 %v3673
    %v3809 = vunpack.c.l.b16 %v3674
    %v3810 = vunpack.c.l.b16 %v3675
    %v3811 = vunpack.c.l.b16 %v3676
    %v3812 = vunpack.c.l.b16 %v3677
    %v3813 = vunpack.c.l.b16 %v3678
    %v3814 = vunpack.c.l.b16 %v3679
    %v3815 = vunpack.c.l.b16 %v3680
    %v3816 = vunpack.c.l.b16 %v3681
    %v3817 = vunpack.c.l.b16 %v3682
    %v3818 = vunpack.c.l.b16 %v3683
    %v3819 = vunpack.c.l.b16 %v3684
    %v3820 = vunpack.c.l.b16 %v3685
    %v3821 = vunpack.c.l.b16 %v3686
    %v3822 = vunpack.c.l.b16 %v3687
    %v3823 = vunpack.c.l.b16 %v3688
    %v3824 = vunpack.c.l.b16 %v3689
    %v3825 = vunpack.c.l.b16 %v3690
    %v3826 = vunpack.c.l.b16 %v3691
    %v3827 = vunpack.c.l.b16 %v3692
    %v3828 = vunpack.c.l.b16 %v3693
    %v3829 = vunpack.c.l.b16 %v3694
    %v3830 = vunpack.c.l.b16 %v3695
    %v3831 = vunpack.c.l.b16 %v3696
    %v3832 = vunpack.c.l.b16 %v3697
    %v3833 = vunpack.c.l.b16 %v3698
    %v3834 = vunpack.c.l.b16 %v3699
    %v3835 = vunpack.c.l.b16 %v3700
    %v3836 = vunpack.c.l.b16 %v3701
    %v3837 = vunpack.c.l.b16 %v3702
    %v3838 = vunpack.c.l.b16 %v3703
    %v3839 = vunpack.c.l.b16 %v3704
    %v3840 = vunpack.c.l.b16 %v3705
    %v3841 = vunpack.c.l.b16 %v3706
    %v3842 = vunpack.c.l.b16 %v3707
    %v3843 = vunpack.c.l.b16 %v3708
    %v3844 = vunpack.c.l.b16 %v3709
    %v3845 = vunpack.c.l.b16 %v3710
    %v3846 = vunpack.c.l.b16 %v3711
    %v3847 = vunpack.c.l.b16 %v3712
    %v3848 = vunpack.c.l.b16 %v3713
    %v3849 = vunpack.c.l.b16 %v3714
    %v3850 = vunpack.c.l.b16 %v3715
    %v3851 = vunpack.c.l.b16 %v3716
    %v3852 = vpack.c.b16 %v3789, %v3788
    %v3853 = vpack.c.b16 %v3791, %v3790
    %v3854 = vpack.c.b16 %v3793, %v3792
    %v3855 = vpack.c.b16 %v3795, %v3794
    %v3856 = vpack.c.b16 %v3797, %v3796
    %v3857 = vpack.c.b16 %v3799, %v3798
    %v3858 = vpack.c.b16 %v3801, %v3800
    %v3859 = vpack.c.b16 %v3803, %v3802
    %v3860 = vpack.c.b16 %v3805, %v3804
    %v3861 = vpack.c.b16 %v3807, %v3806
    %v3862 = vpack.c.b16 %v3809, %v3808
    %v3863 = vpack.c.b16 %v3811, %v3810
    %v3864 = vpack.c.b16 %v3813, %v3812
    %v3865 = vpack.c.b16 %v3815, %v3814
    %v3866 = vpack.c.b16 %v3817, %v3816
    %v3867 = vpack.c.b16 %v3819, %v3818
    %v3868 = vpack.c.b16 %v3821, %v3820
    %v3869 = vpack.c.b16 %v3823, %v3822
    %v3870 = vpack.c.b16 %v3825, %v3824
    %v3871 = vpack.c.b16 %v3827, %v3826
    %v3872 = vpack.c.b16 %v3829, %v3828
    %v3873 = vpack.c.b16 %v3831, %v3830
    %v3874 = vpack.c.b16 %v3833, %v3832
    %v3875 = vpack.c.b16 %v3835, %v3834
    %v3876 = vpack.c.b16 %v3837, %v3836
    %v3877 = vpack.c.b16 %v3839, %v3838
    %v3878 = vpack.c.b16 %v3841, %v3840
    %v3879 = vpack.c.b16 %v3843, %v3842
    %v3880 = vpack.c.b16 %v3845, %v3844
    %v3881 = vpack.c.b16 %v3847, %v3846
    %v3882 = vpack.c.b16 %v3849, %v3848
    %v3883 = vpack.c.b16 %v3851, %v3850
    %3916 = vmatprep.subr.bf16.mxu0 0
    %3917 = vmatpush1.bf16.msra.mxu0 %v3859
    %3918 = vmatprep.subr.bf16.mxu0 0
    %3919 = vmatpush1.bf16.msra.mxu0 %v3858
    %3920 = vmatprep.subr.bf16.mxu0 0
    %3921 = vmatpush1.bf16.msra.mxu0 %v3857
    %3922 = vmatprep.subr.bf16.mxu0 0
    %3923 = vmatpush1.bf16.msra.mxu0 %v3856
    %3924 = vmatprep.subr.bf16.mxu0 0
    %3925 = vmatpush1.bf16.msra.mxu0 %v3855
    %3926 = vmatprep.subr.bf16.mxu0 0
    %3927 = vmatpush1.bf16.msra.mxu0 %v3854
    %3928 = vmatprep.subr.bf16.mxu0 0
    %3929 = vmatpush1.bf16.msra.mxu0 %v3853
    %3930 = vmatprep.subr.bf16.mxu0 0
    %3931 = vmatpush1.bf16.msra.mxu0 %v3852
    %3932 = vmatprep.subr.bf16.mxu0 0
    %3933 = vmatpush2.bf16.msra.mxu0 %v3867
    %3934 = vmatprep.subr.bf16.mxu0 0
    %3935 = vmatpush2.bf16.msra.mxu0 %v3866
    %3936 = vmatprep.subr.bf16.mxu0 0
    %3937 = vmatpush2.bf16.msra.mxu0 %v3865
    %3938 = vmatprep.subr.bf16.mxu0 0
    %3939 = vmatpush2.bf16.msra.mxu0 %v3864
    %3940 = vmatprep.subr.bf16.mxu0 0
    %3941 = vmatpush2.bf16.msra.mxu0 %v3863
    %3942 = vmatprep.subr.bf16.mxu0 0
    %3943 = vmatpush2.bf16.msra.mxu0 %v3862
    %3944 = vmatprep.subr.bf16.mxu0 0
    %3945 = vmatpush2.bf16.msra.mxu0 %v3861
    %3946 = vmatprep.subr.bf16.mxu0 0
    %3947 = vmatpush2.bf16.msra.mxu0 %v3860
    %3948 = vmatprep.mubr.bf16.mxu0 %v3650
    %3949 = vmatmul.mubr.bf16.gmra.mxu0 %v3649
    %v3950 = vpop.f32.mrf.mxu0
    %v3951 = vadd.f32 %v3722, %v3950
    %v3952 = vpop.f32.mrf.mxu0
    %v3953 = vpop.f32.mrf.mxu0
    %v3954 = vadd.f32 %v3722, %v3953
    %v3955 = vpop.f32.mrf.mxu0
    %3956 = vdwg.mxu0
    %3957 = vmatprep.subr.bf16.mxu0 0
    %3958 = vmatpush1.bf16.msra.mxu0 %v3875
    %3959 = vmatprep.subr.bf16.mxu0 0
    %3960 = vmatpush1.bf16.msra.mxu0 %v3874
    %3961 = vmatprep.subr.bf16.mxu0 0
    %3962 = vmatpush1.bf16.msra.mxu0 %v3873
    %3963 = vmatprep.subr.bf16.mxu0 0
    %3964 = vmatpush1.bf16.msra.mxu0 %v3872
    %3965 = vmatprep.subr.bf16.mxu0 0
    %3966 = vmatpush1.bf16.msra.mxu0 %v3871
    %3967 = vmatprep.subr.bf16.mxu0 0
    %3968 = vmatpush1.bf16.msra.mxu0 %v3870
    %3969 = vmatprep.subr.bf16.mxu0 0
    %3970 = vmatpush1.bf16.msra.mxu0 %v3869
    %3971 = vmatprep.subr.bf16.mxu0 0
    %3972 = vmatpush1.bf16.msra.mxu0 %v3868
    %3973 = vmatprep.subr.bf16.mxu0 0
    %3974 = vmatpush2.bf16.msra.mxu0 %v3883
    %3975 = vmatprep.subr.bf16.mxu0 0
    %3976 = vmatpush2.bf16.msra.mxu0 %v3882
    %3977 = vmatprep.subr.bf16.mxu0 0
    %3978 = vmatpush2.bf16.msra.mxu0 %v3881
    %3979 = vmatprep.subr.bf16.mxu0 0
    %3980 = vmatpush2.bf16.msra.mxu0 %v3880
    %3981 = vmatprep.subr.bf16.mxu0 0
    %3982 = vmatpush2.bf16.msra.mxu0 %v3879
    %3983 = vmatprep.subr.bf16.mxu0 0
    %3984 = vmatpush2.bf16.msra.mxu0 %v3878
    %3985 = vmatprep.subr.bf16.mxu0 0
    %3986 = vmatpush2.bf16.msra.mxu0 %v3877
    %3987 = vmatprep.subr.bf16.mxu0 0
    %3988 = vmatpush2.bf16.msra.mxu0 %v3876
    %3989 = vmatprep.mubr.bf16.mxu0 %v3652
    %3990 = vmatmul.mubr.bf16.gmra.mxu0 %v3651
    %v3991 = vpop.f32.mrf.mxu0
    %v3992 = vadd.f32 %v3951, %v3991
    %v3993 = vpop.f32.mrf.mxu0
    %v3994 = vpop.f32.mrf.mxu0
    %v3995 = vadd.f32 %v3954, %v3994
    %v3996 = vpop.f32.mrf.mxu0
    %3997 = vdwg.mxu0
    %v3998 = vadd.f32 %v3992, %v3338
    %v3999 = vadd.f32 %v3995, %v3339
    %4000 = vadd.xlane.f32.xlu0 %v3998
    %v4001 = vpop.xlane.xlu0 %4000
    %4002 = vadd.xlane.f32.xlu0 %v3999
    %v4003 = vpop.xlane.xlu0 %4002
    %v4004 = vmul.f32 %v4001, %v1784
    %v4005 = vmul.f32 %v4003, %v1784
    %v4006 = vsub.f32 %v3998, %v4004
    %v4007 = vsub.f32 %v3999, %v4005
    %v4008 = vmul.f32 %v4006, %v4006
    %v4009 = vmul.f32 %v4007, %v4007
    %4010 = vadd.xlane.f32.xlu0 %v4008
    %v4011 = vpop.xlane.xlu0 %4010
    %4012 = vadd.xlane.f32.xlu0 %v4009
    %v4013 = vpop.xlane.xlu0 %4012
    %v4014 = vmul.f32 %v4011, %v1784
    %v4015 = vmul.f32 %v4013, %v1784
    %v4016 = vadd.f32 %v4014, 1e-05
    %v4017 = vadd.f32 %v4015, 1e-05
    %v4018 = vrsqrt.pop %v4016
    %v4019 = vrsqrt.pop %v4017
    %v4020 = vmul.f32 %v4006, %v4018
    %v4021 = vmul.f32 %v4007, %v4019
    %v4022 = vld [vmem:[%s53] sm:$0x1]
    %v4024 = vlaneseq
    %v4025 = vshrl.u32 %v4024, 7
    %v4026 = vsub.s32 0, %v4025
    %v4027 = vrot.slane %v4022, %v4026
    %v4029 = vmul.f32 %v4020, %v4027
    %v4030 = vmul.f32 %v4021, %v4027
    %v4031 = vld [vmem:[%s55] sm:$0x1]
    %v4033 = vlaneseq
    %v4034 = vshrl.u32 %v4033, 7
    %v4035 = vsub.s32 0, %v4034
    %v4036 = vrot.slane %v4031, %v4035
    %v4038 = vadd.f32 %v4029, %v4036
    %v4039 = vadd.f32 %v4030, %v4036
    %4040 = vst [vmem:[#allocation22] sm:$0xff] %v4038
    %4041 = vst [vmem:[#allocation22 + $0x8] sm:$0xff] %v4039
    // Predicated region
    $region162: #{decoder_layer.1} parent=1 // pred_check
      _
    $region163: #{decoder_layer.1} parent=1 // pred_check_branch
      %4043 = sbr.rel (0) target = $region165
    $region164: #{decoder_layer.1} parent=1 // pred_region
      %s4045 = ssub.s32 256, 256
      %4046 = vsyncadd [#allocation4], %s4045
      %s4047 = sshll.u32 [#allocation22], 4
      %s4048 = int_to_ptr.vmem [resolvable:$true] %s4047
      %4053 = dma.vmem_to_hbm [thread:$0]  %s4048, 256, %s57, [#allocation4], 128, 128, 8
    $region165: #{decoder_layer.1} parent=1 // pred_fallthru
      _
    // Predicated region
    $region166: #{decoder_layer.1} parent=1 // pred_check
      _
    $region167: #{decoder_layer.1} parent=1 // pred_check_branch
      %4055 = sbr.rel (0) target = $region169
    $region168: #{decoder_layer.1} parent=1 // pred_region
      %s4057 = ssub.s32 256, 256
      %4058 = vsyncadd [#allocation24], %s4057
      %s4059 = sshll.u32 [#allocation23], 4
      %s4060 = int_to_ptr.vmem [resolvable:$true] %s4059
      %4065 = dma.vmem_to_hbm [thread:$0]  %s4060, 256, %s59, [#allocation24], 128, 128, 8
    $region169: #{decoder_layer.1} parent=1 // pred_fallthru
      _
    // Predicated region
    $region170: #{decoder_layer.1} parent=1 // pred_check
      _
    $region171: #{decoder_layer.1} parent=1 // pred_check_branch
      %4067 = sbr.rel (0) target = $region173
    $region172: #{decoder_layer.1} parent=1 // pred_region
      %4068 = dma.done [#allocation4], 256
    $region173: #{decoder_layer.1} parent=1 // pred_fallthru
      _
    // Predicated region
    $region174: #{decoder_layer.1} parent=1 // pred_check
      _
    $region175: #{decoder_layer.1} parent=1 // pred_check_branch
      %4070 = sbr.rel (0) target = $region177
    $region176: #{decoder_layer.1} parent=1 // pred_region
      %4071 = dma.done [#allocation24], 256
    $region177: #{decoder_layer.1} parent=1 // pred_fallthru
      _
    %4072 = vsyncpa [#allocation3], 1
    %4073 = vsyncpa [#allocation6], 1
    %4074 = vsyncpa [#allocation9], 1
    %4075 = vsyncpa [#allocation12], 1
    %4076 = vsyncpa [#allocation15], 1
    %4077 = vsyncpa [#allocation18], 1
    %4078 = vsyncpa [#allocation21], 1
    %4079 = vsyncpa [#allocation4], 1
    %4080 = vsyncpa [#allocation24], 1

</llo_original>
